<compile_context>
chip_gen: v5e
topology: v5e:2x2
jax: 0.10.0
libtpu: 0.0.40
codegen_flags: <defaults>
</compile_context>

<pallas_src>
import math
import functools

import jax
import jax.numpy as jnp
from jax import lax
from jax.experimental import pallas as pl
from jax.experimental.pallas import tpu as pltpu


def _gqa_kernel(x_ref, wq_ref, bq_ref, wkv_ref, bkv_ref, wo_ref, bo_ref,
                out_ref, k_s, v_s, *, num_heads, groups, d_k, tq):
    hpg = num_heads // groups
    scale = 1.0 / math.sqrt(d_k)
    qi = pl.program_id(1)

    # ---- fused K/V projection: once per batch element, kept in VMEM scratch ----
    # Correctness relies on the qi axis being "arbitrary" (sequential, starting at 0
    # for every b). Do NOT mark it "parallel".
    @pl.when(qi == 0)
    def _():
        x_full = x_ref[...]                                            # (S, D) bf16
        kv = jnp.dot(x_full, wkv_ref[...],
                     preferred_element_type=jnp.float32) + bkv_ref[...]
        kv = kv.astype(jnp.bfloat16)                                   # (S, 2*g*d_k)
        for g in range(groups):                                        # one-time split
            k_s[g] = kv[:, g * d_k:(g + 1) * d_k]
            v_s[g] = kv[:, (groups + g) * d_k:(groups + g + 1) * d_k]

    # ---- Q projection for this query tile only (no full-S Q scratch) ----
    row0 = pl.multiple_of(qi * tq, tq)
    xt = x_ref[pl.ds(row0, tq), :]                                     # (TQ, D) bf16
    q = jnp.dot(xt, wq_ref[...], preferred_element_type=jnp.float32)
    q = ((q + bq_ref[...]) * scale).astype(jnp.bfloat16)               # fold 1/sqrt(d_k)

    # Lane slices only happen here (unavoidable when d_k < 128); the heads of each
    # group are then stacked along sublanes so scores/ctx are one matmul per group.
    q_heads = [q[:, h * d_k:(h + 1) * d_k] for h in range(num_heads)]

    ctx_parts = []
    for g in range(groups):
        kg = k_s[g]                                                    # (S, d_k) bf16
        vg = v_s[g]                                                    # (S, d_k) bf16
        q_g = jnp.concatenate(q_heads[g * hpg:(g + 1) * hpg], axis=0)  # (hpg*TQ, d_k)
        # scores: contract the last axes directly (no materialized k.T)
        s = lax.dot_general(q_g, kg, (((1,), (1,)), ((), ())),
                            preferred_element_type=jnp.float32)        # (hpg*TQ, S)
        # numerically-stable softmax along the key axis, kept in f32
        m = jnp.max(s, axis=-1, keepdims=True)
        e = jnp.exp(s - m)
        denom = jnp.sum(e, axis=-1, keepdims=True)
        p = (e * pl.reciprocal(denom)).astype(jnp.bfloat16)
        ctx_g = jnp.dot(p, vg, preferred_element_type=jnp.float32)     # (hpg*TQ, d_k)
        ctx_g = ctx_g.astype(jnp.bfloat16)
        for hh in range(hpg):
            ctx_parts.append(ctx_g[hh * tq:(hh + 1) * tq, :])          # sublane slice

    ctx = jnp.concatenate(ctx_parts, axis=1)                           # (TQ, D) bf16
    out = jnp.dot(ctx, wo_ref[...], preferred_element_type=jnp.float32) + bo_ref[...]
    out_ref[...] = out.astype(out_ref.dtype)


def gqa_forward(x, wq, bq, wk, bk, wv, bv, wo, bo, *, num_heads, groups, tq=None):
    B, S, D = x.shape
    d_k = D // num_heads
    if tq is None:
        # TQ=128 fills a v5e MXU; sweep up to 256 on v6e/v7x (256-wide MXU).
        tq = min(128, S)
    assert S % tq == 0, "seq_len must be divisible by the query tile size"
    n_qt = S // tq
    out_dtype = x.dtype
    kv_out = 2 * groups * d_k

    # bf16 MXU operands prepared once on the host; biases stay f32 (added to the f32
    # accumulators inside the kernel).
    xb = x.astype(jnp.bfloat16)
    wq_b = wq.astype(jnp.bfloat16)
    wo_b = wo.astype(jnp.bfloat16)
    wkv = jnp.concatenate(
        [wk.transpose(1, 0, 2).reshape(D, groups * d_k),
         wv.transpose(1, 0, 2).reshape(D, groups * d_k)], axis=1).astype(jnp.bfloat16)
    bkv = jnp.concatenate([bk.reshape(1, groups * d_k),
                           bv.reshape(1, groups * d_k)], axis=1).astype(jnp.float32)
    bq2 = bq.reshape(1, D).astype(jnp.float32)
    bo2 = bo.reshape(1, D).astype(jnp.float32)

    kernel = functools.partial(_gqa_kernel, num_heads=num_heads, groups=groups,
                               d_k=d_k, tq=tq)

    # Explicit VMEM budget: double-buffered inputs/outputs + persistent K/V scratch.
    est = (2 * S * D * 2                          # x block (bf16, 2 buffers)
           + 2 * (2 * D * D * 2 + D * kv_out * 2)  # W_Q, W_O, W_KV (bf16, 2 buffers)
           + 2 * tq * D * 4                       # out tile (f32, 2 buffers)
           + 2 * groups * S * d_k * 2             # K/V scratch (bf16)
           + 2 * (2 * D + kv_out) * 4)            # biases (f32, 2 buffers)
    vmem_limit = int(min(max(2 * est, 32 * 1024 * 1024), 64 * 1024 * 1024))

    flops = (2 * B * S * D * D                    # Q projection
             + 2 * B * S * D * kv_out             # fused K/V projection
             + 4 * B * num_heads * S * S * d_k    # scores + context
             + 2 * B * S * D * D)                 # output projection
    bytes_accessed = (B * S * D * 2               # x (bf16)
                      + 2 * D * D * 2 + D * kv_out * 2   # weights (bf16)
                      + (2 * D + kv_out) * 4      # biases (f32)
                      + B * S * D * 4)            # output (f32)
    cost = pl.CostEstimate(flops=flops,
                           transcendentals=B * num_heads * S * S,
                           bytes_accessed=bytes_accessed)

    grid_spec = pltpu.PrefetchScalarGridSpec(
        num_scalar_prefetch=0,
        grid=(B, n_qt),
        in_specs=[
            pl.BlockSpec((None, S, D), lambda b, qi: (b, 0, 0)),       # x (full seq / batch)
            # constant-index weights stay resident (no re-DMA across qi / b)
            pl.BlockSpec((D, D), lambda b, qi: (0, 0)),                # W_Q
            pl.BlockSpec((1, D), lambda b, qi: (0, 0)),                # b_Q
            pl.BlockSpec((D, kv_out), lambda b, qi: (0, 0)),           # W_KV (fused)
            pl.BlockSpec((1, kv_out), lambda b, qi: (0, 0)),           # b_KV (fused)
            pl.BlockSpec((D, D), lambda b, qi: (0, 0)),                # W_O
            pl.BlockSpec((1, D), lambda b, qi: (0, 0)),                # b_O
        ],
        out_specs=pl.BlockSpec((None, tq, D), lambda b, qi: (b, qi, 0)),
        scratch_shapes=[
            pltpu.VMEM((groups, S, d_k), jnp.bfloat16),                # K per group
            pltpu.VMEM((groups, S, d_k), jnp.bfloat16),                # V per group
        ],
    )

    return pl.pallas_call(
        kernel,
        out_shape=jax.ShapeDtypeStruct((B, S, D), out_dtype),
        grid_spec=grid_spec,
        cost_estimate=cost,
        compiler_params=pltpu.CompilerParams(
            # qi MUST stay "arbitrary": K/V scratch is filled under pl.when(qi == 0).
            dimension_semantics=("parallel", "arbitrary"),
            vmem_limit_bytes=vmem_limit),
    )(xb, wq_b, bq2, wkv, bkv, wo_b, bo2)


def gqa_reference(x, wq, bq, wk, bk, wv, bv, wo, bo, *, num_heads, groups):
    """Plain-JAX f32 reference mirroring the PyTorch forward (mask=None)."""
    B, S, D = x.shape
    d_k = D // num_heads
    hpg = num_heads // groups
    q = x @ wq + bq                                              # (B, S, D)
    q = q.reshape(B, S, num_heads, d_k).transpose(0, 2, 1, 3)    # (B, H, S, d_k)
    k = jnp.einsum('bsd,gdk->bgsk', x, wk) + bk[None, :, None, :]
    v = jnp.einsum('bsd,gdk->bgsk', x, wv) + bv[None, :, None, :]
    qg = q.reshape(B, groups, hpg, S, d_k)
    scores = jnp.einsum('bghsk,bgtk->bghst', qg, k) / math.sqrt(d_k)
    attn = jax.nn.softmax(scores, axis=-1)
    ctx = jnp.einsum('bghst,bgtk->bghsk', attn, v)
    ctx = ctx.reshape(B, num_heads, S, d_k).transpose(0, 2, 1, 3).reshape(B, S, D)
    return ctx @ wo + bo


if __name__ == "__main__":
    # Small, TPU-friendly shapes consistent with the module's constraints.
    B, S = 2, 256
    d_model, num_heads, groups = 128, 4, 2
    d_k = d_model // num_heads

    key = jax.random.PRNGKey(0)
    keys = jax.random.split(key, 10)

    x = jax.random.normal(keys[0], (B, S, d_model), dtype=jnp.float32)
    wq = jax.random.normal(keys[1], (d_model, d_model), dtype=jnp.float32) * 0.05
    bq = jax.random.normal(keys[2], (1, d_model), dtype=jnp.float32) * 0.05
    wk = jax.random.normal(keys[3], (groups, d_model, d_k), dtype=jnp.float32) * 0.05
    bk = jax.random.normal(keys[4], (groups, d_k), dtype=jnp.float32) * 0.05
    wv = jax.random.normal(keys[5], (groups, d_model, d_k), dtype=jnp.float32) * 0.05
    bv = jax.random.normal(keys[6], (groups, d_k), dtype=jnp.float32) * 0.05
    wo = jax.random.normal(keys[7], (d_model, d_model), dtype=jnp.float32) * 0.05
    bo = jax.random.normal(keys[8], (1, d_model), dtype=jnp.float32) * 0.05

    out = gqa_forward(x, wq, bq, wk, bk, wv, bv, wo, bo,
                      num_heads=num_heads, groups=groups)
    out = jax.block_until_ready(out)

    ref = gqa_reference(x, wq, bq[0], wk, bk, wv, bv, wo, bo[0],
                        num_heads=num_heads, groups=groups)
    ref = jax.block_until_ready(ref)

    assert out.shape == (B, S, d_model)
    max_err = jnp.max(jnp.abs(out - ref))
    # bf16 MXU operands vs f32 reference => loosened tolerance.
    assert jnp.allclose(out, ref, atol=5e-2, rtol=5e-2), f"max abs err = {max_err}"

    print("KERNEL_OK")
</pallas_src>

<mosaic_0001>
module attributes {stable_mosaic.version = 11 : i64} {
  func.func @_gqa_kernel(%arg0: i32, %arg1: i32, %arg2: memref<1x256x128xbf16, #tpu.memory_space<vmem>>, %arg3: memref<128x128xbf16, #tpu.memory_space<vmem>>, %arg4: memref<1x128xf32, #tpu.memory_space<vmem>>, %arg5: memref<128x128xbf16, #tpu.memory_space<vmem>>, %arg6: memref<1x128xf32, #tpu.memory_space<vmem>>, %arg7: memref<128x128xbf16, #tpu.memory_space<vmem>>, %arg8: memref<1x128xf32, #tpu.memory_space<vmem>>, %arg9: memref<1x128x128xf32, #tpu.memory_space<vmem>>, %arg10: memref<2x256x32xbf16, #tpu.memory_space<vmem>>, %arg11: memref<2x256x32xbf16, #tpu.memory_space<vmem>>) attributes {dimension_semantics = [#tpu.dimension_semantics<parallel>, #tpu.dimension_semantics<arbitrary>], iteration_bounds = array<i64: 2, 2>, scalar_prefetch = 0 : i64, scratch_operands = 2 : i64, tpu.core_type = #tpu.core_type<tc>, window_params = [{transform_indices = @transform_0, window_bounds = array<i64: 1, 256, 128>}, {pipeline_mode = #tpu.pipeline_mode<synchronous>, transform_indices = @transform_1, window_bounds = array<i64: 128, 128>}, {pipeline_mode = #tpu.pipeline_mode<synchronous>, transform_indices = @transform_2, window_bounds = array<i64: 1, 128>}, {pipeline_mode = #tpu.pipeline_mode<synchronous>, transform_indices = @transform_3, window_bounds = array<i64: 128, 128>}, {pipeline_mode = #tpu.pipeline_mode<synchronous>, transform_indices = @transform_4, window_bounds = array<i64: 1, 128>}, {pipeline_mode = #tpu.pipeline_mode<synchronous>, transform_indices = @transform_5, window_bounds = array<i64: 128, 128>}, {pipeline_mode = #tpu.pipeline_mode<synchronous>, transform_indices = @transform_6, window_bounds = array<i64: 1, 128>}, {transform_indices = @transform_7, window_bounds = array<i64: 1, 128, 128>}]} {
    %c0_i32 = arith.constant 0 : i32
    %0 = arith.cmpi eq, %arg1, %c0_i32 : i32
    %1 = arith.extui %0 : i1 to i32
    %c0_i32_0 = arith.constant 0 : i32
    %2 = arith.cmpi ne, %1, %c0_i32_0 : i32
    scf.if %2 {
      %c0_34 = arith.constant 0 : index
      %c0_35 = arith.constant 0 : index
      %c0_36 = arith.constant 0 : index
      %71 = vector.load %arg2[%c0_34, %c0_35, %c0_36] : memref<1x256x128xbf16, #tpu.memory_space<vmem>>, vector<1x256x128xbf16>
      %72 = vector.shape_cast %71 : vector<1x256x128xbf16> to vector<256x128xbf16>
      %c0_37 = arith.constant 0 : index
      %c0_38 = arith.constant 0 : index
      %73 = vector.load %arg5[%c0_37, %c0_38] : memref<128x128xbf16, #tpu.memory_space<vmem>>, vector<128x128xbf16>
      %cst_39 = arith.constant dense<0.000000e+00> : vector<256x128xf32>
      %74 = tpu.matmul %72, %73, %cst_39 {dimension_numbers = #tpu.dot_dimension_numbers<[1], [0], [0], [1], [0, 0, 1, 1], [], []>} : vector<256x128xbf16>, vector<128x128xbf16>, vector<256x128xf32> -> vector<256x128xf32>
      %c0_40 = arith.constant 0 : index
      %c0_41 = arith.constant 0 : index
      %75 = vector.load %arg6[%c0_40, %c0_41] : memref<1x128xf32, #tpu.memory_space<vmem>>, vector<1x128xf32>
      %76 = vector.broadcast %75 : vector<1x128xf32> to vector<256x128xf32>
      %77 = arith.addf %74, %76 : vector<256x128xf32>
      %78 = arith.truncf %77 : vector<256x128xf32> to vector<256x128xbf16>
      %79 = vector.extract_strided_slice %78 {offsets = [0, 0], sizes = [256, 32], strides = [1, 1]} : vector<256x128xbf16> to vector<256x32xbf16>
      %c0_42 = arith.constant 0 : index
      %c0_43 = arith.constant 0 : index
      %c0_44 = arith.constant 0 : index
      %80 = vector.load %arg10[%c0_42, %c0_43, %c0_44] : memref<2x256x32xbf16, #tpu.memory_space<vmem>>, vector<1x256x32xbf16>
      %81 = vector.shape_cast %80 : vector<1x256x32xbf16> to vector<256x32xbf16>
      %82 = vector.shape_cast %79 : vector<256x32xbf16> to vector<1x256x32xbf16>
      tpu.vector_store %arg10[%c0_42, %c0_43, %c0_44], %82 {strides = array<i32>} : memref<2x256x32xbf16, #tpu.memory_space<vmem>>, vector<1x256x32xbf16>,
      %83 = vector.extract_strided_slice %78 {offsets = [0, 64], sizes = [256, 32], strides = [1, 1]} : vector<256x128xbf16> to vector<256x32xbf16>
      %c0_45 = arith.constant 0 : index
      %c0_46 = arith.constant 0 : index
      %c0_47 = arith.constant 0 : index
      %84 = vector.load %arg11[%c0_45, %c0_46, %c0_47] : memref<2x256x32xbf16, #tpu.memory_space<vmem>>, vector<1x256x32xbf16>
      %85 = vector.shape_cast %84 : vector<1x256x32xbf16> to vector<256x32xbf16>
      %86 = vector.shape_cast %83 : vector<256x32xbf16> to vector<1x256x32xbf16>
      tpu.vector_store %arg11[%c0_45, %c0_46, %c0_47], %86 {strides = array<i32>} : memref<2x256x32xbf16, #tpu.memory_space<vmem>>, vector<1x256x32xbf16>,
      %87 = vector.extract_strided_slice %78 {offsets = [0, 32], sizes = [256, 32], strides = [1, 1]} : vector<256x128xbf16> to vector<256x32xbf16>
      %c1_48 = arith.constant 1 : index
      %c0_49 = arith.constant 0 : index
      %c0_50 = arith.constant 0 : index
      %88 = vector.load %arg10[%c1_48, %c0_49, %c0_50] : memref<2x256x32xbf16, #tpu.memory_space<vmem>>, vector<1x256x32xbf16>
      %89 = vector.shape_cast %88 : vector<1x256x32xbf16> to vector<256x32xbf16>
      %90 = vector.shape_cast %87 : vector<256x32xbf16> to vector<1x256x32xbf16>
      tpu.vector_store %arg10[%c1_48, %c0_49, %c0_50], %90 {strides = array<i32>} : memref<2x256x32xbf16, #tpu.memory_space<vmem>>, vector<1x256x32xbf16>,
      %91 = vector.extract_strided_slice %78 {offsets = [0, 96], sizes = [256, 32], strides = [1, 1]} : vector<256x128xbf16> to vector<256x32xbf16>
      %c1_51 = arith.constant 1 : index
      %c0_52 = arith.constant 0 : index
      %c0_53 = arith.constant 0 : index
      %92 = vector.load %arg11[%c1_51, %c0_52, %c0_53] : memref<2x256x32xbf16, #tpu.memory_space<vmem>>, vector<1x256x32xbf16>
      %93 = vector.shape_cast %92 : vector<1x256x32xbf16> to vector<256x32xbf16>
      %94 = vector.shape_cast %91 : vector<256x32xbf16> to vector<1x256x32xbf16>
      tpu.vector_store %arg11[%c1_51, %c0_52, %c0_53], %94 {strides = array<i32>} : memref<2x256x32xbf16, #tpu.memory_space<vmem>>, vector<1x256x32xbf16>,
    } else {
    }
    %c128_i32 = arith.constant 128 : i32
    %3 = arith.muli %arg1, %c128_i32 : i32
    %4 = tpu.assume_multiple %3, 128 : i32
    %c0 = arith.constant 0 : index
    %5 = arith.index_cast %4 : i32 to index
    %c0_1 = arith.constant 0 : index
    %6 = vector.load %arg2[%c0, %5, %c0_1] : memref<1x256x128xbf16, #tpu.memory_space<vmem>>, vector<1x128x128xbf16>
    %7 = vector.shape_cast %6 : vector<1x128x128xbf16> to vector<128x128xbf16>
    %c0_2 = arith.constant 0 : index
    %c0_3 = arith.constant 0 : index
    %8 = vector.load %arg3[%c0_2, %c0_3] : memref<128x128xbf16, #tpu.memory_space<vmem>>, vector<128x128xbf16>
    %cst = arith.constant dense<0.000000e+00> : vector<128x128xf32>
    %9 = tpu.matmul %7, %8, %cst {dimension_numbers = #tpu.dot_dimension_numbers<[1], [0], [0], [1], [0, 0, 1, 1], [], []>} : vector<128x128xbf16>, vector<128x128xbf16>, vector<128x128xf32> -> vector<128x128xf32>
    %c0_4 = arith.constant 0 : index
    %c0_5 = arith.constant 0 : index
    %10 = vector.load %arg4[%c0_4, %c0_5] : memref<1x128xf32, #tpu.memory_space<vmem>>, vector<1x128xf32>
    %11 = vector.broadcast %10 : vector<1x128xf32> to vector<128x128xf32>
    %12 = arith.addf %9, %11 : vector<128x128xf32>
    %cst_6 = arith.constant 0.176776692 : f32
    %13 = vector.broadcast %cst_6 : f32 to vector<128x128xf32>
    %14 = arith.mulf %12, %13 : vector<128x128xf32>
    %15 = arith.truncf %14 : vector<128x128xf32> to vector<128x128xbf16>
    %16 = vector.extract_strided_slice %15 {offsets = [0, 0], sizes = [128, 32], strides = [1, 1]} : vector<128x128xbf16> to vector<128x32xbf16>
    %17 = vector.extract_strided_slice %15 {offsets = [0, 32], sizes = [128, 32], strides = [1, 1]} : vector<128x128xbf16> to vector<128x32xbf16>
    %18 = vector.extract_strided_slice %15 {offsets = [0, 64], sizes = [128, 32], strides = [1, 1]} : vector<128x128xbf16> to vector<128x32xbf16>
    %19 = vector.extract_strided_slice %15 {offsets = [0, 96], sizes = [128, 32], strides = [1, 1]} : vector<128x128xbf16> to vector<128x32xbf16>
    %c0_7 = arith.constant 0 : index
    %c0_8 = arith.constant 0 : index
    %c0_9 = arith.constant 0 : index
    %20 = vector.load %arg10[%c0_7, %c0_8, %c0_9] : memref<2x256x32xbf16, #tpu.memory_space<vmem>>, vector<1x256x32xbf16>
    %21 = vector.shape_cast %20 : vector<1x256x32xbf16> to vector<256x32xbf16>
    %c0_10 = arith.constant 0 : index
    %c0_11 = arith.constant 0 : index
    %c0_12 = arith.constant 0 : index
    %22 = vector.load %arg11[%c0_10, %c0_11, %c0_12] : memref<2x256x32xbf16, #tpu.memory_space<vmem>>, vector<1x256x32xbf16>
    %23 = vector.shape_cast %22 : vector<1x256x32xbf16> to vector<256x32xbf16>
    %24 = tpu.concatenate %16, %17 in 0 : vector<128x32xbf16>, vector<128x32xbf16> -> vector<256x32xbf16>
    %cst_13 = arith.constant dense<0.000000e+00> : vector<256x256xf32>
    %25 = tpu.matmul %24, %21, %cst_13 {dimension_numbers = #tpu.dot_dimension_numbers<[1], [1], [0], [0], [0, 0, 1, 0], [], []>} : vector<256x32xbf16>, vector<256x32xbf16>, vector<256x256xf32> -> vector<256x256xf32>
    %cst_14 = arith.constant dense<0xFF800000> : vector<256xf32>
    %26 = vector.multi_reduction <maximumf>, %25, %cst_14 [1] : vector<256x256xf32> to vector<256xf32>
    %27 = vector.shape_cast %26 : vector<256xf32> to vector<256x1xf32>
    %28 = vector.broadcast %27 : vector<256x1xf32> to vector<256x256xf32>
    %29 = arith.subf %25, %28 : vector<256x256xf32>
    %30 = math.exp %29 : vector<256x256xf32>
    %cst_15 = arith.constant dense<0.000000e+00> : vector<256xf32>
    %31 = vector.multi_reduction <add>, %30, %cst_15 [1] : vector<256x256xf32> to vector<256xf32>
    %32 = vector.shape_cast %31 : vector<256xf32> to vector<256x1xf32>
    %33 = tpu.reciprocal %32 : vector<256x1xf32> -> vector<256x1xf32>
    %34 = vector.broadcast %33 : vector<256x1xf32> to vector<256x256xf32>
    %35 = arith.mulf %30, %34 : vector<256x256xf32>
    %36 = arith.truncf %35 : vector<256x256xf32> to vector<256x256xbf16>
    %cst_16 = arith.constant dense<0.000000e+00> : vector<256x32xf32>
    %37 = tpu.matmul %36, %23, %cst_16 {dimension_numbers = #tpu.dot_dimension_numbers<[1], [0], [0], [1], [0, 0, 1, 1], [], []>} : vector<256x256xbf16>, vector<256x32xbf16>, vector<256x32xf32> -> vector<256x32xf32>
    %38 = arith.truncf %37 : vector<256x32xf32> to vector<256x32xbf16>
    %39 = vector.extract_strided_slice %38 {offsets = [0, 0], sizes = [128, 32], strides = [1, 1]} : vector<256x32xbf16> to vector<128x32xbf16>
    %40 = vector.extract_strided_slice %38 {offsets = [128, 0], sizes = [128, 32], strides = [1, 1]} : vector<256x32xbf16> to vector<128x32xbf16>
    %c1 = arith.constant 1 : index
    %c0_17 = arith.constant 0 : index
    %c0_18 = arith.constant 0 : index
    %41 = vector.load %arg10[%c1, %c0_17, %c0_18] : memref<2x256x32xbf16, #tpu.memory_space<vmem>>, vector<1x256x32xbf16>
    %42 = vector.shape_cast %41 : vector<1x256x32xbf16> to vector<256x32xbf16>
    %c1_19 = arith.constant 1 : index
    %c0_20 = arith.constant 0 : index
    %c0_21 = arith.constant 0 : index
    %43 = vector.load %arg11[%c1_19, %c0_20, %c0_21] : memref<2x256x32xbf16, #tpu.memory_space<vmem>>, vector<1x256x32xbf16>
    %44 = vector.shape_cast %43 : vector<1x256x32xbf16> to vector<256x32xbf16>
    %45 = tpu.concatenate %18, %19 in 0 : vector<128x32xbf16>, vector<128x32xbf16> -> vector<256x32xbf16>
    %cst_22 = arith.constant dense<0.000000e+00> : vector<256x256xf32>
    %46 = tpu.matmul %45, %42, %cst_22 {dimension_numbers = #tpu.dot_dimension_numbers<[1], [1], [0], [0], [0, 0, 1, 0], [], []>} : vector<256x32xbf16>, vector<256x32xbf16>, vector<256x256xf32> -> vector<256x256xf32>
    %cst_23 = arith.constant dense<0xFF800000> : vector<256xf32>
    %47 = vector.multi_reduction <maximumf>, %46, %cst_23 [1] : vector<256x256xf32> to vector<256xf32>
    %48 = vector.shape_cast %47 : vector<256xf32> to vector<256x1xf32>
    %49 = vector.broadcast %48 : vector<256x1xf32> to vector<256x256xf32>
    %50 = arith.subf %46, %49 : vector<256x256xf32>
    %51 = math.exp %50 : vector<256x256xf32>
    %cst_24 = arith.constant dense<0.000000e+00> : vector<256xf32>
    %52 = vector.multi_reduction <add>, %51, %cst_24 [1] : vector<256x256xf32> to vector<256xf32>
    %53 = vector.shape_cast %52 : vector<256xf32> to vector<256x1xf32>
    %54 = tpu.reciprocal %53 : vector<256x1xf32> -> vector<256x1xf32>
    %55 = vector.broadcast %54 : vector<256x1xf32> to vector<256x256xf32>
    %56 = arith.mulf %51, %55 : vector<256x256xf32>
    %57 = arith.truncf %56 : vector<256x256xf32> to vector<256x256xbf16>
    %cst_25 = arith.constant dense<0.000000e+00> : vector<256x32xf32>
    %58 = tpu.matmul %57, %44, %cst_25 {dimension_numbers = #tpu.dot_dimension_numbers<[1], [0], [0], [1], [0, 0, 1, 1], [], []>} : vector<256x256xbf16>, vector<256x32xbf16>, vector<256x32xf32> -> vector<256x32xf32>
    %59 = arith.truncf %58 : vector<256x32xf32> to vector<256x32xbf16>
    %60 = vector.extract_strided_slice %59 {offsets = [0, 0], sizes = [128, 32], strides = [1, 1]} : vector<256x32xbf16> to vector<128x32xbf16>
    %61 = vector.extract_strided_slice %59 {offsets = [128, 0], sizes = [128, 32], strides = [1, 1]} : vector<256x32xbf16> to vector<128x32xbf16>
    %62 = tpu.concatenate %39, %40, %60, %61 in 1 : vector<128x32xbf16>, vector<128x32xbf16>, vector<128x32xbf16>, vector<128x32xbf16> -> vector<128x128xbf16>
    %c0_26 = arith.constant 0 : index
    %c0_27 = arith.constant 0 : index
    %63 = vector.load %arg7[%c0_26, %c0_27] : memref<128x128xbf16, #tpu.memory_space<vmem>>, vector<128x128xbf16>
    %cst_28 = arith.constant dense<0.000000e+00> : vector<128x128xf32>
    %64 = tpu.matmul %62, %63, %cst_28 {dimension_numbers = #tpu.dot_dimension_numbers<[1], [0], [0], [1], [0, 0, 1, 1], [], []>} : vector<128x128xbf16>, vector<128x128xbf16>, vector<128x128xf32> -> vector<128x128xf32>
    %c0_29 = arith.constant 0 : index
    %c0_30 = arith.constant 0 : index
    %65 = vector.load %arg8[%c0_29, %c0_30] : memref<1x128xf32, #tpu.memory_space<vmem>>, vector<1x128xf32>
    %66 = vector.broadcast %65 : vector<1x128xf32> to vector<128x128xf32>
    %67 = arith.addf %64, %66 : vector<128x128xf32>
    %c0_31 = arith.constant 0 : index
    %c0_32 = arith.constant 0 : index
    %c0_33 = arith.constant 0 : index
    %68 = vector.load %arg9[%c0_31, %c0_32, %c0_33] : memref<1x128x128xf32, #tpu.memory_space<vmem>>, vector<1x128x128xf32>
    %69 = vector.shape_cast %68 : vector<1x128x128xf32> to vector<128x128xf32>
    %70 = vector.shape_cast %67 : vector<128x128xf32> to vector<1x128x128xf32>
    tpu.vector_store %arg9[%c0_31, %c0_32, %c0_33], %70 {strides = array<i32>} : memref<1x128x128xf32, #tpu.memory_space<vmem>>, vector<1x128x128xf32>,
    return
  }
  func.func @transform_0(%arg0: i32, %arg1: i32) -> (i32, i32, i32) {
    %c0_i32 = arith.constant 0 : i32
    %c0_i32_0 = arith.constant 0 : i32
    %c0_i32_1 = arith.constant 0 : i32
    return %arg0, %c0_i32, %c0_i32_0 : i32, i32, i32
  }
  func.func @transform_1(%arg0: i32, %arg1: i32) -> (i32, i32) {
    %c0_i32 = arith.constant 0 : i32
    %c0_i32_0 = arith.constant 0 : i32
    %c0_i32_1 = arith.constant 0 : i32
    return %c0_i32, %c0_i32_0 : i32, i32
  }
  func.func @transform_2(%arg0: i32, %arg1: i32) -> (i32, i32) {
    %c0_i32 = arith.constant 0 : i32
    %c0_i32_0 = arith.constant 0 : i32
    %c0_i32_1 = arith.constant 0 : i32
    return %c0_i32, %c0_i32_0 : i32, i32
  }
  func.func @transform_3(%arg0: i32, %arg1: i32) -> (i32, i32) {
    %c0_i32 = arith.constant 0 : i32
    %c0_i32_0 = arith.constant 0 : i32
    %c0_i32_1 = arith.constant 0 : i32
    return %c0_i32, %c0_i32_0 : i32, i32
  }
  func.func @transform_4(%arg0: i32, %arg1: i32) -> (i32, i32) {
    %c0_i32 = arith.constant 0 : i32
    %c0_i32_0 = arith.constant 0 : i32
    %c0_i32_1 = arith.constant 0 : i32
    return %c0_i32, %c0_i32_0 : i32, i32
  }
  func.func @transform_5(%arg0: i32, %arg1: i32) -> (i32, i32) {
    %c0_i32 = arith.constant 0 : i32
    %c0_i32_0 = arith.constant 0 : i32
    %c0_i32_1 = arith.constant 0 : i32
    return %c0_i32, %c0_i32_0 : i32, i32
  }
  func.func @transform_6(%arg0: i32, %arg1: i32) -> (i32, i32) {
    %c0_i32 = arith.constant 0 : i32
    %c0_i32_0 = arith.constant 0 : i32
    %c0_i32_1 = arith.constant 0 : i32
    return %c0_i32, %c0_i32_0 : i32, i32
  }
  func.func @transform_7(%arg0: i32, %arg1: i32) -> (i32, i32, i32) {
    %c0_i32 = arith.constant 0 : i32
    %c0_i32_0 = arith.constant 0 : i32
    return %arg0, %arg1, %c0_i32 : i32, i32, i32
  }
}

</mosaic_0001>

<llo_original>
// kernel: tpu_custom_call.1
$region0: #{tpu_custom_call.1}
  #allocation0 [shape = 'u32[]', space=smem, size = 0x4, offset = 0x4, fixed_abs, tag = 'smem constant byte address 0x4 - core index']
  #allocation1 [shape = 'u32[72,128]{1,0:T(1,128)}', space=vmem, size = 0x9000, scoped, tag = 'internal scratch']
  #allocation2 [shape = 'bf16[2,256,32]{2,1,0:T(8,128)(2,1)}', space=vmem, size = 0x20000, scoped, tag = 'scratch operand']
  #allocation3 [shape = 'bf16[2,256,32]{2,1,0:T(8,128)(2,1)}', space=vmem, size = 0x20000, scoped, tag = 'scratch operand']
  %s0 = inlined_call_operand.hbm [shape: bf16[2,256,128], index: 0, kind: input, shape index: {}]
  %s1 = inlined_call_operand.hbm [shape: bf16[128,128], index: 1, kind: input, shape index: {}]
  %s2 = inlined_call_operand.vmem [shape: f32[1,128], index: 2, kind: input, shape index: {}]
  %s3 = inlined_call_operand.hbm [shape: bf16[128,128], index: 3, kind: input, shape index: {}]
  %s4 = inlined_call_operand.vmem [shape: f32[1,128], index: 4, kind: input, shape index: {}]
  %s5 = inlined_call_operand.hbm [shape: bf16[128,128], index: 5, kind: input, shape index: {}]
  %s6 = inlined_call_operand.vmem [shape: f32[1,128], index: 6, kind: input, shape index: {}]
  %s7 = inlined_call_operand.hbm [shape: f32[2,256,128], index: 7, kind: output, shape index: {}]
  %s8 = sld [smem:[#allocation0]]
  $region81: #{tpu_custom_call.1} parent=0
    _
  %s10 = ssub.s32 1, %s8
  %s11 = scalar_select 0, %s10, %s8
  $region1: #{tpu_custom_call.1} parent=0
    #allocation4 [shape = 'u8[131072]{0}', space=vmem, size = 0x20000, scoped, tag = 'input window, operand 0']
    #allocation5 [shape = 's32[2]{0}', space=sflag, size = 0x8, scoped, tag = 'scoped memory for tpu_custom_call.1']
    #allocation6 [shape = 's32[2]{0}', space=sflag, size = 0x8, scoped, tag = 'scoped memory for tpu_custom_call.1']
    #allocation7 [shape = 'u8[32768]{0}', space=vmem, size = 0x8000, scoped, tag = 'input window, operand 1, single buffered']
    #allocation8 [shape = 's32[1]{0}', space=sflag, size = 0x4, scoped, tag = 'scoped memory for tpu_custom_call.1']
    #allocation9 [shape = 'u8[32768]{0}', space=vmem, size = 0x8000, scoped, tag = 'input window, operand 3, single buffered']
    #allocation10 [shape = 'u8[32768]{0}', space=vmem, size = 0x8000, scoped, tag = 'input window, operand 5, single buffered']
    #allocation11 [shape = 's32[1]{0}', space=sflag, size = 0x4, scoped, tag = 'scoped memory for tpu_custom_call.1']
    #allocation12 [shape = 'u8[131072]{0}', space=vmem, size = 0x20000, scoped, tag = 'output window, operand 0']
    %12 = vsyncpa [#allocation5], 0
    %s13 = scalar_lea.sflag [#allocation5], 1
    %14 = vsyncpa %s13, 0
    %15 = vsyncpa [#allocation8], 0
    %16 = vsyncpa [#allocation11], 0
    %17 = vsyncpa [#allocation6], 0
    %s18 = scalar_lea.sflag [#allocation6], 1
    %19 = vsyncpa %s18, 0
    loop: start=0, step=1, limit=6
    $region2: #{tpu_custom_call.1} parent=1 // loop_pre_header
      _
    $region3: #{tpu_custom_call.1} parent=1 // loop_header
      %s21 = sphi 0, %s25
      %p22 = scmp.ge.s32.totalorder %s21, 6
      %s28 = sphi 0, %s40
      %s29 = sphi 0, %s36
      %s30 = sphi 0, %s28
      %s31 = sphi 0, %s29
      %s32 = sphi 0, %s30
      %s33 = sphi 0, %s31
      %s43 = sphi 0, %s45
      %s46 = sphi 0, %s43
      %s47 = sphi 0, %s46
      %s63 = sphi 0, %s47
      %s67 = sphi 0, %s67
      %s69 = sphi 0, %s67
      %s70 = sphi 0, %s69
      %s84 = sphi 0, %s70
      %s88 = sphi 0, %s88
      %s90 = sphi 0, %s88
      %s91 = sphi 0, %s90
      %s105 = sphi 0, %s91
      %s109 = sphi 0, %s109
      %s111 = sphi 0, %s109
      %s112 = sphi 0, %s111
      %s126 = sphi 0, %s112
      %s130 = sphi 0, %s130
      %s132 = sphi 0, %s130
      %s133 = sphi 0, %s132
      %s147 = sphi 0, %s133
      %s151 = sphi 0, %s151
      %s153 = sphi 0, %s151
      %s154 = sphi 0, %s153
      %s168 = sphi 0, %s154
      %s172 = sphi 0, %s172
      %s174 = sphi 0, %s172
      %s175 = sphi 0, %s174
      %s189 = sphi 0, %s175
      %s197 = sphi 0, %s199
      %s200 = sphi 0, %s197
      %s201 = sphi 0, %s200
      %s217 = sphi 0, %s201
    $region4: #{tpu_custom_call.1} parent=1 // loop_header_branch
      %24 = sbr.rel (%p22) target = $region8
    $region5: #{tpu_custom_call.1} parent=1 // loop_body
      %s26 = ssub.s32 %s21, 1
      %s27 = ssub.s32 %s21, 2
      %s34 = sadd.s32 1, %s29
      %p35 = scmp.ge.s32.totalorder %s34, 2
      %s36 = scalar_select %p35, 0, %s34
      %s37 = sadd.s32 1, %s28
      %s38 = scalar_select %p35, %s37, %s28
      %p39 = scmp.ge.s32.totalorder %s38, 2
      %s40 = scalar_select %p39, 0, %s38
      %s41 = ssub.s32 %s28, %s40
      %p42 = scmp.eq.s32.totalorder %s41, 0
      %s44 = sadd.s32 %s43, 1
      %s45 = scalar_select %p42, %s43, %s44
      %p48 = pneg %p42
      %p49 = scmp.eq.s32.totalorder %s21, 3
      %p50 = por %p48, %p49
      %p51 = scmp.ne.s32.totalorder %s43, %s46
      %p52 = scmp.eq.s32.totalorder %s21, 0
      %p53 = por %p51, %p52
      %p54 = scmp.ne.s32.totalorder %s43, %s46
      %p55 = scmp.eq.s32.totalorder %s26, 3
      %p56 = por %p54, %p55
      %p57 = scmp.ne.s32.totalorder %s46, %s47
      %p58 = scmp.eq.s32.totalorder %s26, 0
      %p59 = por %p57, %p58
      %p60 = scmp.ne.s32.totalorder %s46, %s47
      %p61 = scmp.eq.s32.totalorder %s27, 3
      %p62 = por %p60, %p61
      %p64 = scmp.ne.s32.totalorder %s47, %s63
      %p65 = scmp.eq.s32.totalorder %s27, 0
      %p66 = por %p64, %p65
      %s68 = sadd.s32 %s67, 1
      %p71 = scmp.eq.s32.totalorder %s21, 3
      %p72 = scmp.ne.s32.totalorder %s67, %s69
      %p73 = scmp.eq.s32.totalorder %s21, 0
      %p74 = por %p72, %p73
      %p75 = scmp.ne.s32.totalorder %s67, %s69
      %p76 = scmp.eq.s32.totalorder %s26, 3
      %p77 = por %p75, %p76
      %p78 = scmp.ne.s32.totalorder %s69, %s70
      %p79 = scmp.eq.s32.totalorder %s26, 0
      %p80 = por %p78, %p79
      %p81 = scmp.ne.s32.totalorder %s69, %s70
      %p82 = scmp.eq.s32.totalorder %s27, 3
      %p83 = por %p81, %p82
      %p85 = scmp.ne.s32.totalorder %s70, %s84
      %p86 = scmp.eq.s32.totalorder %s27, 0
      %p87 = por %p85, %p86
      %s89 = sadd.s32 %s88, 1
      %p92 = scmp.eq.s32.totalorder %s21, 3
      %p93 = scmp.ne.s32.totalorder %s88, %s90
      %p94 = scmp.eq.s32.totalorder %s21, 0
      %p95 = por %p93, %p94
      %p96 = scmp.ne.s32.totalorder %s88, %s90
      %p97 = scmp.eq.s32.totalorder %s26, 3
      %p98 = por %p96, %p97
      %p99 = scmp.ne.s32.totalorder %s90, %s91
      %p100 = scmp.eq.s32.totalorder %s26, 0
      %p101 = por %p99, %p100
      %p102 = scmp.ne.s32.totalorder %s90, %s91
      %p103 = scmp.eq.s32.totalorder %s27, 3
      %p104 = por %p102, %p103
      %p106 = scmp.ne.s32.totalorder %s91, %s105
      %p107 = scmp.eq.s32.totalorder %s27, 0
      %p108 = por %p106, %p107
      %s110 = sadd.s32 %s109, 1
      %p113 = scmp.eq.s32.totalorder %s21, 3
      %p114 = scmp.ne.s32.totalorder %s109, %s111
      %p115 = scmp.eq.s32.totalorder %s21, 0
      %p116 = por %p114, %p115
      %p117 = scmp.ne.s32.totalorder %s109, %s111
      %p118 = scmp.eq.s32.totalorder %s26, 3
      %p119 = por %p117, %p118
      %p120 = scmp.ne.s32.totalorder %s111, %s112
      %p121 = scmp.eq.s32.totalorder %s26, 0
      %p122 = por %p120, %p121
      %p123 = scmp.ne.s32.totalorder %s111, %s112
      %p124 = scmp.eq.s32.totalorder %s27, 3
      %p125 = por %p123, %p124
      %p127 = scmp.ne.s32.totalorder %s112, %s126
      %p128 = scmp.eq.s32.totalorder %s27, 0
      %p129 = por %p127, %p128
      %s131 = sadd.s32 %s130, 1
      %p134 = scmp.eq.s32.totalorder %s21, 3
      %p135 = scmp.ne.s32.totalorder %s130, %s132
      %p136 = scmp.eq.s32.totalorder %s21, 0
      %p137 = por %p135, %p136
      %p138 = scmp.ne.s32.totalorder %s130, %s132
      %p139 = scmp.eq.s32.totalorder %s26, 3
      %p140 = por %p138, %p139
      %p141 = scmp.ne.s32.totalorder %s132, %s133
      %p142 = scmp.eq.s32.totalorder %s26, 0
      %p143 = por %p141, %p142
      %p144 = scmp.ne.s32.totalorder %s132, %s133
      %p145 = scmp.eq.s32.totalorder %s27, 3
      %p146 = por %p144, %p145
      %p148 = scmp.ne.s32.totalorder %s133, %s147
      %p149 = scmp.eq.s32.totalorder %s27, 0
      %p150 = por %p148, %p149
      %s152 = sadd.s32 %s151, 1
      %p155 = scmp.eq.s32.totalorder %s21, 3
      %p156 = scmp.ne.s32.totalorder %s151, %s153
      %p157 = scmp.eq.s32.totalorder %s21, 0
      %p158 = por %p156, %p157
      %p159 = scmp.ne.s32.totalorder %s151, %s153
      %p160 = scmp.eq.s32.totalorder %s26, 3
      %p161 = por %p159, %p160
      %p162 = scmp.ne.s32.totalorder %s153, %s154
      %p163 = scmp.eq.s32.totalorder %s26, 0
      %p164 = por %p162, %p163
      %p165 = scmp.ne.s32.totalorder %s153, %s154
      %p166 = scmp.eq.s32.totalorder %s27, 3
      %p167 = por %p165, %p166
      %p169 = scmp.ne.s32.totalorder %s154, %s168
      %p170 = scmp.eq.s32.totalorder %s27, 0
      %p171 = por %p169, %p170
      %s173 = sadd.s32 %s172, 1
      %p176 = scmp.eq.s32.totalorder %s21, 3
      %p177 = scmp.ne.s32.totalorder %s172, %s174
      %p178 = scmp.eq.s32.totalorder %s21, 0
      %p179 = por %p177, %p178
      %p180 = scmp.ne.s32.totalorder %s172, %s174
      %p181 = scmp.eq.s32.totalorder %s26, 3
      %p182 = por %p180, %p181
      %p183 = scmp.ne.s32.totalorder %s174, %s175
      %p184 = scmp.eq.s32.totalorder %s26, 0
      %p185 = por %p183, %p184
      %p186 = scmp.ne.s32.totalorder %s174, %s175
      %p187 = scmp.eq.s32.totalorder %s27, 3
      %p188 = por %p186, %p187
      %p190 = scmp.ne.s32.totalorder %s175, %s189
      %p191 = scmp.eq.s32.totalorder %s27, 0
      %p192 = por %p190, %p191
      %s193 = ssub.s32 %s28, %s40
      %s194 = ssub.s32 %s29, %s36
      %s195 = sor.u32 %s193, %s194
      %p196 = scmp.eq.s32.totalorder %s195, 0
      %s198 = sadd.s32 %s197, 1
      %s199 = scalar_select %p196, %s197, %s198
      %p202 = pneg %p196
      %p203 = scmp.eq.s32.totalorder %s21, 3
      %p204 = por %p202, %p203
      %p205 = scmp.ne.s32.totalorder %s197, %s200
      %p206 = scmp.eq.s32.totalorder %s21, 0
      %p207 = por %p205, %p206
      %p208 = scmp.ne.s32.totalorder %s197, %s200
      %p209 = scmp.eq.s32.totalorder %s26, 3
      %p210 = por %p208, %p209
      %p211 = scmp.ne.s32.totalorder %s200, %s201
      %p212 = scmp.eq.s32.totalorder %s26, 0
      %p213 = por %p211, %p212
      %p214 = scmp.ne.s32.totalorder %s200, %s201
      %p215 = scmp.eq.s32.totalorder %s27, 3
      %p216 = por %p214, %p215
      %p218 = scmp.ne.s32.totalorder %s201, %s217
      %p219 = scmp.eq.s32.totalorder %s27, 0
      %p220 = por %p218, %p219
      %p221 = scmp.le.s32.totalorder 1, %s21
      %p222 = scmp.lt.s32.totalorder %s21, 5
      %p223 = pnand %p221, %p222
      %p224 = pneg %p223
      // Predicated region
      $region9: #{tpu_custom_call.1} parent=5 // pred_check
        _
      $region10: #{tpu_custom_call.1} parent=5 // pred_check_branch
        %226 = sbr.rel (%p223) target = $region12
      $region11: #{tpu_custom_call.1} parent=5 // pred_region
        %s227 = ssub.s32 %s21, 1
        // Predicated region
        $region13: #{tpu_custom_call.1} parent=11 // pred_check
          %p228 = pneg %p80
        $region14: #{tpu_custom_call.1} parent=11 // pred_check_branch
          %230 = sbr.rel (%p228) target = $region16
        $region15: #{tpu_custom_call.1} parent=11 // pred_region
          %232 = vsyncadd [#allocation8], 0
          %s233 = sshll.u32 %s1, 4
          %s234 = int_to_ptr.hbm [resolvable:$true] %s233
          %s235 = sshll.u32 [#allocation7], 4
          %s236 = int_to_ptr.vmem [resolvable:$true] %s235
          %241 = dma.hbm_to_vmem [thread:$0]  %s234, 1024, %s236, [#allocation8], 64, 64, 4
        $region16: #{tpu_custom_call.1} parent=11 // pred_fallthru
          _
        // Predicated region
        $region17: #{tpu_custom_call.1} parent=11 // pred_check
          %p242 = pneg %p101
        $region18: #{tpu_custom_call.1} parent=11 // pred_check_branch
          %244 = sbr.rel (%p242) target = $region20
        $region19: #{tpu_custom_call.1} parent=11 // pred_region
          _
        $region20: #{tpu_custom_call.1} parent=11 // pred_fallthru
          _
        // Predicated region
        $region21: #{tpu_custom_call.1} parent=11 // pred_check
          %p245 = pneg %p122
        $region22: #{tpu_custom_call.1} parent=11 // pred_check_branch
          %247 = sbr.rel (%p245) target = $region24
        $region23: #{tpu_custom_call.1} parent=11 // pred_region
          %249 = vsyncadd [#allocation8], 0
          %s250 = sshll.u32 %s3, 4
          %s251 = int_to_ptr.hbm [resolvable:$true] %s250
          %s252 = sshll.u32 [#allocation9], 4
          %s253 = int_to_ptr.vmem [resolvable:$true] %s252
          %258 = dma.hbm_to_vmem [thread:$0]  %s251, 1024, %s253, [#allocation8], 64, 64, 4
        $region24: #{tpu_custom_call.1} parent=11 // pred_fallthru
          _
        // Predicated region
        $region25: #{tpu_custom_call.1} parent=11 // pred_check
          %p259 = pneg %p143
        $region26: #{tpu_custom_call.1} parent=11 // pred_check_branch
          %261 = sbr.rel (%p259) target = $region28
        $region27: #{tpu_custom_call.1} parent=11 // pred_region
          _
        $region28: #{tpu_custom_call.1} parent=11 // pred_fallthru
          _
        // Predicated region
        $region29: #{tpu_custom_call.1} parent=11 // pred_check
          %p262 = pneg %p164
        $region30: #{tpu_custom_call.1} parent=11 // pred_check_branch
          %264 = sbr.rel (%p262) target = $region32
        $region31: #{tpu_custom_call.1} parent=11 // pred_region
          %266 = vsyncadd [#allocation11], 0
          %s267 = sshll.u32 %s5, 4
          %s268 = int_to_ptr.hbm [resolvable:$true] %s267
          %s269 = sshll.u32 [#allocation10], 4
          %s270 = int_to_ptr.vmem [resolvable:$true] %s269
          %275 = dma.hbm_to_vmem [thread:$0]  %s268, 1024, %s270, [#allocation11], 64, 64, 4
        $region32: #{tpu_custom_call.1} parent=11 // pred_fallthru
          _
        // Predicated region
        $region33: #{tpu_custom_call.1} parent=11 // pred_check
          %p276 = pneg %p185
        $region34: #{tpu_custom_call.1} parent=11 // pred_check_branch
          %278 = sbr.rel (%p276) target = $region36
        $region35: #{tpu_custom_call.1} parent=11 // pred_region
          _
        $region36: #{tpu_custom_call.1} parent=11 // pred_fallthru
          _
      $region12: #{tpu_custom_call.1} parent=5 // pred_fallthru
        _
      %p279 = scmp.lt.s32.totalorder %s21, 4
      // Predicated region
      $region37: #{tpu_custom_call.1} parent=5 // pred_check
        %p280 = pneg %p279
      $region38: #{tpu_custom_call.1} parent=5 // pred_check_branch
        %282 = sbr.rel (%p280) target = $region40
      $region39: #{tpu_custom_call.1} parent=5 // pred_region
        // Predicated region
        $region41: #{tpu_custom_call.1} parent=39 // pred_check
          %p283 = pneg %p53
        $region42: #{tpu_custom_call.1} parent=39 // pred_check_branch
          %285 = sbr.rel (%p283) target = $region44
        $region43: #{tpu_custom_call.1} parent=39 // pred_region
          %s286 = sand.u32 %s43, 1
          %s287 = scalar_lea.sflag [#allocation5], %s286
          %s288 = sand.u32 %s43, 1
          %s289 = smul.addr %s288, 128
          %s290 = scalar_lea.vmem [#allocation4], %s289
          %292 = vsyncadd %s287, 0
          %s293 = smul.addr %s28, 32
          %s294 = smul.addr %s293, 4
          %s295 = scalar_lea.hbm %s0, %s294
          %s296 = sshll.u32 %s295, 4
          %s297 = int_to_ptr.hbm [resolvable:$true] %s296
          %s298 = sshll.u32 %s290, 4
          %s299 = int_to_ptr.vmem [resolvable:$true] %s298
          %304 = dma.hbm_to_vmem [thread:$0]  %s297, 2048, %s299, %s287, 64, 64, 4
        $region44: #{tpu_custom_call.1} parent=39 // pred_fallthru
          _
      $region40: #{tpu_custom_call.1} parent=5 // pred_fallthru
        _
      %p305 = scmp.le.s32.totalorder 1, %s21
      %p306 = scmp.lt.s32.totalorder %s21, 5
      %p307 = pnand %p305, %p306
      %p308 = pneg %p307
      // Predicated region
      $region45: #{tpu_custom_call.1} parent=5 // pred_check
        _
      $region46: #{tpu_custom_call.1} parent=5 // pred_check_branch
        %310 = sbr.rel (%p307) target = $region48
      $region47: #{tpu_custom_call.1} parent=5 // pred_region
        %s311 = ssub.s32 %s21, 1
        %s312 = sand.u32 %s46, 1
        %s313 = scalar_lea.sflag [#allocation5], %s312
        %s314 = sand.u32 %s46, 1
        %s315 = smul.addr %s314, 128
        %s316 = scalar_lea.vmem [#allocation4], %s315
        // Predicated region
        $region49: #{tpu_custom_call.1} parent=47 // pred_check
          %p317 = pneg %p59
        $region50: #{tpu_custom_call.1} parent=47 // pred_check_branch
          %319 = sbr.rel (%p317) target = $region52
        $region51: #{tpu_custom_call.1} parent=47 // pred_region
          %321 = dma.done %s313, 2048
        $region52: #{tpu_custom_call.1} parent=47 // pred_fallthru
          _
        // Predicated region
        $region53: #{tpu_custom_call.1} parent=47 // pred_check
          %p322 = pneg %p80
        $region54: #{tpu_custom_call.1} parent=47 // pred_check_branch
          %324 = sbr.rel (%p322) target = $region56
        $region55: #{tpu_custom_call.1} parent=47 // pred_region
          %326 = dma.done [#allocation8], 1024
        $region56: #{tpu_custom_call.1} parent=47 // pred_fallthru
          _
        // Predicated region
        $region57: #{tpu_custom_call.1} parent=47 // pred_check
          %p327 = pneg %p122
        $region58: #{tpu_custom_call.1} parent=47 // pred_check_branch
          %329 = sbr.rel (%p327) target = $region60
        $region59: #{tpu_custom_call.1} parent=47 // pred_region
          %331 = dma.done [#allocation8], 1024
        $region60: #{tpu_custom_call.1} parent=47 // pred_fallthru
          _
        // Predicated region
        $region61: #{tpu_custom_call.1} parent=47 // pred_check
          %p332 = pneg %p164
        $region62: #{tpu_custom_call.1} parent=47 // pred_check_branch
          %334 = sbr.rel (%p332) target = $region64
        $region63: #{tpu_custom_call.1} parent=47 // pred_region
          %336 = dma.done [#allocation11], 1024
        $region64: #{tpu_custom_call.1} parent=47 // pred_fallthru
          _
        %s337 = sand.u32 %s46, 1
        %s338 = scalar_lea.sflag [#allocation5], %s337
        %s339 = sand.u32 %s46, 1
        %s340 = smul.addr %s339, 128
        %s341 = scalar_lea.vmem [#allocation4], %s340
        %p342 = pneg %p59
        %p343 = pneg %p56
        %p344 = pneg %p80
        %p345 = pneg %p77
        %p346 = pneg %p101
        %p347 = pneg %p98
        %p348 = pneg %p122
        %p349 = pneg %p119
        %p350 = pneg %p143
        %p351 = pneg %p140
        %p352 = pneg %p164
        %p353 = pneg %p161
        %p354 = pneg %p185
        %p355 = pneg %p182
        %p356 = pneg %p213
        %p357 = pneg %p210
        %s358 = sand.u32 %s200, 1
        %s359 = scalar_lea.sflag [#allocation6], %s358
        %s360 = sand.u32 %s200, 1
        %s361 = smul.addr %s360, 128
        %s362 = scalar_lea.vmem [#allocation12], %s361
        %s363 = smul.u32 16, %s31
        %p364 = scmp.eq.s32.totalorder %s31, 0
        // Predicated region
        $region65: #{tpu_custom_call.1} parent=47 // pred_check
          %p365 = pneg %p364
        $region66: #{tpu_custom_call.1} parent=47 // pred_check_branch
          %367 = sbr.rel (%p365) target = $region68
        $region67: #{tpu_custom_call.1} parent=47 // pred_region
          %v368 = vld [vmem:[%s316] sm:$0xf]
          %v369 = vld [vmem:[%s316 + $0x4] sm:$0xf]
          %v370 = vld [vmem:[%s316 + $0x8] sm:$0xf]
          %v371 = vld [vmem:[%s316 + $0xc] sm:$0xf]
          %v372 = vld [vmem:[%s316 + $0x10] sm:$0xf]
          %v373 = vld [vmem:[%s316 + $0x14] sm:$0xf]
          %v374 = vld [vmem:[%s316 + $0x18] sm:$0xf]
          %v375 = vld [vmem:[%s316 + $0x1c] sm:$0xf]
          %v376 = vld [vmem:[%s316 + $0x20] sm:$0xf]
          %v377 = vld [vmem:[%s316 + $0x24] sm:$0xf]
          %v378 = vld [vmem:[%s316 + $0x28] sm:$0xf]
          %v379 = vld [vmem:[%s316 + $0x2c] sm:$0xf]
          %v380 = vld [vmem:[%s316 + $0x30] sm:$0xf]
          %v381 = vld [vmem:[%s316 + $0x34] sm:$0xf]
          %v382 = vld [vmem:[%s316 + $0x38] sm:$0xf]
          %v383 = vld [vmem:[%s316 + $0x3c] sm:$0xf]
          %v384 = vld [vmem:[%s316 + $0x40] sm:$0xf]
          %v385 = vld [vmem:[%s316 + $0x44] sm:$0xf]
          %v386 = vld [vmem:[%s316 + $0x48] sm:$0xf]
          %v387 = vld [vmem:[%s316 + $0x4c] sm:$0xf]
          %v388 = vld [vmem:[%s316 + $0x50] sm:$0xf]
          %v389 = vld [vmem:[%s316 + $0x54] sm:$0xf]
          %v390 = vld [vmem:[%s316 + $0x58] sm:$0xf]
          %v391 = vld [vmem:[%s316 + $0x5c] sm:$0xf]
          %v392 = vld [vmem:[%s316 + $0x60] sm:$0xf]
          %v393 = vld [vmem:[%s316 + $0x64] sm:$0xf]
          %v394 = vld [vmem:[%s316 + $0x68] sm:$0xf]
          %v395 = vld [vmem:[%s316 + $0x6c] sm:$0xf]
          %v396 = vld [vmem:[%s316 + $0x70] sm:$0xf]
          %v397 = vld [vmem:[%s316 + $0x74] sm:$0xf]
          %v398 = vld [vmem:[%s316 + $0x78] sm:$0xf]
          %v399 = vld [vmem:[%s316 + $0x7c] sm:$0xf]
          %v400 = vld [vmem:[#allocation9] sm:$0xf]
          %v401 = vld [vmem:[#allocation9 + $0x4] sm:$0xf]
          %v402 = vld [vmem:[#allocation9 + $0x8] sm:$0xf]
          %v403 = vld [vmem:[#allocation9 + $0xc] sm:$0xf]
          %v404 = vld [vmem:[#allocation9 + $0x10] sm:$0xf]
          %v405 = vld [vmem:[#allocation9 + $0x14] sm:$0xf]
          %v406 = vld [vmem:[#allocation9 + $0x18] sm:$0xf]
          %v407 = vld [vmem:[#allocation9 + $0x1c] sm:$0xf]
          %v408 = vld [vmem:[#allocation9 + $0x20] sm:$0xf]
          %v409 = vld [vmem:[#allocation9 + $0x24] sm:$0xf]
          %v410 = vld [vmem:[#allocation9 + $0x28] sm:$0xf]
          %v411 = vld [vmem:[#allocation9 + $0x2c] sm:$0xf]
          %v412 = vld [vmem:[#allocation9 + $0x30] sm:$0xf]
          %v413 = vld [vmem:[#allocation9 + $0x34] sm:$0xf]
          %v414 = vld [vmem:[#allocation9 + $0x38] sm:$0xf]
          %v415 = vld [vmem:[#allocation9 + $0x3c] sm:$0xf]
          %v416 = vld [vmem:[%s4] sm:$0x1]
          %v418 = vperm.slane %v416, 0
          %v452 = vunpack.c.l.b16 %v368
          %v453 = vunpack.c.l.b16 %v369
          %v454 = vunpack.c.l.b16 %v370
          %v455 = vunpack.c.l.b16 %v371
          %v456 = vunpack.c.l.b16 %v372
          %v457 = vunpack.c.l.b16 %v373
          %v458 = vunpack.c.l.b16 %v374
          %v459 = vunpack.c.l.b16 %v375
          %v460 = vunpack.c.l.b16 %v376
          %v461 = vunpack.c.l.b16 %v377
          %v462 = vunpack.c.l.b16 %v378
          %v463 = vunpack.c.l.b16 %v379
          %v464 = vunpack.c.l.b16 %v380
          %v465 = vunpack.c.l.b16 %v381
          %v466 = vunpack.c.l.b16 %v382
          %v467 = vunpack.c.l.b16 %v383
          %v468 = vunpack.c.l.b16 %v384
          %v469 = vunpack.c.l.b16 %v385
          %v470 = vunpack.c.l.b16 %v386
          %v471 = vunpack.c.l.b16 %v387
          %v472 = vunpack.c.l.b16 %v388
          %v473 = vunpack.c.l.b16 %v389
          %v474 = vunpack.c.l.b16 %v390
          %v475 = vunpack.c.l.b16 %v391
          %v476 = vunpack.c.l.b16 %v392
          %v477 = vunpack.c.l.b16 %v393
          %v478 = vunpack.c.l.b16 %v394
          %v479 = vunpack.c.l.b16 %v395
          %v480 = vunpack.c.l.b16 %v396
          %v481 = vunpack.c.l.b16 %v397
          %v482 = vunpack.c.l.b16 %v398
          %v483 = vunpack.c.l.b16 %v399
          %v484 = vpack.c.b16 %v453, %v452
          %v485 = vpack.c.b16 %v455, %v454
          %v486 = vpack.c.b16 %v457, %v456
          %v487 = vpack.c.b16 %v459, %v458
          %v488 = vpack.c.b16 %v461, %v460
          %v489 = vpack.c.b16 %v463, %v462
          %v490 = vpack.c.b16 %v465, %v464
          %v491 = vpack.c.b16 %v467, %v466
          %v492 = vpack.c.b16 %v469, %v468
          %v493 = vpack.c.b16 %v471, %v470
          %v494 = vpack.c.b16 %v473, %v472
          %v495 = vpack.c.b16 %v475, %v474
          %v496 = vpack.c.b16 %v477, %v476
          %v497 = vpack.c.b16 %v479, %v478
          %v498 = vpack.c.b16 %v481, %v480
          %v499 = vpack.c.b16 %v483, %v482
          %v532 = vunpack.c.l.b16 %v400
          %v533 = vunpack.c.l.b16 %v401
          %v534 = vunpack.c.l.b16 %v402
          %v535 = vunpack.c.l.b16 %v403
          %v536 = vunpack.c.l.b16 %v404
          %v537 = vunpack.c.l.b16 %v405
          %v538 = vunpack.c.l.b16 %v406
          %v539 = vunpack.c.l.b16 %v407
          %v540 = vunpack.c.l.b16 %v408
          %v541 = vunpack.c.l.b16 %v409
          %v542 = vunpack.c.l.b16 %v410
          %v543 = vunpack.c.l.b16 %v411
          %v544 = vunpack.c.l.b16 %v412
          %v545 = vunpack.c.l.b16 %v413
          %v546 = vunpack.c.l.b16 %v414
          %v547 = vunpack.c.l.b16 %v415
          %v548 = vpack.c.b16 %v533, %v532
          %v549 = vpack.c.b16 %v535, %v534
          %v550 = vpack.c.b16 %v537, %v536
          %v551 = vpack.c.b16 %v539, %v538
          %v552 = vpack.c.b16 %v541, %v540
          %v553 = vpack.c.b16 %v543, %v542
          %v554 = vpack.c.b16 %v545, %v544
          %v555 = vpack.c.b16 %v547, %v546
          %564 = vmatpush.bf16.msra.mxu0 %v555
          %565 = vmatpush.bf16.msra.mxu0 %v554
          %566 = vmatpush.bf16.msra.mxu0 %v553
          %567 = vmatpush.bf16.msra.mxu0 %v552
          %568 = vmatpush.bf16.msra.mxu0 %v551
          %569 = vmatpush.bf16.msra.mxu0 %v550
          %570 = vmatpush.bf16.msra.mxu0 %v549
          %571 = vmatpush.bf16.msra.mxu0 %v548
          %572 = vmatmul.bf16.gmra.mxu0 %v484
          %v573 = vpop.f32.mrf.mxu0
          %v574 = vadd.f32 %v418, %v573
          %v575 = vpop.f32.mrf.mxu0
          %v576 = vadd.f32 %v418, %v575
          %577 = vmatmul.bf16.gmra.mxu0 %v485
          %v578 = vpop.f32.mrf.mxu0
          %v579 = vadd.f32 %v418, %v578
          %v580 = vpop.f32.mrf.mxu0
          %v581 = vadd.f32 %v418, %v580
          %582 = vmatmul.bf16.gmra.mxu0 %v486
          %v583 = vpop.f32.mrf.mxu0
          %v584 = vadd.f32 %v418, %v583
          %v585 = vpop.f32.mrf.mxu0
          %v586 = vadd.f32 %v418, %v585
          %587 = vmatmul.bf16.gmra.mxu0 %v487
          %v588 = vpop.f32.mrf.mxu0
          %v589 = vadd.f32 %v418, %v588
          %v590 = vpop.f32.mrf.mxu0
          %v591 = vadd.f32 %v418, %v590
          %592 = vmatmul.bf16.gmra.mxu0 %v488
          %v593 = vpop.f32.mrf.mxu0
          %v594 = vadd.f32 %v418, %v593
          %v595 = vpop.f32.mrf.mxu0
          %v596 = vadd.f32 %v418, %v595
          %597 = vmatmul.bf16.gmra.mxu0 %v489
          %v598 = vpop.f32.mrf.mxu0
          %v599 = vadd.f32 %v418, %v598
          %v600 = vpop.f32.mrf.mxu0
          %v601 = vadd.f32 %v418, %v600
          %602 = vmatmul.bf16.gmra.mxu0 %v490
          %v603 = vpop.f32.mrf.mxu0
          %v604 = vadd.f32 %v418, %v603
          %v605 = vpop.f32.mrf.mxu0
          %v606 = vadd.f32 %v418, %v605
          %607 = vmatmul.bf16.gmra.mxu0 %v491
          %v608 = vpop.f32.mrf.mxu0
          %v609 = vadd.f32 %v418, %v608
          %v610 = vpop.f32.mrf.mxu0
          %v611 = vadd.f32 %v418, %v610
          %612 = vmatmul.bf16.gmra.mxu0 %v492
          %v613 = vpop.f32.mrf.mxu0
          %v614 = vadd.f32 %v418, %v613
          %v615 = vpop.f32.mrf.mxu0
          %v616 = vadd.f32 %v418, %v615
          %617 = vmatmul.bf16.gmra.mxu0 %v493
          %v618 = vpop.f32.mrf.mxu0
          %v619 = vadd.f32 %v418, %v618
          %v620 = vpop.f32.mrf.mxu0
          %v621 = vadd.f32 %v418, %v620
          %622 = vmatmul.bf16.gmra.mxu0 %v494
          %v623 = vpop.f32.mrf.mxu0
          %v624 = vadd.f32 %v418, %v623
          %v625 = vpop.f32.mrf.mxu0
          %v626 = vadd.f32 %v418, %v625
          %627 = vmatmul.bf16.gmra.mxu0 %v495
          %v628 = vpop.f32.mrf.mxu0
          %v629 = vadd.f32 %v418, %v628
          %v630 = vpop.f32.mrf.mxu0
          %v631 = vadd.f32 %v418, %v630
          %632 = vmatmul.bf16.gmra.mxu0 %v496
          %v633 = vpop.f32.mrf.mxu0
          %v634 = vadd.f32 %v418, %v633
          %v635 = vpop.f32.mrf.mxu0
          %v636 = vadd.f32 %v418, %v635
          %637 = vmatmul.bf16.gmra.mxu0 %v497
          %v638 = vpop.f32.mrf.mxu0
          %v639 = vadd.f32 %v418, %v638
          %v640 = vpop.f32.mrf.mxu0
          %v641 = vadd.f32 %v418, %v640
          %642 = vmatmul.bf16.gmra.mxu0 %v498
          %v643 = vpop.f32.mrf.mxu0
          %v644 = vadd.f32 %v418, %v643
          %v645 = vpop.f32.mrf.mxu0
          %v646 = vadd.f32 %v418, %v645
          %647 = vmatmul.bf16.gmra.mxu0 %v499
          %v648 = vpop.f32.mrf.mxu0
          %v649 = vadd.f32 %v418, %v648
          %v650 = vpop.f32.mrf.mxu0
          %v651 = vadd.f32 %v418, %v650
          %652 = vdwg.mxu0
          %v653 = vpack.c.bf16 %v574, %v574
          %v654 = vpack.c.bf16 %v576, %v576
          %v655 = vpack.c.bf16 %v579, %v579
          %v656 = vpack.c.bf16 %v581, %v581
          %v657 = vpack.c.bf16 %v584, %v584
          %v658 = vpack.c.bf16 %v586, %v586
          %v659 = vpack.c.bf16 %v589, %v589
          %v660 = vpack.c.bf16 %v591, %v591
          %v661 = vpack.c.bf16 %v594, %v594
          %v662 = vpack.c.bf16 %v596, %v596
          %v663 = vpack.c.bf16 %v599, %v599
          %v664 = vpack.c.bf16 %v601, %v601
          %v665 = vpack.c.bf16 %v604, %v604
          %v666 = vpack.c.bf16 %v606, %v606
          %v667 = vpack.c.bf16 %v609, %v609
          %v668 = vpack.c.bf16 %v611, %v611
          %v669 = vpack.c.bf16 %v614, %v614
          %v670 = vpack.c.bf16 %v616, %v616
          %v671 = vpack.c.bf16 %v619, %v619
          %v672 = vpack.c.bf16 %v621, %v621
          %v673 = vpack.c.bf16 %v624, %v624
          %v674 = vpack.c.bf16 %v626, %v626
          %v675 = vpack.c.bf16 %v629, %v629
          %v676 = vpack.c.bf16 %v631, %v631
          %v677 = vpack.c.bf16 %v634, %v634
          %v678 = vpack.c.bf16 %v636, %v636
          %v679 = vpack.c.bf16 %v639, %v639
          %v680 = vpack.c.bf16 %v641, %v641
          %v681 = vpack.c.bf16 %v644, %v644
          %v682 = vpack.c.bf16 %v646, %v646
          %v683 = vpack.c.bf16 %v649, %v649
          %v684 = vpack.c.bf16 %v651, %v651
          %vm685 = vcmask 257024
          %686 = vst.msk [vmem:[#allocation2] sm:$0xf] %vm685, %v653
          %687 = vst.msk [vmem:[#allocation2 + $0x4] sm:$0xf] %vm685, %v654
          %688 = vst.msk [vmem:[#allocation2 + $0x8] sm:$0xf] %vm685, %v655
          %689 = vst.msk [vmem:[#allocation2 + $0xc] sm:$0xf] %vm685, %v656
          %690 = vst.msk [vmem:[#allocation2 + $0x10] sm:$0xf] %vm685, %v657
          %691 = vst.msk [vmem:[#allocation2 + $0x14] sm:$0xf] %vm685, %v658
          %692 = vst.msk [vmem:[#allocation2 + $0x18] sm:$0xf] %vm685, %v659
          %693 = vst.msk [vmem:[#allocation2 + $0x1c] sm:$0xf] %vm685, %v660
          %694 = vst.msk [vmem:[#allocation2 + $0x20] sm:$0xf] %vm685, %v661
          %695 = vst.msk [vmem:[#allocation2 + $0x24] sm:$0xf] %vm685, %v662
          %696 = vst.msk [vmem:[#allocation2 + $0x28] sm:$0xf] %vm685, %v663
          %697 = vst.msk [vmem:[#allocation2 + $0x2c] sm:$0xf] %vm685, %v664
          %698 = vst.msk [vmem:[#allocation2 + $0x30] sm:$0xf] %vm685, %v665
          %699 = vst.msk [vmem:[#allocation2 + $0x34] sm:$0xf] %vm685, %v666
          %700 = vst.msk [vmem:[#allocation2 + $0x38] sm:$0xf] %vm685, %v667
          %701 = vst.msk [vmem:[#allocation2 + $0x3c] sm:$0xf] %vm685, %v668
          %702 = vst.msk [vmem:[#allocation2 + $0x40] sm:$0xf] %vm685, %v669
          %703 = vst.msk [vmem:[#allocation2 + $0x44] sm:$0xf] %vm685, %v670
          %704 = vst.msk [vmem:[#allocation2 + $0x48] sm:$0xf] %vm685, %v671
          %705 = vst.msk [vmem:[#allocation2 + $0x4c] sm:$0xf] %vm685, %v672
          %706 = vst.msk [vmem:[#allocation2 + $0x50] sm:$0xf] %vm685, %v673
          %707 = vst.msk [vmem:[#allocation2 + $0x54] sm:$0xf] %vm685, %v674
          %708 = vst.msk [vmem:[#allocation2 + $0x58] sm:$0xf] %vm685, %v675
          %709 = vst.msk [vmem:[#allocation2 + $0x5c] sm:$0xf] %vm685, %v676
          %710 = vst.msk [vmem:[#allocation2 + $0x60] sm:$0xf] %vm685, %v677
          %711 = vst.msk [vmem:[#allocation2 + $0x64] sm:$0xf] %vm685, %v678
          %712 = vst.msk [vmem:[#allocation2 + $0x68] sm:$0xf] %vm685, %v679
          %713 = vst.msk [vmem:[#allocation2 + $0x6c] sm:$0xf] %vm685, %v680
          %714 = vst.msk [vmem:[#allocation2 + $0x70] sm:$0xf] %vm685, %v681
          %715 = vst.msk [vmem:[#allocation2 + $0x74] sm:$0xf] %vm685, %v682
          %716 = vst.msk [vmem:[#allocation2 + $0x78] sm:$0xf] %vm685, %v683
          %717 = vst.msk [vmem:[#allocation2 + $0x7c] sm:$0xf] %vm685, %v684
          %750 = vrot.lane.b32.xlu0 %v653, 64
          %v751 = vpop.permute.xlu0 %750
          %752 = vrot.lane.b32.xlu0 %v654, 64
          %v753 = vpop.permute.xlu0 %752
          %754 = vrot.lane.b32.xlu0 %v655, 64
          %v755 = vpop.permute.xlu0 %754
          %756 = vrot.lane.b32.xlu0 %v656, 64
          %v757 = vpop.permute.xlu0 %756
          %758 = vrot.lane.b32.xlu0 %v657, 64
          %v759 = vpop.permute.xlu0 %758
          %760 = vrot.lane.b32.xlu0 %v658, 64
          %v761 = vpop.permute.xlu0 %760
          %762 = vrot.lane.b32.xlu0 %v659, 64
          %v763 = vpop.permute.xlu0 %762
          %764 = vrot.lane.b32.xlu0 %v660, 64
          %v765 = vpop.permute.xlu0 %764
          %766 = vrot.lane.b32.xlu0 %v661, 64
          %v767 = vpop.permute.xlu0 %766
          %768 = vrot.lane.b32.xlu0 %v662, 64
          %v769 = vpop.permute.xlu0 %768
          %770 = vrot.lane.b32.xlu0 %v663, 64
          %v771 = vpop.permute.xlu0 %770
          %772 = vrot.lane.b32.xlu0 %v664, 64
          %v773 = vpop.permute.xlu0 %772
          %774 = vrot.lane.b32.xlu0 %v665, 64
          %v775 = vpop.permute.xlu0 %774
          %776 = vrot.lane.b32.xlu0 %v666, 64
          %v777 = vpop.permute.xlu0 %776
          %778 = vrot.lane.b32.xlu0 %v667, 64
          %v779 = vpop.permute.xlu0 %778
          %780 = vrot.lane.b32.xlu0 %v668, 64
          %v781 = vpop.permute.xlu0 %780
          %782 = vrot.lane.b32.xlu0 %v669, 64
          %v783 = vpop.permute.xlu0 %782
          %784 = vrot.lane.b32.xlu0 %v670, 64
          %v785 = vpop.permute.xlu0 %784
          %786 = vrot.lane.b32.xlu0 %v671, 64
          %v787 = vpop.permute.xlu0 %786
          %788 = vrot.lane.b32.xlu0 %v672, 64
          %v789 = vpop.permute.xlu0 %788
          %790 = vrot.lane.b32.xlu0 %v673, 64
          %v791 = vpop.permute.xlu0 %790
          %792 = vrot.lane.b32.xlu0 %v674, 64
          %v793 = vpop.permute.xlu0 %792
          %794 = vrot.lane.b32.xlu0 %v675, 64
          %v795 = vpop.permute.xlu0 %794
          %796 = vrot.lane.b32.xlu0 %v676, 64
          %v797 = vpop.permute.xlu0 %796
          %798 = vrot.lane.b32.xlu0 %v677, 64
          %v799 = vpop.permute.xlu0 %798
          %800 = vrot.lane.b32.xlu0 %v678, 64
          %v801 = vpop.permute.xlu0 %800
          %802 = vrot.lane.b32.xlu0 %v679, 64
          %v803 = vpop.permute.xlu0 %802
          %804 = vrot.lane.b32.xlu0 %v680, 64
          %v805 = vpop.permute.xlu0 %804
          %806 = vrot.lane.b32.xlu0 %v681, 64
          %v807 = vpop.permute.xlu0 %806
          %808 = vrot.lane.b32.xlu0 %v682, 64
          %v809 = vpop.permute.xlu0 %808
          %810 = vrot.lane.b32.xlu0 %v683, 64
          %v811 = vpop.permute.xlu0 %810
          %812 = vrot.lane.b32.xlu0 %v684, 64
          %v813 = vpop.permute.xlu0 %812
          %846 = vst.msk [vmem:[#allocation3] sm:$0xf] %vm685, %v751
          %847 = vst.msk [vmem:[#allocation3 + $0x4] sm:$0xf] %vm685, %v753
          %848 = vst.msk [vmem:[#allocation3 + $0x8] sm:$0xf] %vm685, %v755
          %849 = vst.msk [vmem:[#allocation3 + $0xc] sm:$0xf] %vm685, %v757
          %850 = vst.msk [vmem:[#allocation3 + $0x10] sm:$0xf] %vm685, %v759
          %851 = vst.msk [vmem:[#allocation3 + $0x14] sm:$0xf] %vm685, %v761
          %852 = vst.msk [vmem:[#allocation3 + $0x18] sm:$0xf] %vm685, %v763
          %853 = vst.msk [vmem:[#allocation3 + $0x1c] sm:$0xf] %vm685, %v765
          %854 = vst.msk [vmem:[#allocation3 + $0x20] sm:$0xf] %vm685, %v767
          %855 = vst.msk [vmem:[#allocation3 + $0x24] sm:$0xf] %vm685, %v769
          %856 = vst.msk [vmem:[#allocation3 + $0x28] sm:$0xf] %vm685, %v771
          %857 = vst.msk [vmem:[#allocation3 + $0x2c] sm:$0xf] %vm685, %v773
          %858 = vst.msk [vmem:[#allocation3 + $0x30] sm:$0xf] %vm685, %v775
          %859 = vst.msk [vmem:[#allocation3 + $0x34] sm:$0xf] %vm685, %v777
          %860 = vst.msk [vmem:[#allocation3 + $0x38] sm:$0xf] %vm685, %v779
          %861 = vst.msk [vmem:[#allocation3 + $0x3c] sm:$0xf] %vm685, %v781
          %862 = vst.msk [vmem:[#allocation3 + $0x40] sm:$0xf] %vm685, %v783
          %863 = vst.msk [vmem:[#allocation3 + $0x44] sm:$0xf] %vm685, %v785
          %864 = vst.msk [vmem:[#allocation3 + $0x48] sm:$0xf] %vm685, %v787
          %865 = vst.msk [vmem:[#allocation3 + $0x4c] sm:$0xf] %vm685, %v789
          %866 = vst.msk [vmem:[#allocation3 + $0x50] sm:$0xf] %vm685, %v791
          %867 = vst.msk [vmem:[#allocation3 + $0x54] sm:$0xf] %vm685, %v793
          %868 = vst.msk [vmem:[#allocation3 + $0x58] sm:$0xf] %vm685, %v795
          %869 = vst.msk [vmem:[#allocation3 + $0x5c] sm:$0xf] %vm685, %v797
          %870 = vst.msk [vmem:[#allocation3 + $0x60] sm:$0xf] %vm685, %v799
          %871 = vst.msk [vmem:[#allocation3 + $0x64] sm:$0xf] %vm685, %v801
          %872 = vst.msk [vmem:[#allocation3 + $0x68] sm:$0xf] %vm685, %v803
          %873 = vst.msk [vmem:[#allocation3 + $0x6c] sm:$0xf] %vm685, %v805
          %874 = vst.msk [vmem:[#allocation3 + $0x70] sm:$0xf] %vm685, %v807
          %875 = vst.msk [vmem:[#allocation3 + $0x74] sm:$0xf] %vm685, %v809
          %876 = vst.msk [vmem:[#allocation3 + $0x78] sm:$0xf] %vm685, %v811
          %877 = vst.msk [vmem:[#allocation3 + $0x7c] sm:$0xf] %vm685, %v813
          %878 = vrot.lane.b32.xlu0 %v653, 96
          %v879 = vpop.permute.xlu0 %878
          %880 = vrot.lane.b32.xlu0 %v654, 96
          %v881 = vpop.permute.xlu0 %880
          %882 = vrot.lane.b32.xlu0 %v655, 96
          %v883 = vpop.permute.xlu0 %882
          %884 = vrot.lane.b32.xlu0 %v656, 96
          %v885 = vpop.permute.xlu0 %884
          %886 = vrot.lane.b32.xlu0 %v657, 96
          %v887 = vpop.permute.xlu0 %886
          %888 = vrot.lane.b32.xlu0 %v658, 96
          %v889 = vpop.permute.xlu0 %888
          %890 = vrot.lane.b32.xlu0 %v659, 96
          %v891 = vpop.permute.xlu0 %890
          %892 = vrot.lane.b32.xlu0 %v660, 96
          %v893 = vpop.permute.xlu0 %892
          %894 = vrot.lane.b32.xlu0 %v661, 96
          %v895 = vpop.permute.xlu0 %894
          %896 = vrot.lane.b32.xlu0 %v662, 96
          %v897 = vpop.permute.xlu0 %896
          %898 = vrot.lane.b32.xlu0 %v663, 96
          %v899 = vpop.permute.xlu0 %898
          %900 = vrot.lane.b32.xlu0 %v664, 96
          %v901 = vpop.permute.xlu0 %900
          %902 = vrot.lane.b32.xlu0 %v665, 96
          %v903 = vpop.permute.xlu0 %902
          %904 = vrot.lane.b32.xlu0 %v666, 96
          %v905 = vpop.permute.xlu0 %904
          %906 = vrot.lane.b32.xlu0 %v667, 96
          %v907 = vpop.permute.xlu0 %906
          %908 = vrot.lane.b32.xlu0 %v668, 96
          %v909 = vpop.permute.xlu0 %908
          %910 = vrot.lane.b32.xlu0 %v669, 96
          %v911 = vpop.permute.xlu0 %910
          %912 = vrot.lane.b32.xlu0 %v670, 96
          %v913 = vpop.permute.xlu0 %912
          %914 = vrot.lane.b32.xlu0 %v671, 96
          %v915 = vpop.permute.xlu0 %914
          %916 = vrot.lane.b32.xlu0 %v672, 96
          %v917 = vpop.permute.xlu0 %916
          %918 = vrot.lane.b32.xlu0 %v673, 96
          %v919 = vpop.permute.xlu0 %918
          %920 = vrot.lane.b32.xlu0 %v674, 96
          %v921 = vpop.permute.xlu0 %920
          %922 = vrot.lane.b32.xlu0 %v675, 96
          %v923 = vpop.permute.xlu0 %922
          %924 = vrot.lane.b32.xlu0 %v676, 96
          %v925 = vpop.permute.xlu0 %924
          %926 = vrot.lane.b32.xlu0 %v677, 96
          %v927 = vpop.permute.xlu0 %926
          %928 = vrot.lane.b32.xlu0 %v678, 96
          %v929 = vpop.permute.xlu0 %928
          %930 = vrot.lane.b32.xlu0 %v679, 96
          %v931 = vpop.permute.xlu0 %930
          %932 = vrot.lane.b32.xlu0 %v680, 96
          %v933 = vpop.permute.xlu0 %932
          %934 = vrot.lane.b32.xlu0 %v681, 96
          %v935 = vpop.permute.xlu0 %934
          %936 = vrot.lane.b32.xlu0 %v682, 96
          %v937 = vpop.permute.xlu0 %936
          %938 = vrot.lane.b32.xlu0 %v683, 96
          %v939 = vpop.permute.xlu0 %938
          %940 = vrot.lane.b32.xlu0 %v684, 96
          %v941 = vpop.permute.xlu0 %940
          %s974 = scalar_lea.vmem [#allocation2], 128
          %975 = vst.msk [vmem:[%s974] sm:$0xf] %vm685, %v879
          %976 = vst.msk [vmem:[%s974 + $0x4] sm:$0xf] %vm685, %v881
          %977 = vst.msk [vmem:[%s974 + $0x8] sm:$0xf] %vm685, %v883
          %978 = vst.msk [vmem:[%s974 + $0xc] sm:$0xf] %vm685, %v885
          %979 = vst.msk [vmem:[%s974 + $0x10] sm:$0xf] %vm685, %v887
          %980 = vst.msk [vmem:[%s974 + $0x14] sm:$0xf] %vm685, %v889
          %981 = vst.msk [vmem:[%s974 + $0x18] sm:$0xf] %vm685, %v891
          %982 = vst.msk [vmem:[%s974 + $0x1c] sm:$0xf] %vm685, %v893
          %983 = vst.msk [vmem:[%s974 + $0x20] sm:$0xf] %vm685, %v895
          %984 = vst.msk [vmem:[%s974 + $0x24] sm:$0xf] %vm685, %v897
          %985 = vst.msk [vmem:[%s974 + $0x28] sm:$0xf] %vm685, %v899
          %986 = vst.msk [vmem:[%s974 + $0x2c] sm:$0xf] %vm685, %v901
          %987 = vst.msk [vmem:[%s974 + $0x30] sm:$0xf] %vm685, %v903
          %988 = vst.msk [vmem:[%s974 + $0x34] sm:$0xf] %vm685, %v905
          %989 = vst.msk [vmem:[%s974 + $0x38] sm:$0xf] %vm685, %v907
          %990 = vst.msk [vmem:[%s974 + $0x3c] sm:$0xf] %vm685, %v909
          %991 = vst.msk [vmem:[%s974 + $0x40] sm:$0xf] %vm685, %v911
          %992 = vst.msk [vmem:[%s974 + $0x44] sm:$0xf] %vm685, %v913
          %993 = vst.msk [vmem:[%s974 + $0x48] sm:$0xf] %vm685, %v915
          %994 = vst.msk [vmem:[%s974 + $0x4c] sm:$0xf] %vm685, %v917
          %995 = vst.msk [vmem:[%s974 + $0x50] sm:$0xf] %vm685, %v919
          %996 = vst.msk [vmem:[%s974 + $0x54] sm:$0xf] %vm685, %v921
          %997 = vst.msk [vmem:[%s974 + $0x58] sm:$0xf] %vm685, %v923
          %998 = vst.msk [vmem:[%s974 + $0x5c] sm:$0xf] %vm685, %v925
          %999 = vst.msk [vmem:[%s974 + $0x60] sm:$0xf] %vm685, %v927
          %1000 = vst.msk [vmem:[%s974 + $0x64] sm:$0xf] %vm685, %v929
          %1001 = vst.msk [vmem:[%s974 + $0x68] sm:$0xf] %vm685, %v931
          %1002 = vst.msk [vmem:[%s974 + $0x6c] sm:$0xf] %vm685, %v933
          %1003 = vst.msk [vmem:[%s974 + $0x70] sm:$0xf] %vm685, %v935
          %1004 = vst.msk [vmem:[%s974 + $0x74] sm:$0xf] %vm685, %v937
          %1005 = vst.msk [vmem:[%s974 + $0x78] sm:$0xf] %vm685, %v939
          %1006 = vst.msk [vmem:[%s974 + $0x7c] sm:$0xf] %vm685, %v941
          %1007 = vrot.lane.b32.xlu0 %v653, 32
          %v1008 = vpop.permute.xlu0 %1007
          %1009 = vrot.lane.b32.xlu0 %v654, 32
          %v1010 = vpop.permute.xlu0 %1009
          %1011 = vrot.lane.b32.xlu0 %v655, 32
          %v1012 = vpop.permute.xlu0 %1011
          %1013 = vrot.lane.b32.xlu0 %v656, 32
          %v1014 = vpop.permute.xlu0 %1013
          %1015 = vrot.lane.b32.xlu0 %v657, 32
          %v1016 = vpop.permute.xlu0 %1015
          %1017 = vrot.lane.b32.xlu0 %v658, 32
          %v1018 = vpop.permute.xlu0 %1017
          %1019 = vrot.lane.b32.xlu0 %v659, 32
          %v1020 = vpop.permute.xlu0 %1019
          %1021 = vrot.lane.b32.xlu0 %v660, 32
          %v1022 = vpop.permute.xlu0 %1021
          %1023 = vrot.lane.b32.xlu0 %v661, 32
          %v1024 = vpop.permute.xlu0 %1023
          %1025 = vrot.lane.b32.xlu0 %v662, 32
          %v1026 = vpop.permute.xlu0 %1025
          %1027 = vrot.lane.b32.xlu0 %v663, 32
          %v1028 = vpop.permute.xlu0 %1027
          %1029 = vrot.lane.b32.xlu0 %v664, 32
          %v1030 = vpop.permute.xlu0 %1029
          %1031 = vrot.lane.b32.xlu0 %v665, 32
          %v1032 = vpop.permute.xlu0 %1031
          %1033 = vrot.lane.b32.xlu0 %v666, 32
          %v1034 = vpop.permute.xlu0 %1033
          %1035 = vrot.lane.b32.xlu0 %v667, 32
          %v1036 = vpop.permute.xlu0 %1035
          %1037 = vrot.lane.b32.xlu0 %v668, 32
          %v1038 = vpop.permute.xlu0 %1037
          %1039 = vrot.lane.b32.xlu0 %v669, 32
          %v1040 = vpop.permute.xlu0 %1039
          %1041 = vrot.lane.b32.xlu0 %v670, 32
          %v1042 = vpop.permute.xlu0 %1041
          %1043 = vrot.lane.b32.xlu0 %v671, 32
          %v1044 = vpop.permute.xlu0 %1043
          %1045 = vrot.lane.b32.xlu0 %v672, 32
          %v1046 = vpop.permute.xlu0 %1045
          %1047 = vrot.lane.b32.xlu0 %v673, 32
          %v1048 = vpop.permute.xlu0 %1047
          %1049 = vrot.lane.b32.xlu0 %v674, 32
          %v1050 = vpop.permute.xlu0 %1049
          %1051 = vrot.lane.b32.xlu0 %v675, 32
          %v1052 = vpop.permute.xlu0 %1051
          %1053 = vrot.lane.b32.xlu0 %v676, 32
          %v1054 = vpop.permute.xlu0 %1053
          %1055 = vrot.lane.b32.xlu0 %v677, 32
          %v1056 = vpop.permute.xlu0 %1055
          %1057 = vrot.lane.b32.xlu0 %v678, 32
          %v1058 = vpop.permute.xlu0 %1057
          %1059 = vrot.lane.b32.xlu0 %v679, 32
          %v1060 = vpop.permute.xlu0 %1059
          %1061 = vrot.lane.b32.xlu0 %v680, 32
          %v1062 = vpop.permute.xlu0 %1061
          %1063 = vrot.lane.b32.xlu0 %v681, 32
          %v1064 = vpop.permute.xlu0 %1063
          %1065 = vrot.lane.b32.xlu0 %v682, 32
          %v1066 = vpop.permute.xlu0 %1065
          %1067 = vrot.lane.b32.xlu0 %v683, 32
          %v1068 = vpop.permute.xlu0 %1067
          %1069 = vrot.lane.b32.xlu0 %v684, 32
          %v1070 = vpop.permute.xlu0 %1069
          %s1103 = scalar_lea.vmem [#allocation3], 128
          %1104 = vst.msk [vmem:[%s1103] sm:$0xf] %vm685, %v1008
          %1105 = vst.msk [vmem:[%s1103 + $0x4] sm:$0xf] %vm685, %v1010
          %1106 = vst.msk [vmem:[%s1103 + $0x8] sm:$0xf] %vm685, %v1012
          %1107 = vst.msk [vmem:[%s1103 + $0xc] sm:$0xf] %vm685, %v1014
          %1108 = vst.msk [vmem:[%s1103 + $0x10] sm:$0xf] %vm685, %v1016
          %1109 = vst.msk [vmem:[%s1103 + $0x14] sm:$0xf] %vm685, %v1018
          %1110 = vst.msk [vmem:[%s1103 + $0x18] sm:$0xf] %vm685, %v1020
          %1111 = vst.msk [vmem:[%s1103 + $0x1c] sm:$0xf] %vm685, %v1022
          %1112 = vst.msk [vmem:[%s1103 + $0x20] sm:$0xf] %vm685, %v1024
          %1113 = vst.msk [vmem:[%s1103 + $0x24] sm:$0xf] %vm685, %v1026
          %1114 = vst.msk [vmem:[%s1103 + $0x28] sm:$0xf] %vm685, %v1028
          %1115 = vst.msk [vmem:[%s1103 + $0x2c] sm:$0xf] %vm685, %v1030
          %1116 = vst.msk [vmem:[%s1103 + $0x30] sm:$0xf] %vm685, %v1032
          %1117 = vst.msk [vmem:[%s1103 + $0x34] sm:$0xf] %vm685, %v1034
          %1118 = vst.msk [vmem:[%s1103 + $0x38] sm:$0xf] %vm685, %v1036
          %1119 = vst.msk [vmem:[%s1103 + $0x3c] sm:$0xf] %vm685, %v1038
          %1120 = vst.msk [vmem:[%s1103 + $0x40] sm:$0xf] %vm685, %v1040
          %1121 = vst.msk [vmem:[%s1103 + $0x44] sm:$0xf] %vm685, %v1042
          %1122 = vst.msk [vmem:[%s1103 + $0x48] sm:$0xf] %vm685, %v1044
          %1123 = vst.msk [vmem:[%s1103 + $0x4c] sm:$0xf] %vm685, %v1046
          %1124 = vst.msk [vmem:[%s1103 + $0x50] sm:$0xf] %vm685, %v1048
          %1125 = vst.msk [vmem:[%s1103 + $0x54] sm:$0xf] %vm685, %v1050
          %1126 = vst.msk [vmem:[%s1103 + $0x58] sm:$0xf] %vm685, %v1052
          %1127 = vst.msk [vmem:[%s1103 + $0x5c] sm:$0xf] %vm685, %v1054
          %1128 = vst.msk [vmem:[%s1103 + $0x60] sm:$0xf] %vm685, %v1056
          %1129 = vst.msk [vmem:[%s1103 + $0x64] sm:$0xf] %vm685, %v1058
          %1130 = vst.msk [vmem:[%s1103 + $0x68] sm:$0xf] %vm685, %v1060
          %1131 = vst.msk [vmem:[%s1103 + $0x6c] sm:$0xf] %vm685, %v1062
          %1132 = vst.msk [vmem:[%s1103 + $0x70] sm:$0xf] %vm685, %v1064
          %1133 = vst.msk [vmem:[%s1103 + $0x74] sm:$0xf] %vm685, %v1066
          %1134 = vst.msk [vmem:[%s1103 + $0x78] sm:$0xf] %vm685, %v1068
          %1135 = vst.msk [vmem:[%s1103 + $0x7c] sm:$0xf] %vm685, %v1070
        $region68: #{tpu_custom_call.1} parent=47 // pred_fallthru
          _
        %s1136 = smul.u32 %s31, 128
        %s1137 = sshra.s32 %s1136, 3
        %s1138 = sand.u32 %s1136, 7
        %s1139 = smul.addr %s1137, 4
        %s1140 = scalar_lea.vmem %s316, %s1139 [#allocation4]
        %v1141 = vld [vmem:[%s1140] sm:$0xf]
        %v1142 = vld [vmem:[%s1140 + $0x4] sm:$0xf]
        %v1143 = vld [vmem:[%s1140 + $0x8] sm:$0xf]
        %v1144 = vld [vmem:[%s1140 + $0xc] sm:$0xf]
        %v1145 = vld [vmem:[%s1140 + $0x10] sm:$0xf]
        %v1146 = vld [vmem:[%s1140 + $0x14] sm:$0xf]
        %v1147 = vld [vmem:[%s1140 + $0x18] sm:$0xf]
        %v1148 = vld [vmem:[%s1140 + $0x1c] sm:$0xf]
        %v1149 = vld [vmem:[%s1140 + $0x20] sm:$0xf]
        %v1150 = vld [vmem:[%s1140 + $0x24] sm:$0xf]
        %v1151 = vld [vmem:[%s1140 + $0x28] sm:$0xf]
        %v1152 = vld [vmem:[%s1140 + $0x2c] sm:$0xf]
        %v1153 = vld [vmem:[%s1140 + $0x30] sm:$0xf]
        %v1154 = vld [vmem:[%s1140 + $0x34] sm:$0xf]
        %v1155 = vld [vmem:[%s1140 + $0x38] sm:$0xf]
        %v1156 = vld [vmem:[%s1140 + $0x3c] sm:$0xf]
        %v1157 = vld [vmem:[#allocation7] sm:$0xf]
        %v1158 = vld [vmem:[#allocation7 + $0x4] sm:$0xf]
        %v1159 = vld [vmem:[#allocation7 + $0x8] sm:$0xf]
        %v1160 = vld [vmem:[#allocation7 + $0xc] sm:$0xf]
        %v1161 = vld [vmem:[#allocation7 + $0x10] sm:$0xf]
        %v1162 = vld [vmem:[#allocation7 + $0x14] sm:$0xf]
        %v1163 = vld [vmem:[#allocation7 + $0x18] sm:$0xf]
        %v1164 = vld [vmem:[#allocation7 + $0x1c] sm:$0xf]
        %v1165 = vld [vmem:[#allocation7 + $0x20] sm:$0xf]
        %v1166 = vld [vmem:[#allocation7 + $0x24] sm:$0xf]
        %v1167 = vld [vmem:[#allocation7 + $0x28] sm:$0xf]
        %v1168 = vld [vmem:[#allocation7 + $0x2c] sm:$0xf]
        %v1169 = vld [vmem:[#allocation7 + $0x30] sm:$0xf]
        %v1170 = vld [vmem:[#allocation7 + $0x34] sm:$0xf]
        %v1171 = vld [vmem:[#allocation7 + $0x38] sm:$0xf]
        %v1172 = vld [vmem:[#allocation7 + $0x3c] sm:$0xf]
        %v1173 = vld [vmem:[%s2] sm:$0x1]
        %v1175 = vperm.slane %v1173, 0
        %v1193 = vunpack.c.l.b16 %v1141
        %v1194 = vunpack.c.l.b16 %v1142
        %v1195 = vunpack.c.l.b16 %v1143
        %v1196 = vunpack.c.l.b16 %v1144
        %v1197 = vunpack.c.l.b16 %v1145
        %v1198 = vunpack.c.l.b16 %v1146
        %v1199 = vunpack.c.l.b16 %v1147
        %v1200 = vunpack.c.l.b16 %v1148
        %v1201 = vunpack.c.l.b16 %v1149
        %v1202 = vunpack.c.l.b16 %v1150
        %v1203 = vunpack.c.l.b16 %v1151
        %v1204 = vunpack.c.l.b16 %v1152
        %v1205 = vunpack.c.l.b16 %v1153
        %v1206 = vunpack.c.l.b16 %v1154
        %v1207 = vunpack.c.l.b16 %v1155
        %v1208 = vunpack.c.l.b16 %v1156
        %v1209 = vpack.c.b16 %v1194, %v1193
        %v1210 = vpack.c.b16 %v1196, %v1195
        %v1211 = vpack.c.b16 %v1198, %v1197
        %v1212 = vpack.c.b16 %v1200, %v1199
        %v1213 = vpack.c.b16 %v1202, %v1201
        %v1214 = vpack.c.b16 %v1204, %v1203
        %v1215 = vpack.c.b16 %v1206, %v1205
        %v1216 = vpack.c.b16 %v1208, %v1207
        %v1241 = vunpack.c.l.b16 %v1157
        %v1242 = vunpack.c.l.b16 %v1158
        %v1243 = vunpack.c.l.b16 %v1159
        %v1244 = vunpack.c.l.b16 %v1160
        %v1245 = vunpack.c.l.b16 %v1161
        %v1246 = vunpack.c.l.b16 %v1162
        %v1247 = vunpack.c.l.b16 %v1163
        %v1248 = vunpack.c.l.b16 %v1164
        %v1249 = vunpack.c.l.b16 %v1165
        %v1250 = vunpack.c.l.b16 %v1166
        %v1251 = vunpack.c.l.b16 %v1167
        %v1252 = vunpack.c.l.b16 %v1168
        %v1253 = vunpack.c.l.b16 %v1169
        %v1254 = vunpack.c.l.b16 %v1170
        %v1255 = vunpack.c.l.b16 %v1171
        %v1256 = vunpack.c.l.b16 %v1172
        %v1257 = vpack.c.b16 %v1242, %v1241
        %v1258 = vpack.c.b16 %v1244, %v1243
        %v1259 = vpack.c.b16 %v1246, %v1245
        %v1260 = vpack.c.b16 %v1248, %v1247
        %v1261 = vpack.c.b16 %v1250, %v1249
        %v1262 = vpack.c.b16 %v1252, %v1251
        %v1263 = vpack.c.b16 %v1254, %v1253
        %v1264 = vpack.c.b16 %v1256, %v1255
        %1273 = vmatpush.bf16.msra.mxu0 %v1264
        %1274 = vmatpush.bf16.msra.mxu0 %v1263
        %1275 = vmatpush.bf16.msra.mxu0 %v1262
        %1276 = vmatpush.bf16.msra.mxu0 %v1261
        %1277 = vmatpush.bf16.msra.mxu0 %v1260
        %1278 = vmatpush.bf16.msra.mxu0 %v1259
        %1279 = vmatpush.bf16.msra.mxu0 %v1258
        %1280 = vmatpush.bf16.msra.mxu0 %v1257
        %1281 = vmatmul.bf16.gmra.mxu0 %v1209
        %v1282 = vpop.f32.mrf.mxu0
        %v1283 = vadd.f32 %v1175, %v1282
        %v1284 = vpop.f32.mrf.mxu0
        %v1285 = vadd.f32 %v1175, %v1284
        %1286 = vmatmul.bf16.gmra.mxu0 %v1210
        %v1287 = vpop.f32.mrf.mxu0
        %v1288 = vadd.f32 %v1175, %v1287
        %v1289 = vpop.f32.mrf.mxu0
        %v1290 = vadd.f32 %v1175, %v1289
        %1291 = vmatmul.bf16.gmra.mxu0 %v1211
        %v1292 = vpop.f32.mrf.mxu0
        %v1293 = vadd.f32 %v1175, %v1292
        %v1294 = vpop.f32.mrf.mxu0
        %v1295 = vadd.f32 %v1175, %v1294
        %1296 = vmatmul.bf16.gmra.mxu0 %v1212
        %v1297 = vpop.f32.mrf.mxu0
        %v1298 = vadd.f32 %v1175, %v1297
        %v1299 = vpop.f32.mrf.mxu0
        %v1300 = vadd.f32 %v1175, %v1299
        %1301 = vmatmul.bf16.gmra.mxu0 %v1213
        %v1302 = vpop.f32.mrf.mxu0
        %v1303 = vadd.f32 %v1175, %v1302
        %v1304 = vpop.f32.mrf.mxu0
        %v1305 = vadd.f32 %v1175, %v1304
        %1306 = vmatmul.bf16.gmra.mxu0 %v1214
        %v1307 = vpop.f32.mrf.mxu0
        %v1308 = vadd.f32 %v1175, %v1307
        %v1309 = vpop.f32.mrf.mxu0
        %v1310 = vadd.f32 %v1175, %v1309
        %1311 = vmatmul.bf16.gmra.mxu0 %v1215
        %v1312 = vpop.f32.mrf.mxu0
        %v1313 = vadd.f32 %v1175, %v1312
        %v1314 = vpop.f32.mrf.mxu0
        %v1315 = vadd.f32 %v1175, %v1314
        %1316 = vmatmul.bf16.gmra.mxu0 %v1216
        %v1317 = vpop.f32.mrf.mxu0
        %v1318 = vadd.f32 %v1175, %v1317
        %v1319 = vpop.f32.mrf.mxu0
        %v1320 = vadd.f32 %v1175, %v1319
        %1321 = vdwg.mxu0
        %v1322 = vmul.f32 %v1283, 0.17677669
        %v1323 = vmul.f32 %v1285, 0.17677669
        %v1324 = vmul.f32 %v1288, 0.17677669
        %v1325 = vmul.f32 %v1290, 0.17677669
        %v1326 = vmul.f32 %v1293, 0.17677669
        %v1327 = vmul.f32 %v1295, 0.17677669
        %v1328 = vmul.f32 %v1298, 0.17677669
        %v1329 = vmul.f32 %v1300, 0.17677669
        %v1330 = vmul.f32 %v1303, 0.17677669
        %v1331 = vmul.f32 %v1305, 0.17677669
        %v1332 = vmul.f32 %v1308, 0.17677669
        %v1333 = vmul.f32 %v1310, 0.17677669
        %v1334 = vmul.f32 %v1313, 0.17677669
        %v1335 = vmul.f32 %v1315, 0.17677669
        %v1336 = vmul.f32 %v1318, 0.17677669
        %v1337 = vmul.f32 %v1320, 0.17677669
        %v1338 = vpack.c.bf16 %v1322, %v1322
        %v1339 = vpack.c.bf16 %v1323, %v1323
        %v1340 = vpack.c.bf16 %v1324, %v1324
        %v1341 = vpack.c.bf16 %v1325, %v1325
        %v1342 = vpack.c.bf16 %v1326, %v1326
        %v1343 = vpack.c.bf16 %v1327, %v1327
        %v1344 = vpack.c.bf16 %v1328, %v1328
        %v1345 = vpack.c.bf16 %v1329, %v1329
        %v1346 = vpack.c.bf16 %v1330, %v1330
        %v1347 = vpack.c.bf16 %v1331, %v1331
        %v1348 = vpack.c.bf16 %v1332, %v1332
        %v1349 = vpack.c.bf16 %v1333, %v1333
        %v1350 = vpack.c.bf16 %v1334, %v1334
        %v1351 = vpack.c.bf16 %v1335, %v1335
        %v1352 = vpack.c.bf16 %v1336, %v1336
        %v1353 = vpack.c.bf16 %v1337, %v1337
        %v1354 = vld [vmem:[#allocation2] sm:$0xf]
        %v1355 = vld [vmem:[#allocation2 + $0x4] sm:$0xf]
        %v1356 = vld [vmem:[#allocation2 + $0x8] sm:$0xf]
        %v1357 = vld [vmem:[#allocation2 + $0xc] sm:$0xf]
        %v1358 = vld [vmem:[#allocation2 + $0x10] sm:$0xf]
        %v1359 = vld [vmem:[#allocation2 + $0x14] sm:$0xf]
        %v1360 = vld [vmem:[#allocation2 + $0x18] sm:$0xf]
        %v1361 = vld [vmem:[#allocation2 + $0x1c] sm:$0xf]
        %v1362 = vld [vmem:[#allocation2 + $0x20] sm:$0xf]
        %v1363 = vld [vmem:[#allocation2 + $0x24] sm:$0xf]
        %v1364 = vld [vmem:[#allocation2 + $0x28] sm:$0xf]
        %v1365 = vld [vmem:[#allocation2 + $0x2c] sm:$0xf]
        %v1366 = vld [vmem:[#allocation2 + $0x30] sm:$0xf]
        %v1367 = vld [vmem:[#allocation2 + $0x34] sm:$0xf]
        %v1368 = vld [vmem:[#allocation2 + $0x38] sm:$0xf]
        %v1369 = vld [vmem:[#allocation2 + $0x3c] sm:$0xf]
        %v1370 = vld [vmem:[#allocation2 + $0x40] sm:$0xf]
        %v1371 = vld [vmem:[#allocation2 + $0x44] sm:$0xf]
        %v1372 = vld [vmem:[#allocation2 + $0x48] sm:$0xf]
        %v1373 = vld [vmem:[#allocation2 + $0x4c] sm:$0xf]
        %v1374 = vld [vmem:[#allocation2 + $0x50] sm:$0xf]
        %v1375 = vld [vmem:[#allocation2 + $0x54] sm:$0xf]
        %v1376 = vld [vmem:[#allocation2 + $0x58] sm:$0xf]
        %v1377 = vld [vmem:[#allocation2 + $0x5c] sm:$0xf]
        %v1378 = vld [vmem:[#allocation2 + $0x60] sm:$0xf]
        %v1379 = vld [vmem:[#allocation2 + $0x64] sm:$0xf]
        %v1380 = vld [vmem:[#allocation2 + $0x68] sm:$0xf]
        %v1381 = vld [vmem:[#allocation2 + $0x6c] sm:$0xf]
        %v1382 = vld [vmem:[#allocation2 + $0x70] sm:$0xf]
        %v1383 = vld [vmem:[#allocation2 + $0x74] sm:$0xf]
        %v1384 = vld [vmem:[#allocation2 + $0x78] sm:$0xf]
        %v1385 = vld [vmem:[#allocation2 + $0x7c] sm:$0xf]
        %v1386 = vld [vmem:[#allocation3] sm:$0xf]
        %v1387 = vld [vmem:[#allocation3 + $0x4] sm:$0xf]
        %v1388 = vld [vmem:[#allocation3 + $0x8] sm:$0xf]
        %v1389 = vld [vmem:[#allocation3 + $0xc] sm:$0xf]
        %v1390 = vld [vmem:[#allocation3 + $0x10] sm:$0xf]
        %v1391 = vld [vmem:[#allocation3 + $0x14] sm:$0xf]
        %v1392 = vld [vmem:[#allocation3 + $0x18] sm:$0xf]
        %v1393 = vld [vmem:[#allocation3 + $0x1c] sm:$0xf]
        %v1394 = vld [vmem:[#allocation3 + $0x20] sm:$0xf]
        %v1395 = vld [vmem:[#allocation3 + $0x24] sm:$0xf]
        %v1396 = vld [vmem:[#allocation3 + $0x28] sm:$0xf]
        %v1397 = vld [vmem:[#allocation3 + $0x2c] sm:$0xf]
        %v1398 = vld [vmem:[#allocation3 + $0x30] sm:$0xf]
        %v1399 = vld [vmem:[#allocation3 + $0x34] sm:$0xf]
        %v1400 = vld [vmem:[#allocation3 + $0x38] sm:$0xf]
        %v1401 = vld [vmem:[#allocation3 + $0x3c] sm:$0xf]
        %v1402 = vld [vmem:[#allocation3 + $0x40] sm:$0xf]
        %v1403 = vld [vmem:[#allocation3 + $0x44] sm:$0xf]
        %v1404 = vld [vmem:[#allocation3 + $0x48] sm:$0xf]
        %v1405 = vld [vmem:[#allocation3 + $0x4c] sm:$0xf]
        %v1406 = vld [vmem:[#allocation3 + $0x50] sm:$0xf]
        %v1407 = vld [vmem:[#allocation3 + $0x54] sm:$0xf]
        %v1408 = vld [vmem:[#allocation3 + $0x58] sm:$0xf]
        %v1409 = vld [vmem:[#allocation3 + $0x5c] sm:$0xf]
        %v1410 = vld [vmem:[#allocation3 + $0x60] sm:$0xf]
        %v1411 = vld [vmem:[#allocation3 + $0x64] sm:$0xf]
        %v1412 = vld [vmem:[#allocation3 + $0x68] sm:$0xf]
        %v1413 = vld [vmem:[#allocation3 + $0x6c] sm:$0xf]
        %v1414 = vld [vmem:[#allocation3 + $0x70] sm:$0xf]
        %v1415 = vld [vmem:[#allocation3 + $0x74] sm:$0xf]
        %v1416 = vld [vmem:[#allocation3 + $0x78] sm:$0xf]
        %v1417 = vld [vmem:[#allocation3 + $0x7c] sm:$0xf]
        %v1434 = vunpack.c.l.b16 %v1338
        %v1435 = vunpack.c.l.b16 %v1339
        %v1436 = vunpack.c.l.b16 %v1340
        %v1437 = vunpack.c.l.b16 %v1341
        %v1438 = vunpack.c.l.b16 %v1342
        %v1439 = vunpack.c.l.b16 %v1343
        %v1440 = vunpack.c.l.b16 %v1344
        %v1441 = vunpack.c.l.b16 %v1345
        %v1442 = vunpack.c.l.b16 %v1346
        %v1443 = vunpack.c.l.b16 %v1347
        %v1444 = vunpack.c.l.b16 %v1348
        %v1445 = vunpack.c.l.b16 %v1349
        %v1446 = vunpack.c.l.b16 %v1350
        %v1447 = vunpack.c.l.b16 %v1351
        %v1448 = vunpack.c.l.b16 %v1352
        %v1449 = vunpack.c.l.b16 %v1353
        %v1450 = vpack.c.b16 %v1435, %v1434
        %v1451 = vpack.c.b16 %v1437, %v1436
        %v1452 = vpack.c.b16 %v1439, %v1438
        %v1453 = vpack.c.b16 %v1441, %v1440
        %v1454 = vpack.c.b16 %v1443, %v1442
        %v1455 = vpack.c.b16 %v1445, %v1444
        %v1456 = vpack.c.b16 %v1447, %v1446
        %v1457 = vpack.c.b16 %v1449, %v1448
        %1458 = vrot.lane.b32.xlu0 %v1450, 96
        %v1459 = vpop.permute.xlu0 %1458
        %1460 = vrot.lane.b32.xlu0 %v1451, 96
        %v1461 = vpop.permute.xlu0 %1460
        %1462 = vrot.lane.b32.xlu0 %v1452, 96
        %v1463 = vpop.permute.xlu0 %1462
        %1464 = vrot.lane.b32.xlu0 %v1453, 96
        %v1465 = vpop.permute.xlu0 %1464
        %1466 = vrot.lane.b32.xlu0 %v1454, 96
        %v1467 = vpop.permute.xlu0 %1466
        %1468 = vrot.lane.b32.xlu0 %v1455, 96
        %v1469 = vpop.permute.xlu0 %1468
        %1470 = vrot.lane.b32.xlu0 %v1456, 96
        %v1471 = vpop.permute.xlu0 %1470
        %1472 = vrot.lane.b32.xlu0 %v1457, 96
        %v1473 = vpop.permute.xlu0 %1472
        %v1506 = vunpack.c.l.b16 %v1354
        %v1507 = vunpack.c.l.b16 %v1355
        %v1508 = vunpack.c.l.b16 %v1356
        %v1509 = vunpack.c.l.b16 %v1357
        %v1510 = vunpack.c.l.b16 %v1358
        %v1511 = vunpack.c.l.b16 %v1359
        %v1512 = vunpack.c.l.b16 %v1360
        %v1513 = vunpack.c.l.b16 %v1361
        %v1514 = vunpack.c.l.b16 %v1362
        %v1515 = vunpack.c.l.b16 %v1363
        %v1516 = vunpack.c.l.b16 %v1364
        %v1517 = vunpack.c.l.b16 %v1365
        %v1518 = vunpack.c.l.b16 %v1366
        %v1519 = vunpack.c.l.b16 %v1367
        %v1520 = vunpack.c.l.b16 %v1368
        %v1521 = vunpack.c.l.b16 %v1369
        %v1522 = vunpack.c.l.b16 %v1370
        %v1523 = vunpack.c.l.b16 %v1371
        %v1524 = vunpack.c.l.b16 %v1372
        %v1525 = vunpack.c.l.b16 %v1373
        %v1526 = vunpack.c.l.b16 %v1374
        %v1527 = vunpack.c.l.b16 %v1375
        %v1528 = vunpack.c.l.b16 %v1376
        %v1529 = vunpack.c.l.b16 %v1377
        %v1530 = vunpack.c.l.b16 %v1378
        %v1531 = vunpack.c.l.b16 %v1379
        %v1532 = vunpack.c.l.b16 %v1380
        %v1533 = vunpack.c.l.b16 %v1381
        %v1534 = vunpack.c.l.b16 %v1382
        %v1535 = vunpack.c.l.b16 %v1383
        %v1536 = vunpack.c.l.b16 %v1384
        %v1537 = vunpack.c.l.b16 %v1385
        %v1538 = vpack.c.b16 %v1507, %v1506
        %v1539 = vpack.c.b16 %v1509, %v1508
        %v1540 = vpack.c.b16 %v1511, %v1510
        %v1541 = vpack.c.b16 %v1513, %v1512
        %v1542 = vpack.c.b16 %v1515, %v1514
        %v1543 = vpack.c.b16 %v1517, %v1516
        %v1544 = vpack.c.b16 %v1519, %v1518
        %v1545 = vpack.c.b16 %v1521, %v1520
        %v1546 = vpack.c.b16 %v1523, %v1522
        %v1547 = vpack.c.b16 %v1525, %v1524
        %v1548 = vpack.c.b16 %v1527, %v1526
        %v1549 = vpack.c.b16 %v1529, %v1528
        %v1550 = vpack.c.b16 %v1531, %v1530
        %v1551 = vpack.c.b16 %v1533, %v1532
        %v1552 = vpack.c.b16 %v1535, %v1534
        %v1553 = vpack.c.b16 %v1537, %v1536
        %vm1554 = vcmask 261120
        %v1556 = vsel %vm1554, %v1450, 0
        %v1559 = vsel %vm1554, %v1451, 0
        %v1562 = vsel %vm1554, %v1452, 0
        %v1565 = vsel %vm1554, %v1453, 0
        %v1568 = vsel %vm1554, %v1454, 0
        %v1571 = vsel %vm1554, %v1455, 0
        %v1574 = vsel %vm1554, %v1456, 0
        %v1577 = vsel %vm1554, %v1457, 0
        %v1580 = vsel %vm1554, %v1459, 0
        %v1583 = vsel %vm1554, %v1461, 0
        %v1586 = vsel %vm1554, %v1463, 0
        %v1589 = vsel %vm1554, %v1465, 0
        %v1592 = vsel %vm1554, %v1467, 0
        %v1595 = vsel %vm1554, %v1469, 0
        %v1598 = vsel %vm1554, %v1471, 0
        %v1601 = vsel %vm1554, %v1473, 0
        %v1604 = vsel %vm1554, %v1538, 0
        %v1607 = vsel %vm1554, %v1539, 0
        %v1610 = vsel %vm1554, %v1540, 0
        %v1613 = vsel %vm1554, %v1541, 0
        %v1616 = vsel %vm1554, %v1542, 0
        %v1619 = vsel %vm1554, %v1543, 0
        %v1622 = vsel %vm1554, %v1544, 0
        %v1625 = vsel %vm1554, %v1545, 0
        %v1628 = vsel %vm1554, %v1546, 0
        %v1631 = vsel %vm1554, %v1547, 0
        %v1634 = vsel %vm1554, %v1548, 0
        %v1637 = vsel %vm1554, %v1549, 0
        %v1640 = vsel %vm1554, %v1550, 0
        %v1643 = vsel %vm1554, %v1551, 0
        %v1646 = vsel %vm1554, %v1552, 0
        %v1649 = vsel %vm1554, %v1553, 0
        %1651 = vmatpush.bf16.xpose.msra.mxu0 %v1625
        %1652 = vmatpush.bf16.xpose.msra.mxu0 %v1622
        %1653 = vmatpush.bf16.xpose.msra.mxu0 %v1619
        %1654 = vmatpush.bf16.xpose.msra.mxu0 %v1616
        %1655 = vmatpush.bf16.xpose.msra.mxu0 %v1613
        %1656 = vmatpush.bf16.xpose.msra.mxu0 %v1610
        %1657 = vmatpush.bf16.xpose.msra.mxu0 %v1607
        %1658 = vmatpush.bf16.xpose.msra.mxu0 %v1604
        %1659 = vmatmul.bf16.gmra.mxu0 %v1556
        %v1660 = vpop.f32.mrf.mxu0
        %v1661 = vadd.f32 0.0, %v1660
        %v1662 = vpop.f32.mrf.mxu0
        %v1663 = vadd.f32 0.0, %v1662
        %1664 = vmatmul.bf16.gmra.mxu0 %v1559
        %v1665 = vpop.f32.mrf.mxu0
        %v1666 = vadd.f32 0.0, %v1665
        %v1667 = vpop.f32.mrf.mxu0
        %v1668 = vadd.f32 0.0, %v1667
        %1669 = vmatmul.bf16.gmra.mxu0 %v1562
        %v1670 = vpop.f32.mrf.mxu0
        %v1671 = vadd.f32 0.0, %v1670
        %v1672 = vpop.f32.mrf.mxu0
        %v1673 = vadd.f32 0.0, %v1672
        %1674 = vmatmul.bf16.gmra.mxu0 %v1565
        %v1675 = vpop.f32.mrf.mxu0
        %v1676 = vadd.f32 0.0, %v1675
        %v1677 = vpop.f32.mrf.mxu0
        %v1678 = vadd.f32 0.0, %v1677
        %1679 = vmatmul.bf16.gmra.mxu0 %v1568
        %v1680 = vpop.f32.mrf.mxu0
        %v1681 = vadd.f32 0.0, %v1680
        %v1682 = vpop.f32.mrf.mxu0
        %v1683 = vadd.f32 0.0, %v1682
        %1684 = vmatmul.bf16.gmra.mxu0 %v1571
        %v1685 = vpop.f32.mrf.mxu0
        %v1686 = vadd.f32 0.0, %v1685
        %v1687 = vpop.f32.mrf.mxu0
        %v1688 = vadd.f32 0.0, %v1687
        %1689 = vmatmul.bf16.gmra.mxu0 %v1574
        %v1690 = vpop.f32.mrf.mxu0
        %v1691 = vadd.f32 0.0, %v1690
        %v1692 = vpop.f32.mrf.mxu0
        %v1693 = vadd.f32 0.0, %v1692
        %1694 = vmatmul.bf16.gmra.mxu0 %v1577
        %v1695 = vpop.f32.mrf.mxu0
        %v1696 = vadd.f32 0.0, %v1695
        %v1697 = vpop.f32.mrf.mxu0
        %v1698 = vadd.f32 0.0, %v1697
        %1699 = vmatmul.bf16.gmra.mxu0 %v1580
        %v1700 = vpop.f32.mrf.mxu0
        %v1701 = vadd.f32 0.0, %v1700
        %v1702 = vpop.f32.mrf.mxu0
        %v1703 = vadd.f32 0.0, %v1702
        %1704 = vmatmul.bf16.gmra.mxu0 %v1583
        %v1705 = vpop.f32.mrf.mxu0
        %v1706 = vadd.f32 0.0, %v1705
        %v1707 = vpop.f32.mrf.mxu0
        %v1708 = vadd.f32 0.0, %v1707
        %1709 = vmatmul.bf16.gmra.mxu0 %v1586
        %v1710 = vpop.f32.mrf.mxu0
        %v1711 = vadd.f32 0.0, %v1710
        %v1712 = vpop.f32.mrf.mxu0
        %v1713 = vadd.f32 0.0, %v1712
        %1714 = vmatmul.bf16.gmra.mxu0 %v1589
        %v1715 = vpop.f32.mrf.mxu0
        %v1716 = vadd.f32 0.0, %v1715
        %v1717 = vpop.f32.mrf.mxu0
        %v1718 = vadd.f32 0.0, %v1717
        %1719 = vmatmul.bf16.gmra.mxu0 %v1592
        %v1720 = vpop.f32.mrf.mxu0
        %v1721 = vadd.f32 0.0, %v1720
        %v1722 = vpop.f32.mrf.mxu0
        %v1723 = vadd.f32 0.0, %v1722
        %1724 = vmatmul.bf16.gmra.mxu0 %v1595
        %v1725 = vpop.f32.mrf.mxu0
        %v1726 = vadd.f32 0.0, %v1725
        %v1727 = vpop.f32.mrf.mxu0
        %v1728 = vadd.f32 0.0, %v1727
        %1729 = vmatmul.bf16.gmra.mxu0 %v1598
        %v1730 = vpop.f32.mrf.mxu0
        %v1731 = vadd.f32 0.0, %v1730
        %v1732 = vpop.f32.mrf.mxu0
        %v1733 = vadd.f32 0.0, %v1732
        %1734 = vmatmul.bf16.gmra.mxu0 %v1601
        %v1735 = vpop.f32.mrf.mxu0
        %v1736 = vadd.f32 0.0, %v1735
        %v1737 = vpop.f32.mrf.mxu0
        %v1738 = vadd.f32 0.0, %v1737
        %1739 = vdwg.mxu0
        %1740 = vmatpush.bf16.xpose.msra.mxu0 %v1649
        %1741 = vmatpush.bf16.xpose.msra.mxu0 %v1646
        %1742 = vmatpush.bf16.xpose.msra.mxu0 %v1643
        %1743 = vmatpush.bf16.xpose.msra.mxu0 %v1640
        %1744 = vmatpush.bf16.xpose.msra.mxu0 %v1637
        %1745 = vmatpush.bf16.xpose.msra.mxu0 %v1634
        %1746 = vmatpush.bf16.xpose.msra.mxu0 %v1631
        %1747 = vmatpush.bf16.xpose.msra.mxu0 %v1628
        %1748 = vmatmul.bf16.gmra.mxu0 %v1556
        %v1749 = vpop.f32.mrf.mxu0
        %v1750 = vadd.f32 0.0, %v1749
        %v1751 = vpop.f32.mrf.mxu0
        %v1752 = vadd.f32 0.0, %v1751
        %1753 = vmatmul.bf16.gmra.mxu0 %v1559
        %v1754 = vpop.f32.mrf.mxu0
        %v1755 = vadd.f32 0.0, %v1754
        %v1756 = vpop.f32.mrf.mxu0
        %v1757 = vadd.f32 0.0, %v1756
        %1758 = vmatmul.bf16.gmra.mxu0 %v1562
        %v1759 = vpop.f32.mrf.mxu0
        %v1760 = vadd.f32 0.0, %v1759
        %v1761 = vpop.f32.mrf.mxu0
        %v1762 = vadd.f32 0.0, %v1761
        %1763 = vmatmul.bf16.gmra.mxu0 %v1565
        %v1764 = vpop.f32.mrf.mxu0
        %v1765 = vadd.f32 0.0, %v1764
        %v1766 = vpop.f32.mrf.mxu0
        %v1767 = vadd.f32 0.0, %v1766
        %1768 = vmatmul.bf16.gmra.mxu0 %v1568
        %v1769 = vpop.f32.mrf.mxu0
        %v1770 = vadd.f32 0.0, %v1769
        %v1771 = vpop.f32.mrf.mxu0
        %v1772 = vadd.f32 0.0, %v1771
        %1773 = vmatmul.bf16.gmra.mxu0 %v1571
        %v1774 = vpop.f32.mrf.mxu0
        %v1775 = vadd.f32 0.0, %v1774
        %v1776 = vpop.f32.mrf.mxu0
        %v1777 = vadd.f32 0.0, %v1776
        %1778 = vmatmul.bf16.gmra.mxu0 %v1574
        %v1779 = vpop.f32.mrf.mxu0
        %v1780 = vadd.f32 0.0, %v1779
        %v1781 = vpop.f32.mrf.mxu0
        %v1782 = vadd.f32 0.0, %v1781
        %1783 = vmatmul.bf16.gmra.mxu0 %v1577
        %v1784 = vpop.f32.mrf.mxu0
        %v1785 = vadd.f32 0.0, %v1784
        %v1786 = vpop.f32.mrf.mxu0
        %v1787 = vadd.f32 0.0, %v1786
        %1788 = vmatmul.bf16.gmra.mxu0 %v1580
        %v1789 = vpop.f32.mrf.mxu0
        %v1790 = vadd.f32 0.0, %v1789
        %v1791 = vpop.f32.mrf.mxu0
        %v1792 = vadd.f32 0.0, %v1791
        %1793 = vmatmul.bf16.gmra.mxu0 %v1583
        %v1794 = vpop.f32.mrf.mxu0
        %v1795 = vadd.f32 0.0, %v1794
        %v1796 = vpop.f32.mrf.mxu0
        %v1797 = vadd.f32 0.0, %v1796
        %1798 = vmatmul.bf16.gmra.mxu0 %v1586
        %v1799 = vpop.f32.mrf.mxu0
        %v1800 = vadd.f32 0.0, %v1799
        %v1801 = vpop.f32.mrf.mxu0
        %v1802 = vadd.f32 0.0, %v1801
        %1803 = vmatmul.bf16.gmra.mxu0 %v1589
        %v1804 = vpop.f32.mrf.mxu0
        %v1805 = vadd.f32 0.0, %v1804
        %v1806 = vpop.f32.mrf.mxu0
        %v1807 = vadd.f32 0.0, %v1806
        %1808 = vmatmul.bf16.gmra.mxu0 %v1592
        %v1809 = vpop.f32.mrf.mxu0
        %v1810 = vadd.f32 0.0, %v1809
        %v1811 = vpop.f32.mrf.mxu0
        %v1812 = vadd.f32 0.0, %v1811
        %1813 = vmatmul.bf16.gmra.mxu0 %v1595
        %v1814 = vpop.f32.mrf.mxu0
        %v1815 = vadd.f32 0.0, %v1814
        %v1816 = vpop.f32.mrf.mxu0
        %v1817 = vadd.f32 0.0, %v1816
        %1818 = vmatmul.bf16.gmra.mxu0 %v1598
        %v1819 = vpop.f32.mrf.mxu0
        %v1820 = vadd.f32 0.0, %v1819
        %v1821 = vpop.f32.mrf.mxu0
        %v1822 = vadd.f32 0.0, %v1821
        %1823 = vmatmul.bf16.gmra.mxu0 %v1601
        %v1824 = vpop.f32.mrf.mxu0
        %v1825 = vadd.f32 0.0, %v1824
        %v1826 = vpop.f32.mrf.mxu0
        %v1827 = vadd.f32 0.0, %v1826
        %1828 = vdwg.mxu0
        %v1829 = vmax.f32 %v1661, %v1750
        %1830 = vmax.xlane.f32.xlu0 %v1829
        %v1831 = vpop.xlane.xlu0 %1830
        %v1832 = vmax.f32 %v1663, %v1752
        %1833 = vmax.xlane.f32.xlu0 %v1832
        %v1834 = vpop.xlane.xlu0 %1833
        %v1835 = vmax.f32 %v1666, %v1755
        %1836 = vmax.xlane.f32.xlu0 %v1835
        %v1837 = vpop.xlane.xlu0 %1836
        %v1838 = vmax.f32 %v1668, %v1757
        %1839 = vmax.xlane.f32.xlu0 %v1838
        %v1840 = vpop.xlane.xlu0 %1839
        %v1841 = vmax.f32 %v1671, %v1760
        %1842 = vmax.xlane.f32.xlu0 %v1841
        %v1843 = vpop.xlane.xlu0 %1842
        %v1844 = vmax.f32 %v1673, %v1762
        %1845 = vmax.xlane.f32.xlu0 %v1844
        %v1846 = vpop.xlane.xlu0 %1845
        %v1847 = vmax.f32 %v1676, %v1765
        %1848 = vmax.xlane.f32.xlu0 %v1847
        %v1849 = vpop.xlane.xlu0 %1848
        %v1850 = vmax.f32 %v1678, %v1767
        %1851 = vmax.xlane.f32.xlu0 %v1850
        %v1852 = vpop.xlane.xlu0 %1851
        %v1853 = vmax.f32 %v1681, %v1770
        %1854 = vmax.xlane.f32.xlu0 %v1853
        %v1855 = vpop.xlane.xlu0 %1854
        %v1856 = vmax.f32 %v1683, %v1772
        %1857 = vmax.xlane.f32.xlu0 %v1856
        %v1858 = vpop.xlane.xlu0 %1857
        %v1859 = vmax.f32 %v1686, %v1775
        %1860 = vmax.xlane.f32.xlu0 %v1859
        %v1861 = vpop.xlane.xlu0 %1860
        %v1862 = vmax.f32 %v1688, %v1777
        %1863 = vmax.xlane.f32.xlu0 %v1862
        %v1864 = vpop.xlane.xlu0 %1863
        %v1865 = vmax.f32 %v1691, %v1780
        %1866 = vmax.xlane.f32.xlu0 %v1865
        %v1867 = vpop.xlane.xlu0 %1866
        %v1868 = vmax.f32 %v1693, %v1782
        %1869 = vmax.xlane.f32.xlu0 %v1868
        %v1870 = vpop.xlane.xlu0 %1869
        %v1871 = vmax.f32 %v1696, %v1785
        %1872 = vmax.xlane.f32.xlu0 %v1871
        %v1873 = vpop.xlane.xlu0 %1872
        %v1874 = vmax.f32 %v1698, %v1787
        %1875 = vmax.xlane.f32.xlu0 %v1874
        %v1876 = vpop.xlane.xlu0 %1875
        %v1877 = vmax.f32 %v1701, %v1790
        %1878 = vmax.xlane.f32.xlu0 %v1877
        %v1879 = vpop.xlane.xlu0 %1878
        %v1880 = vmax.f32 %v1703, %v1792
        %1881 = vmax.xlane.f32.xlu0 %v1880
        %v1882 = vpop.xlane.xlu0 %1881
        %v1883 = vmax.f32 %v1706, %v1795
        %1884 = vmax.xlane.f32.xlu0 %v1883
        %v1885 = vpop.xlane.xlu0 %1884
        %v1886 = vmax.f32 %v1708, %v1797
        %1887 = vmax.xlane.f32.xlu0 %v1886
        %v1888 = vpop.xlane.xlu0 %1887
        %v1889 = vmax.f32 %v1711, %v1800
        %1890 = vmax.xlane.f32.xlu0 %v1889
        %v1891 = vpop.xlane.xlu0 %1890
        %v1892 = vmax.f32 %v1713, %v1802
        %1893 = vmax.xlane.f32.xlu0 %v1892
        %v1894 = vpop.xlane.xlu0 %1893
        %v1895 = vmax.f32 %v1716, %v1805
        %1896 = vmax.xlane.f32.xlu0 %v1895
        %v1897 = vpop.xlane.xlu0 %1896
        %v1898 = vmax.f32 %v1718, %v1807
        %1899 = vmax.xlane.f32.xlu0 %v1898
        %v1900 = vpop.xlane.xlu0 %1899
        %v1901 = vmax.f32 %v1721, %v1810
        %1902 = vmax.xlane.f32.xlu0 %v1901
        %v1903 = vpop.xlane.xlu0 %1902
        %v1904 = vmax.f32 %v1723, %v1812
        %1905 = vmax.xlane.f32.xlu0 %v1904
        %v1906 = vpop.xlane.xlu0 %1905
        %v1907 = vmax.f32 %v1726, %v1815
        %1908 = vmax.xlane.f32.xlu0 %v1907
        %v1909 = vpop.xlane.xlu0 %1908
        %v1910 = vmax.f32 %v1728, %v1817
        %1911 = vmax.xlane.f32.xlu0 %v1910
        %v1912 = vpop.xlane.xlu0 %1911
        %v1913 = vmax.f32 %v1731, %v1820
        %1914 = vmax.xlane.f32.xlu0 %v1913
        %v1915 = vpop.xlane.xlu0 %1914
        %v1916 = vmax.f32 %v1733, %v1822
        %1917 = vmax.xlane.f32.xlu0 %v1916
        %v1918 = vpop.xlane.xlu0 %1917
        %v1919 = vmax.f32 %v1736, %v1825
        %1920 = vmax.xlane.f32.xlu0 %v1919
        %v1921 = vpop.xlane.xlu0 %1920
        %v1922 = vmax.f32 %v1738, %v1827
        %1923 = vmax.xlane.f32.xlu0 %v1922
        %v1924 = vpop.xlane.xlu0 %1923
        %v1925 = vsub.f32 %v1661, %v1831
        %v1926 = vsub.f32 %v1750, %v1831
        %v1927 = vsub.f32 %v1663, %v1834
        %v1928 = vsub.f32 %v1752, %v1834
        %v1929 = vsub.f32 %v1666, %v1837
        %v1930 = vsub.f32 %v1755, %v1837
        %v1931 = vsub.f32 %v1668, %v1840
        %v1932 = vsub.f32 %v1757, %v1840
        %v1933 = vsub.f32 %v1671, %v1843
        %v1934 = vsub.f32 %v1760, %v1843
        %v1935 = vsub.f32 %v1673, %v1846
        %v1936 = vsub.f32 %v1762, %v1846
        %v1937 = vsub.f32 %v1676, %v1849
        %v1938 = vsub.f32 %v1765, %v1849
        %v1939 = vsub.f32 %v1678, %v1852
        %v1940 = vsub.f32 %v1767, %v1852
        %v1941 = vsub.f32 %v1681, %v1855
        %v1942 = vsub.f32 %v1770, %v1855
        %v1943 = vsub.f32 %v1683, %v1858
        %v1944 = vsub.f32 %v1772, %v1858
        %v1945 = vsub.f32 %v1686, %v1861
        %v1946 = vsub.f32 %v1775, %v1861
        %v1947 = vsub.f32 %v1688, %v1864
        %v1948 = vsub.f32 %v1777, %v1864
        %v1949 = vsub.f32 %v1691, %v1867
        %v1950 = vsub.f32 %v1780, %v1867
        %v1951 = vsub.f32 %v1693, %v1870
        %v1952 = vsub.f32 %v1782, %v1870
        %v1953 = vsub.f32 %v1696, %v1873
        %v1954 = vsub.f32 %v1785, %v1873
        %v1955 = vsub.f32 %v1698, %v1876
        %v1956 = vsub.f32 %v1787, %v1876
        %v1957 = vsub.f32 %v1701, %v1879
        %v1958 = vsub.f32 %v1790, %v1879
        %v1959 = vsub.f32 %v1703, %v1882
        %v1960 = vsub.f32 %v1792, %v1882
        %v1961 = vsub.f32 %v1706, %v1885
        %v1962 = vsub.f32 %v1795, %v1885
        %v1963 = vsub.f32 %v1708, %v1888
        %v1964 = vsub.f32 %v1797, %v1888
        %v1965 = vsub.f32 %v1711, %v1891
        %v1966 = vsub.f32 %v1800, %v1891
        %v1967 = vsub.f32 %v1713, %v1894
        %v1968 = vsub.f32 %v1802, %v1894
        %v1969 = vsub.f32 %v1716, %v1897
        %v1970 = vsub.f32 %v1805, %v1897
        %v1971 = vsub.f32 %v1718, %v1900
        %v1972 = vsub.f32 %v1807, %v1900
        %v1973 = vsub.f32 %v1721, %v1903
        %v1974 = vsub.f32 %v1810, %v1903
        %v1975 = vsub.f32 %v1723, %v1906
        %v1976 = vsub.f32 %v1812, %v1906
        %v1977 = vsub.f32 %v1726, %v1909
        %v1978 = vsub.f32 %v1815, %v1909
        %v1979 = vsub.f32 %v1728, %v1912
        %v1980 = vsub.f32 %v1817, %v1912
        %v1981 = vsub.f32 %v1731, %v1915
        %v1982 = vsub.f32 %v1820, %v1915
        %v1983 = vsub.f32 %v1733, %v1918
        %v1984 = vsub.f32 %v1822, %v1918
        %v1985 = vsub.f32 %v1736, %v1921
        %v1986 = vsub.f32 %v1825, %v1921
        %v1987 = vsub.f32 %v1738, %v1924
        %v1988 = vsub.f32 %v1827, %v1924
        %v1989 = vmul.f32 %v1925, 1.442695
        %v1990 = vpow.pop %v1989
        %v1991 = vmul.f32 %v1926, 1.442695
        %v1992 = vpow.pop %v1991
        %v1993 = vmul.f32 %v1927, 1.442695
        %v1994 = vpow.pop %v1993
        %v1995 = vmul.f32 %v1928, 1.442695
        %v1996 = vpow.pop %v1995
        %v1997 = vmul.f32 %v1929, 1.442695
        %v1998 = vpow.pop %v1997
        %v1999 = vmul.f32 %v1930, 1.442695
        %v2000 = vpow.pop %v1999
        %v2001 = vmul.f32 %v1931, 1.442695
        %v2002 = vpow.pop %v2001
        %v2003 = vmul.f32 %v1932, 1.442695
        %v2004 = vpow.pop %v2003
        %v2005 = vmul.f32 %v1933, 1.442695
        %v2006 = vpow.pop %v2005
        %v2007 = vmul.f32 %v1934, 1.442695
        %v2008 = vpow.pop %v2007
        %v2009 = vmul.f32 %v1935, 1.442695
        %v2010 = vpow.pop %v2009
        %v2011 = vmul.f32 %v1936, 1.442695
        %v2012 = vpow.pop %v2011
        %v2013 = vmul.f32 %v1937, 1.442695
        %v2014 = vpow.pop %v2013
        %v2015 = vmul.f32 %v1938, 1.442695
        %v2016 = vpow.pop %v2015
        %v2017 = vmul.f32 %v1939, 1.442695
        %v2018 = vpow.pop %v2017
        %v2019 = vmul.f32 %v1940, 1.442695
        %v2020 = vpow.pop %v2019
        %v2021 = vmul.f32 %v1941, 1.442695
        %v2022 = vpow.pop %v2021
        %v2023 = vmul.f32 %v1942, 1.442695
        %v2024 = vpow.pop %v2023
        %v2025 = vmul.f32 %v1943, 1.442695
        %v2026 = vpow.pop %v2025
        %v2027 = vmul.f32 %v1944, 1.442695
        %v2028 = vpow.pop %v2027
        %v2029 = vmul.f32 %v1945, 1.442695
        %v2030 = vpow.pop %v2029
        %v2031 = vmul.f32 %v1946, 1.442695
        %v2032 = vpow.pop %v2031
        %v2033 = vmul.f32 %v1947, 1.442695
        %v2034 = vpow.pop %v2033
        %v2035 = vmul.f32 %v1948, 1.442695
        %v2036 = vpow.pop %v2035
        %v2037 = vmul.f32 %v1949, 1.442695
        %v2038 = vpow.pop %v2037
        %v2039 = vmul.f32 %v1950, 1.442695
        %v2040 = vpow.pop %v2039
        %v2041 = vmul.f32 %v1951, 1.442695
        %v2042 = vpow.pop %v2041
        %v2043 = vmul.f32 %v1952, 1.442695
        %v2044 = vpow.pop %v2043
        %v2045 = vmul.f32 %v1953, 1.442695
        %v2046 = vpow.pop %v2045
        %v2047 = vmul.f32 %v1954, 1.442695
        %v2048 = vpow.pop %v2047
        %v2049 = vmul.f32 %v1955, 1.442695
        %v2050 = vpow.pop %v2049
        %v2051 = vmul.f32 %v1956, 1.442695
        %v2052 = vpow.pop %v2051
        %v2053 = vmul.f32 %v1957, 1.442695
        %v2054 = vpow.pop %v2053
        %v2055 = vmul.f32 %v1958, 1.442695
        %v2056 = vpow.pop %v2055
        %v2057 = vmul.f32 %v1959, 1.442695
        %v2058 = vpow.pop %v2057
        %v2059 = vmul.f32 %v1960, 1.442695
        %v2060 = vpow.pop %v2059
        %v2061 = vmul.f32 %v1961, 1.442695
        %v2062 = vpow.pop %v2061
        %v2063 = vmul.f32 %v1962, 1.442695
        %v2064 = vpow.pop %v2063
        %v2065 = vmul.f32 %v1963, 1.442695
        %v2066 = vpow.pop %v2065
        %v2067 = vmul.f32 %v1964, 1.442695
        %v2068 = vpow.pop %v2067
        %v2069 = vmul.f32 %v1965, 1.442695
        %v2070 = vpow.pop %v2069
        %v2071 = vmul.f32 %v1966, 1.442695
        %v2072 = vpow.pop %v2071
        %v2073 = vmul.f32 %v1967, 1.442695
        %v2074 = vpow.pop %v2073
        %v2075 = vmul.f32 %v1968, 1.442695
        %v2076 = vpow.pop %v2075
        %v2077 = vmul.f32 %v1969, 1.442695
        %v2078 = vpow.pop %v2077
        %v2079 = vmul.f32 %v1970, 1.442695
        %v2080 = vpow.pop %v2079
        %v2081 = vmul.f32 %v1971, 1.442695
        %v2082 = vpow.pop %v2081
        %v2083 = vmul.f32 %v1972, 1.442695
        %v2084 = vpow.pop %v2083
        %v2085 = vmul.f32 %v1973, 1.442695
        %v2086 = vpow.pop %v2085
        %v2087 = vmul.f32 %v1974, 1.442695
        %v2088 = vpow.pop %v2087
        %v2089 = vmul.f32 %v1975, 1.442695
        %v2090 = vpow.pop %v2089
        %v2091 = vmul.f32 %v1976, 1.442695
        %v2092 = vpow.pop %v2091
        %v2093 = vmul.f32 %v1977, 1.442695
        %v2094 = vpow.pop %v2093
        %v2095 = vmul.f32 %v1978, 1.442695
        %v2096 = vpow.pop %v2095
        %v2097 = vmul.f32 %v1979, 1.442695
        %v2098 = vpow.pop %v2097
        %v2099 = vmul.f32 %v1980, 1.442695
        %v2100 = vpow.pop %v2099
        %v2101 = vmul.f32 %v1981, 1.442695
        %v2102 = vpow.pop %v2101
        %v2103 = vmul.f32 %v1982, 1.442695
        %v2104 = vpow.pop %v2103
        %v2105 = vmul.f32 %v1983, 1.442695
        %v2106 = vpow.pop %v2105
        %v2107 = vmul.f32 %v1984, 1.442695
        %v2108 = vpow.pop %v2107
        %v2109 = vmul.f32 %v1985, 1.442695
        %v2110 = vpow.pop %v2109
        %v2111 = vmul.f32 %v1986, 1.442695
        %v2112 = vpow.pop %v2111
        %v2113 = vmul.f32 %v1987, 1.442695
        %v2114 = vpow.pop %v2113
        %v2115 = vmul.f32 %v1988, 1.442695
        %v2116 = vpow.pop %v2115
        %v2117 = vadd.f32 %v1990, %v1992
        %2118 = vadd.xlane.f32.xlu0 %v2117
        %v2119 = vpop.xlane.xlu0 %2118
        %v2120 = vadd.f32 %v1994, %v1996
        %2121 = vadd.xlane.f32.xlu0 %v2120
        %v2122 = vpop.xlane.xlu0 %2121
        %v2123 = vadd.f32 %v1998, %v2000
        %2124 = vadd.xlane.f32.xlu0 %v2123
        %v2125 = vpop.xlane.xlu0 %2124
        %v2126 = vadd.f32 %v2002, %v2004
        %2127 = vadd.xlane.f32.xlu0 %v2126
        %v2128 = vpop.xlane.xlu0 %2127
        %v2129 = vadd.f32 %v2006, %v2008
        %2130 = vadd.xlane.f32.xlu0 %v2129
        %v2131 = vpop.xlane.xlu0 %2130
        %v2132 = vadd.f32 %v2010, %v2012
        %2133 = vadd.xlane.f32.xlu0 %v2132
        %v2134 = vpop.xlane.xlu0 %2133
        %v2135 = vadd.f32 %v2014, %v2016
        %2136 = vadd.xlane.f32.xlu0 %v2135
        %v2137 = vpop.xlane.xlu0 %2136
        %v2138 = vadd.f32 %v2018, %v2020
        %2139 = vadd.xlane.f32.xlu0 %v2138
        %v2140 = vpop.xlane.xlu0 %2139
        %v2141 = vadd.f32 %v2022, %v2024
        %2142 = vadd.xlane.f32.xlu0 %v2141
        %v2143 = vpop.xlane.xlu0 %2142
        %v2144 = vadd.f32 %v2026, %v2028
        %2145 = vadd.xlane.f32.xlu0 %v2144
        %v2146 = vpop.xlane.xlu0 %2145
        %v2147 = vadd.f32 %v2030, %v2032
        %2148 = vadd.xlane.f32.xlu0 %v2147
        %v2149 = vpop.xlane.xlu0 %2148
        %v2150 = vadd.f32 %v2034, %v2036
        %2151 = vadd.xlane.f32.xlu0 %v2150
        %v2152 = vpop.xlane.xlu0 %2151
        %v2153 = vadd.f32 %v2038, %v2040
        %2154 = vadd.xlane.f32.xlu0 %v2153
        %v2155 = vpop.xlane.xlu0 %2154
        %v2156 = vadd.f32 %v2042, %v2044
        %2157 = vadd.xlane.f32.xlu0 %v2156
        %v2158 = vpop.xlane.xlu0 %2157
        %v2159 = vadd.f32 %v2046, %v2048
        %2160 = vadd.xlane.f32.xlu0 %v2159
        %v2161 = vpop.xlane.xlu0 %2160
        %v2162 = vadd.f32 %v2050, %v2052
        %2163 = vadd.xlane.f32.xlu0 %v2162
        %v2164 = vpop.xlane.xlu0 %2163
        %v2165 = vadd.f32 %v2054, %v2056
        %2166 = vadd.xlane.f32.xlu0 %v2165
        %v2167 = vpop.xlane.xlu0 %2166
        %v2168 = vadd.f32 %v2058, %v2060
        %2169 = vadd.xlane.f32.xlu0 %v2168
        %v2170 = vpop.xlane.xlu0 %2169
        %v2171 = vadd.f32 %v2062, %v2064
        %2172 = vadd.xlane.f32.xlu0 %v2171
        %v2173 = vpop.xlane.xlu0 %2172
        %v2174 = vadd.f32 %v2066, %v2068
        %2175 = vadd.xlane.f32.xlu0 %v2174
        %v2176 = vpop.xlane.xlu0 %2175
        %v2177 = vadd.f32 %v2070, %v2072
        %2178 = vadd.xlane.f32.xlu0 %v2177
        %v2179 = vpop.xlane.xlu0 %2178
        %v2180 = vadd.f32 %v2074, %v2076
        %2181 = vadd.xlane.f32.xlu0 %v2180
        %v2182 = vpop.xlane.xlu0 %2181
        %v2183 = vadd.f32 %v2078, %v2080
        %2184 = vadd.xlane.f32.xlu0 %v2183
        %v2185 = vpop.xlane.xlu0 %2184
        %v2186 = vadd.f32 %v2082, %v2084
        %2187 = vadd.xlane.f32.xlu0 %v2186
        %v2188 = vpop.xlane.xlu0 %2187
        %v2189 = vadd.f32 %v2086, %v2088
        %2190 = vadd.xlane.f32.xlu0 %v2189
        %v2191 = vpop.xlane.xlu0 %2190
        %v2192 = vadd.f32 %v2090, %v2092
        %2193 = vadd.xlane.f32.xlu0 %v2192
        %v2194 = vpop.xlane.xlu0 %2193
        %v2195 = vadd.f32 %v2094, %v2096
        %2196 = vadd.xlane.f32.xlu0 %v2195
        %v2197 = vpop.xlane.xlu0 %2196
        %v2198 = vadd.f32 %v2098, %v2100
        %2199 = vadd.xlane.f32.xlu0 %v2198
        %v2200 = vpop.xlane.xlu0 %2199
        %v2201 = vadd.f32 %v2102, %v2104
        %2202 = vadd.xlane.f32.xlu0 %v2201
        %v2203 = vpop.xlane.xlu0 %2202
        %v2204 = vadd.f32 %v2106, %v2108
        %2205 = vadd.xlane.f32.xlu0 %v2204
        %v2206 = vpop.xlane.xlu0 %2205
        %v2207 = vadd.f32 %v2110, %v2112
        %2208 = vadd.xlane.f32.xlu0 %v2207
        %v2209 = vpop.xlane.xlu0 %2208
        %v2210 = vadd.f32 %v2114, %v2116
        %2211 = vadd.xlane.f32.xlu0 %v2210
        %v2212 = vpop.xlane.xlu0 %2211
        %v2213 = vrcp.pop %v2119
        %v2214 = vmul.f32 %v2119, %v2213
        %v2215 = vsub.f32 1.0, %v2214
        %v2216 = vmul.f32 %v2213, %v2215
        %v2217 = vadd.f32 %v2213, %v2216
        %vm2218 = vweird.f32 %v2119
        %vm2219 = vweird.f32 %v2213
        %vm2220 = vmor %vm2218, %vm2219
        %v2221 = vsel %vm2220, %v2213, %v2217
        %v2222 = vand.u32 2147483647, %v2119
        %vm2223 = vcmp.eq.f32.partialorder %v2222, 8.507059e+37
        %v2224 = vand.u32 %v2119, 2147483648
        %v2225 = vor.u32 1.1754944e-38, %v2224
        %v2226 = vsel %vm2223, %v2225, %v2221
        %v2227 = vrcp.pop %v2122
        %v2228 = vmul.f32 %v2122, %v2227
        %v2229 = vsub.f32 1.0, %v2228
        %v2230 = vmul.f32 %v2227, %v2229
        %v2231 = vadd.f32 %v2227, %v2230
        %vm2232 = vweird.f32 %v2122
        %vm2233 = vweird.f32 %v2227
        %vm2234 = vmor %vm2232, %vm2233
        %v2235 = vsel %vm2234, %v2227, %v2231
        %v2236 = vand.u32 2147483647, %v2122
        %vm2237 = vcmp.eq.f32.partialorder %v2236, 8.507059e+37
        %v2238 = vand.u32 %v2122, 2147483648
        %v2239 = vor.u32 1.1754944e-38, %v2238
        %v2240 = vsel %vm2237, %v2239, %v2235
        %v2241 = vrcp.pop %v2125
        %v2242 = vmul.f32 %v2125, %v2241
        %v2243 = vsub.f32 1.0, %v2242
        %v2244 = vmul.f32 %v2241, %v2243
        %v2245 = vadd.f32 %v2241, %v2244
        %vm2246 = vweird.f32 %v2125
        %vm2247 = vweird.f32 %v2241
        %vm2248 = vmor %vm2246, %vm2247
        %v2249 = vsel %vm2248, %v2241, %v2245
        %v2250 = vand.u32 2147483647, %v2125
        %vm2251 = vcmp.eq.f32.partialorder %v2250, 8.507059e+37
        %v2252 = vand.u32 %v2125, 2147483648
        %v2253 = vor.u32 1.1754944e-38, %v2252
        %v2254 = vsel %vm2251, %v2253, %v2249
        %v2255 = vrcp.pop %v2128
        %v2256 = vmul.f32 %v2128, %v2255
        %v2257 = vsub.f32 1.0, %v2256
        %v2258 = vmul.f32 %v2255, %v2257
        %v2259 = vadd.f32 %v2255, %v2258
        %vm2260 = vweird.f32 %v2128
        %vm2261 = vweird.f32 %v2255
        %vm2262 = vmor %vm2260, %vm2261
        %v2263 = vsel %vm2262, %v2255, %v2259
        %v2264 = vand.u32 2147483647, %v2128
        %vm2265 = vcmp.eq.f32.partialorder %v2264, 8.507059e+37
        %v2266 = vand.u32 %v2128, 2147483648
        %v2267 = vor.u32 1.1754944e-38, %v2266
        %v2268 = vsel %vm2265, %v2267, %v2263
        %v2269 = vrcp.pop %v2131
        %v2270 = vmul.f32 %v2131, %v2269
        %v2271 = vsub.f32 1.0, %v2270
        %v2272 = vmul.f32 %v2269, %v2271
        %v2273 = vadd.f32 %v2269, %v2272
        %vm2274 = vweird.f32 %v2131
        %vm2275 = vweird.f32 %v2269
        %vm2276 = vmor %vm2274, %vm2275
        %v2277 = vsel %vm2276, %v2269, %v2273
        %v2278 = vand.u32 2147483647, %v2131
        %vm2279 = vcmp.eq.f32.partialorder %v2278, 8.507059e+37
        %v2280 = vand.u32 %v2131, 2147483648
        %v2281 = vor.u32 1.1754944e-38, %v2280
        %v2282 = vsel %vm2279, %v2281, %v2277
        %v2283 = vrcp.pop %v2134
        %v2284 = vmul.f32 %v2134, %v2283
        %v2285 = vsub.f32 1.0, %v2284
        %v2286 = vmul.f32 %v2283, %v2285
        %v2287 = vadd.f32 %v2283, %v2286
        %vm2288 = vweird.f32 %v2134
        %vm2289 = vweird.f32 %v2283
        %vm2290 = vmor %vm2288, %vm2289
        %v2291 = vsel %vm2290, %v2283, %v2287
        %v2292 = vand.u32 2147483647, %v2134
        %vm2293 = vcmp.eq.f32.partialorder %v2292, 8.507059e+37
        %v2294 = vand.u32 %v2134, 2147483648
        %v2295 = vor.u32 1.1754944e-38, %v2294
        %v2296 = vsel %vm2293, %v2295, %v2291
        %v2297 = vrcp.pop %v2137
        %v2298 = vmul.f32 %v2137, %v2297
        %v2299 = vsub.f32 1.0, %v2298
        %v2300 = vmul.f32 %v2297, %v2299
        %v2301 = vadd.f32 %v2297, %v2300
        %vm2302 = vweird.f32 %v2137
        %vm2303 = vweird.f32 %v2297
        %vm2304 = vmor %vm2302, %vm2303
        %v2305 = vsel %vm2304, %v2297, %v2301
        %v2306 = vand.u32 2147483647, %v2137
        %vm2307 = vcmp.eq.f32.partialorder %v2306, 8.507059e+37
        %v2308 = vand.u32 %v2137, 2147483648
        %v2309 = vor.u32 1.1754944e-38, %v2308
        %v2310 = vsel %vm2307, %v2309, %v2305
        %v2311 = vrcp.pop %v2140
        %v2312 = vmul.f32 %v2140, %v2311
        %v2313 = vsub.f32 1.0, %v2312
        %v2314 = vmul.f32 %v2311, %v2313
        %v2315 = vadd.f32 %v2311, %v2314
        %vm2316 = vweird.f32 %v2140
        %vm2317 = vweird.f32 %v2311
        %vm2318 = vmor %vm2316, %vm2317
        %v2319 = vsel %vm2318, %v2311, %v2315
        %v2320 = vand.u32 2147483647, %v2140
        %vm2321 = vcmp.eq.f32.partialorder %v2320, 8.507059e+37
        %v2322 = vand.u32 %v2140, 2147483648
        %v2323 = vor.u32 1.1754944e-38, %v2322
        %v2324 = vsel %vm2321, %v2323, %v2319
        %v2325 = vrcp.pop %v2143
        %v2326 = vmul.f32 %v2143, %v2325
        %v2327 = vsub.f32 1.0, %v2326
        %v2328 = vmul.f32 %v2325, %v2327
        %v2329 = vadd.f32 %v2325, %v2328
        %vm2330 = vweird.f32 %v2143
        %vm2331 = vweird.f32 %v2325
        %vm2332 = vmor %vm2330, %vm2331
        %v2333 = vsel %vm2332, %v2325, %v2329
        %v2334 = vand.u32 2147483647, %v2143
        %vm2335 = vcmp.eq.f32.partialorder %v2334, 8.507059e+37
        %v2336 = vand.u32 %v2143, 2147483648
        %v2337 = vor.u32 1.1754944e-38, %v2336
        %v2338 = vsel %vm2335, %v2337, %v2333
        %v2339 = vrcp.pop %v2146
        %v2340 = vmul.f32 %v2146, %v2339
        %v2341 = vsub.f32 1.0, %v2340
        %v2342 = vmul.f32 %v2339, %v2341
        %v2343 = vadd.f32 %v2339, %v2342
        %vm2344 = vweird.f32 %v2146
        %vm2345 = vweird.f32 %v2339
        %vm2346 = vmor %vm2344, %vm2345
        %v2347 = vsel %vm2346, %v2339, %v2343
        %v2348 = vand.u32 2147483647, %v2146
        %vm2349 = vcmp.eq.f32.partialorder %v2348, 8.507059e+37
        %v2350 = vand.u32 %v2146, 2147483648
        %v2351 = vor.u32 1.1754944e-38, %v2350
        %v2352 = vsel %vm2349, %v2351, %v2347
        %v2353 = vrcp.pop %v2149
        %v2354 = vmul.f32 %v2149, %v2353
        %v2355 = vsub.f32 1.0, %v2354
        %v2356 = vmul.f32 %v2353, %v2355
        %v2357 = vadd.f32 %v2353, %v2356
        %vm2358 = vweird.f32 %v2149
        %vm2359 = vweird.f32 %v2353
        %vm2360 = vmor %vm2358, %vm2359
        %v2361 = vsel %vm2360, %v2353, %v2357
        %v2362 = vand.u32 2147483647, %v2149
        %vm2363 = vcmp.eq.f32.partialorder %v2362, 8.507059e+37
        %v2364 = vand.u32 %v2149, 2147483648
        %v2365 = vor.u32 1.1754944e-38, %v2364
        %v2366 = vsel %vm2363, %v2365, %v2361
        %v2367 = vrcp.pop %v2152
        %v2368 = vmul.f32 %v2152, %v2367
        %v2369 = vsub.f32 1.0, %v2368
        %v2370 = vmul.f32 %v2367, %v2369
        %v2371 = vadd.f32 %v2367, %v2370
        %vm2372 = vweird.f32 %v2152
        %vm2373 = vweird.f32 %v2367
        %vm2374 = vmor %vm2372, %vm2373
        %v2375 = vsel %vm2374, %v2367, %v2371
        %v2376 = vand.u32 2147483647, %v2152
        %vm2377 = vcmp.eq.f32.partialorder %v2376, 8.507059e+37
        %v2378 = vand.u32 %v2152, 2147483648
        %v2379 = vor.u32 1.1754944e-38, %v2378
        %v2380 = vsel %vm2377, %v2379, %v2375
        %v2381 = vrcp.pop %v2155
        %v2382 = vmul.f32 %v2155, %v2381
        %v2383 = vsub.f32 1.0, %v2382
        %v2384 = vmul.f32 %v2381, %v2383
        %v2385 = vadd.f32 %v2381, %v2384
        %vm2386 = vweird.f32 %v2155
        %vm2387 = vweird.f32 %v2381
        %vm2388 = vmor %vm2386, %vm2387
        %v2389 = vsel %vm2388, %v2381, %v2385
        %v2390 = vand.u32 2147483647, %v2155
        %vm2391 = vcmp.eq.f32.partialorder %v2390, 8.507059e+37
        %v2392 = vand.u32 %v2155, 2147483648
        %v2393 = vor.u32 1.1754944e-38, %v2392
        %v2394 = vsel %vm2391, %v2393, %v2389
        %v2395 = vrcp.pop %v2158
        %v2396 = vmul.f32 %v2158, %v2395
        %v2397 = vsub.f32 1.0, %v2396
        %v2398 = vmul.f32 %v2395, %v2397
        %v2399 = vadd.f32 %v2395, %v2398
        %vm2400 = vweird.f32 %v2158
        %vm2401 = vweird.f32 %v2395
        %vm2402 = vmor %vm2400, %vm2401
        %v2403 = vsel %vm2402, %v2395, %v2399
        %v2404 = vand.u32 2147483647, %v2158
        %vm2405 = vcmp.eq.f32.partialorder %v2404, 8.507059e+37
        %v2406 = vand.u32 %v2158, 2147483648
        %v2407 = vor.u32 1.1754944e-38, %v2406
        %v2408 = vsel %vm2405, %v2407, %v2403
        %v2409 = vrcp.pop %v2161
        %v2410 = vmul.f32 %v2161, %v2409
        %v2411 = vsub.f32 1.0, %v2410
        %v2412 = vmul.f32 %v2409, %v2411
        %v2413 = vadd.f32 %v2409, %v2412
        %vm2414 = vweird.f32 %v2161
        %vm2415 = vweird.f32 %v2409
        %vm2416 = vmor %vm2414, %vm2415
        %v2417 = vsel %vm2416, %v2409, %v2413
        %v2418 = vand.u32 2147483647, %v2161
        %vm2419 = vcmp.eq.f32.partialorder %v2418, 8.507059e+37
        %v2420 = vand.u32 %v2161, 2147483648
        %v2421 = vor.u32 1.1754944e-38, %v2420
        %v2422 = vsel %vm2419, %v2421, %v2417
        %v2423 = vrcp.pop %v2164
        %v2424 = vmul.f32 %v2164, %v2423
        %v2425 = vsub.f32 1.0, %v2424
        %v2426 = vmul.f32 %v2423, %v2425
        %v2427 = vadd.f32 %v2423, %v2426
        %vm2428 = vweird.f32 %v2164
        %vm2429 = vweird.f32 %v2423
        %vm2430 = vmor %vm2428, %vm2429
        %v2431 = vsel %vm2430, %v2423, %v2427
        %v2432 = vand.u32 2147483647, %v2164
        %vm2433 = vcmp.eq.f32.partialorder %v2432, 8.507059e+37
        %v2434 = vand.u32 %v2164, 2147483648
        %v2435 = vor.u32 1.1754944e-38, %v2434
        %v2436 = vsel %vm2433, %v2435, %v2431
        %v2437 = vrcp.pop %v2167
        %v2438 = vmul.f32 %v2167, %v2437
        %v2439 = vsub.f32 1.0, %v2438
        %v2440 = vmul.f32 %v2437, %v2439
        %v2441 = vadd.f32 %v2437, %v2440
        %vm2442 = vweird.f32 %v2167
        %vm2443 = vweird.f32 %v2437
        %vm2444 = vmor %vm2442, %vm2443
        %v2445 = vsel %vm2444, %v2437, %v2441
        %v2446 = vand.u32 2147483647, %v2167
        %vm2447 = vcmp.eq.f32.partialorder %v2446, 8.507059e+37
        %v2448 = vand.u32 %v2167, 2147483648
        %v2449 = vor.u32 1.1754944e-38, %v2448
        %v2450 = vsel %vm2447, %v2449, %v2445
        %v2451 = vrcp.pop %v2170
        %v2452 = vmul.f32 %v2170, %v2451
        %v2453 = vsub.f32 1.0, %v2452
        %v2454 = vmul.f32 %v2451, %v2453
        %v2455 = vadd.f32 %v2451, %v2454
        %vm2456 = vweird.f32 %v2170
        %vm2457 = vweird.f32 %v2451
        %vm2458 = vmor %vm2456, %vm2457
        %v2459 = vsel %vm2458, %v2451, %v2455
        %v2460 = vand.u32 2147483647, %v2170
        %vm2461 = vcmp.eq.f32.partialorder %v2460, 8.507059e+37
        %v2462 = vand.u32 %v2170, 2147483648
        %v2463 = vor.u32 1.1754944e-38, %v2462
        %v2464 = vsel %vm2461, %v2463, %v2459
        %v2465 = vrcp.pop %v2173
        %v2466 = vmul.f32 %v2173, %v2465
        %v2467 = vsub.f32 1.0, %v2466
        %v2468 = vmul.f32 %v2465, %v2467
        %v2469 = vadd.f32 %v2465, %v2468
        %vm2470 = vweird.f32 %v2173
        %vm2471 = vweird.f32 %v2465
        %vm2472 = vmor %vm2470, %vm2471
        %v2473 = vsel %vm2472, %v2465, %v2469
        %v2474 = vand.u32 2147483647, %v2173
        %vm2475 = vcmp.eq.f32.partialorder %v2474, 8.507059e+37
        %v2476 = vand.u32 %v2173, 2147483648
        %v2477 = vor.u32 1.1754944e-38, %v2476
        %v2478 = vsel %vm2475, %v2477, %v2473
        %v2479 = vrcp.pop %v2176
        %v2480 = vmul.f32 %v2176, %v2479
        %v2481 = vsub.f32 1.0, %v2480
        %v2482 = vmul.f32 %v2479, %v2481
        %v2483 = vadd.f32 %v2479, %v2482
        %vm2484 = vweird.f32 %v2176
        %vm2485 = vweird.f32 %v2479
        %vm2486 = vmor %vm2484, %vm2485
        %v2487 = vsel %vm2486, %v2479, %v2483
        %v2488 = vand.u32 2147483647, %v2176
        %vm2489 = vcmp.eq.f32.partialorder %v2488, 8.507059e+37
        %v2490 = vand.u32 %v2176, 2147483648
        %v2491 = vor.u32 1.1754944e-38, %v2490
        %v2492 = vsel %vm2489, %v2491, %v2487
        %v2493 = vrcp.pop %v2179
        %v2494 = vmul.f32 %v2179, %v2493
        %v2495 = vsub.f32 1.0, %v2494
        %v2496 = vmul.f32 %v2493, %v2495
        %v2497 = vadd.f32 %v2493, %v2496
        %vm2498 = vweird.f32 %v2179
        %vm2499 = vweird.f32 %v2493
        %vm2500 = vmor %vm2498, %vm2499
        %v2501 = vsel %vm2500, %v2493, %v2497
        %v2502 = vand.u32 2147483647, %v2179
        %vm2503 = vcmp.eq.f32.partialorder %v2502, 8.507059e+37
        %v2504 = vand.u32 %v2179, 2147483648
        %v2505 = vor.u32 1.1754944e-38, %v2504
        %v2506 = vsel %vm2503, %v2505, %v2501
        %v2507 = vrcp.pop %v2182
        %v2508 = vmul.f32 %v2182, %v2507
        %v2509 = vsub.f32 1.0, %v2508
        %v2510 = vmul.f32 %v2507, %v2509
        %v2511 = vadd.f32 %v2507, %v2510
        %vm2512 = vweird.f32 %v2182
        %vm2513 = vweird.f32 %v2507
        %vm2514 = vmor %vm2512, %vm2513
        %v2515 = vsel %vm2514, %v2507, %v2511
        %v2516 = vand.u32 2147483647, %v2182
        %vm2517 = vcmp.eq.f32.partialorder %v2516, 8.507059e+37
        %v2518 = vand.u32 %v2182, 2147483648
        %v2519 = vor.u32 1.1754944e-38, %v2518
        %v2520 = vsel %vm2517, %v2519, %v2515
        %v2521 = vrcp.pop %v2185
        %v2522 = vmul.f32 %v2185, %v2521
        %v2523 = vsub.f32 1.0, %v2522
        %v2524 = vmul.f32 %v2521, %v2523
        %v2525 = vadd.f32 %v2521, %v2524
        %vm2526 = vweird.f32 %v2185
        %vm2527 = vweird.f32 %v2521
        %vm2528 = vmor %vm2526, %vm2527
        %v2529 = vsel %vm2528, %v2521, %v2525
        %v2530 = vand.u32 2147483647, %v2185
        %vm2531 = vcmp.eq.f32.partialorder %v2530, 8.507059e+37
        %v2532 = vand.u32 %v2185, 2147483648
        %v2533 = vor.u32 1.1754944e-38, %v2532
        %v2534 = vsel %vm2531, %v2533, %v2529
        %v2535 = vrcp.pop %v2188
        %v2536 = vmul.f32 %v2188, %v2535
        %v2537 = vsub.f32 1.0, %v2536
        %v2538 = vmul.f32 %v2535, %v2537
        %v2539 = vadd.f32 %v2535, %v2538
        %vm2540 = vweird.f32 %v2188
        %vm2541 = vweird.f32 %v2535
        %vm2542 = vmor %vm2540, %vm2541
        %v2543 = vsel %vm2542, %v2535, %v2539
        %v2544 = vand.u32 2147483647, %v2188
        %vm2545 = vcmp.eq.f32.partialorder %v2544, 8.507059e+37
        %v2546 = vand.u32 %v2188, 2147483648
        %v2547 = vor.u32 1.1754944e-38, %v2546
        %v2548 = vsel %vm2545, %v2547, %v2543
        %v2549 = vrcp.pop %v2191
        %v2550 = vmul.f32 %v2191, %v2549
        %v2551 = vsub.f32 1.0, %v2550
        %v2552 = vmul.f32 %v2549, %v2551
        %v2553 = vadd.f32 %v2549, %v2552
        %vm2554 = vweird.f32 %v2191
        %vm2555 = vweird.f32 %v2549
        %vm2556 = vmor %vm2554, %vm2555
        %v2557 = vsel %vm2556, %v2549, %v2553
        %v2558 = vand.u32 2147483647, %v2191
        %vm2559 = vcmp.eq.f32.partialorder %v2558, 8.507059e+37
        %v2560 = vand.u32 %v2191, 2147483648
        %v2561 = vor.u32 1.1754944e-38, %v2560
        %v2562 = vsel %vm2559, %v2561, %v2557
        %v2563 = vrcp.pop %v2194
        %v2564 = vmul.f32 %v2194, %v2563
        %v2565 = vsub.f32 1.0, %v2564
        %v2566 = vmul.f32 %v2563, %v2565
        %v2567 = vadd.f32 %v2563, %v2566
        %vm2568 = vweird.f32 %v2194
        %vm2569 = vweird.f32 %v2563
        %vm2570 = vmor %vm2568, %vm2569
        %v2571 = vsel %vm2570, %v2563, %v2567
        %v2572 = vand.u32 2147483647, %v2194
        %vm2573 = vcmp.eq.f32.partialorder %v2572, 8.507059e+37
        %v2574 = vand.u32 %v2194, 2147483648
        %v2575 = vor.u32 1.1754944e-38, %v2574
        %v2576 = vsel %vm2573, %v2575, %v2571
        %v2577 = vrcp.pop %v2197
        %v2578 = vmul.f32 %v2197, %v2577
        %v2579 = vsub.f32 1.0, %v2578
        %v2580 = vmul.f32 %v2577, %v2579
        %v2581 = vadd.f32 %v2577, %v2580
        %vm2582 = vweird.f32 %v2197
        %vm2583 = vweird.f32 %v2577
        %vm2584 = vmor %vm2582, %vm2583
        %v2585 = vsel %vm2584, %v2577, %v2581
        %v2586 = vand.u32 2147483647, %v2197
        %vm2587 = vcmp.eq.f32.partialorder %v2586, 8.507059e+37
        %v2588 = vand.u32 %v2197, 2147483648
        %v2589 = vor.u32 1.1754944e-38, %v2588
        %v2590 = vsel %vm2587, %v2589, %v2585
        %v2591 = vrcp.pop %v2200
        %v2592 = vmul.f32 %v2200, %v2591
        %v2593 = vsub.f32 1.0, %v2592
        %v2594 = vmul.f32 %v2591, %v2593
        %v2595 = vadd.f32 %v2591, %v2594
        %vm2596 = vweird.f32 %v2200
        %vm2597 = vweird.f32 %v2591
        %vm2598 = vmor %vm2596, %vm2597
        %v2599 = vsel %vm2598, %v2591, %v2595
        %v2600 = vand.u32 2147483647, %v2200
        %vm2601 = vcmp.eq.f32.partialorder %v2600, 8.507059e+37
        %v2602 = vand.u32 %v2200, 2147483648
        %v2603 = vor.u32 1.1754944e-38, %v2602
        %v2604 = vsel %vm2601, %v2603, %v2599
        %v2605 = vrcp.pop %v2203
        %v2606 = vmul.f32 %v2203, %v2605
        %v2607 = vsub.f32 1.0, %v2606
        %v2608 = vmul.f32 %v2605, %v2607
        %v2609 = vadd.f32 %v2605, %v2608
        %vm2610 = vweird.f32 %v2203
        %vm2611 = vweird.f32 %v2605
        %vm2612 = vmor %vm2610, %vm2611
        %v2613 = vsel %vm2612, %v2605, %v2609
        %v2614 = vand.u32 2147483647, %v2203
        %vm2615 = vcmp.eq.f32.partialorder %v2614, 8.507059e+37
        %v2616 = vand.u32 %v2203, 2147483648
        %v2617 = vor.u32 1.1754944e-38, %v2616
        %v2618 = vsel %vm2615, %v2617, %v2613
        %v2619 = vrcp.pop %v2206
        %v2620 = vmul.f32 %v2206, %v2619
        %v2621 = vsub.f32 1.0, %v2620
        %v2622 = vmul.f32 %v2619, %v2621
        %v2623 = vadd.f32 %v2619, %v2622
        %vm2624 = vweird.f32 %v2206
        %vm2625 = vweird.f32 %v2619
        %vm2626 = vmor %vm2624, %vm2625
        %v2627 = vsel %vm2626, %v2619, %v2623
        %v2628 = vand.u32 2147483647, %v2206
        %vm2629 = vcmp.eq.f32.partialorder %v2628, 8.507059e+37
        %v2630 = vand.u32 %v2206, 2147483648
        %v2631 = vor.u32 1.1754944e-38, %v2630
        %v2632 = vsel %vm2629, %v2631, %v2627
        %v2633 = vrcp.pop %v2209
        %v2634 = vmul.f32 %v2209, %v2633
        %v2635 = vsub.f32 1.0, %v2634
        %v2636 = vmul.f32 %v2633, %v2635
        %v2637 = vadd.f32 %v2633, %v2636
        %vm2638 = vweird.f32 %v2209
        %vm2639 = vweird.f32 %v2633
        %vm2640 = vmor %vm2638, %vm2639
        %v2641 = vsel %vm2640, %v2633, %v2637
        %v2642 = vand.u32 2147483647, %v2209
        %vm2643 = vcmp.eq.f32.partialorder %v2642, 8.507059e+37
        %v2644 = vand.u32 %v2209, 2147483648
        %v2645 = vor.u32 1.1754944e-38, %v2644
        %v2646 = vsel %vm2643, %v2645, %v2641
        %v2647 = vrcp.pop %v2212
        %v2648 = vmul.f32 %v2212, %v2647
        %v2649 = vsub.f32 1.0, %v2648
        %v2650 = vmul.f32 %v2647, %v2649
        %v2651 = vadd.f32 %v2647, %v2650
        %vm2652 = vweird.f32 %v2212
        %vm2653 = vweird.f32 %v2647
        %vm2654 = vmor %vm2652, %vm2653
        %v2655 = vsel %vm2654, %v2647, %v2651
        %v2656 = vand.u32 2147483647, %v2212
        %vm2657 = vcmp.eq.f32.partialorder %v2656, 8.507059e+37
        %v2658 = vand.u32 %v2212, 2147483648
        %v2659 = vor.u32 1.1754944e-38, %v2658
        %v2660 = vsel %vm2657, %v2659, %v2655
        %v2661 = vmul.f32 %v1990, %v2226
        %v2662 = vmul.f32 %v1992, %v2226
        %v2663 = vmul.f32 %v1994, %v2240
        %v2664 = vmul.f32 %v1996, %v2240
        %v2665 = vmul.f32 %v1998, %v2254
        %v2666 = vmul.f32 %v2000, %v2254
        %v2667 = vmul.f32 %v2002, %v2268
        %v2668 = vmul.f32 %v2004, %v2268
        %v2669 = vmul.f32 %v2006, %v2282
        %v2670 = vmul.f32 %v2008, %v2282
        %v2671 = vmul.f32 %v2010, %v2296
        %v2672 = vmul.f32 %v2012, %v2296
        %v2673 = vmul.f32 %v2014, %v2310
        %v2674 = vmul.f32 %v2016, %v2310
        %v2675 = vmul.f32 %v2018, %v2324
        %v2676 = vmul.f32 %v2020, %v2324
        %v2677 = vmul.f32 %v2022, %v2338
        %v2678 = vmul.f32 %v2024, %v2338
        %v2679 = vmul.f32 %v2026, %v2352
        %v2680 = vmul.f32 %v2028, %v2352
        %v2681 = vmul.f32 %v2030, %v2366
        %v2682 = vmul.f32 %v2032, %v2366
        %v2683 = vmul.f32 %v2034, %v2380
        %v2684 = vmul.f32 %v2036, %v2380
        %v2685 = vmul.f32 %v2038, %v2394
        %v2686 = vmul.f32 %v2040, %v2394
        %v2687 = vmul.f32 %v2042, %v2408
        %v2688 = vmul.f32 %v2044, %v2408
        %v2689 = vmul.f32 %v2046, %v2422
        %v2690 = vmul.f32 %v2048, %v2422
        %v2691 = vmul.f32 %v2050, %v2436
        %v2692 = vmul.f32 %v2052, %v2436
        %v2693 = vmul.f32 %v2054, %v2450
        %v2694 = vmul.f32 %v2056, %v2450
        %v2695 = vmul.f32 %v2058, %v2464
        %v2696 = vmul.f32 %v2060, %v2464
        %v2697 = vmul.f32 %v2062, %v2478
        %v2698 = vmul.f32 %v2064, %v2478
        %v2699 = vmul.f32 %v2066, %v2492
        %v2700 = vmul.f32 %v2068, %v2492
        %v2701 = vmul.f32 %v2070, %v2506
        %v2702 = vmul.f32 %v2072, %v2506
        %v2703 = vmul.f32 %v2074, %v2520
        %v2704 = vmul.f32 %v2076, %v2520
        %v2705 = vmul.f32 %v2078, %v2534
        %v2706 = vmul.f32 %v2080, %v2534
        %v2707 = vmul.f32 %v2082, %v2548
        %v2708 = vmul.f32 %v2084, %v2548
        %v2709 = vmul.f32 %v2086, %v2562
        %v2710 = vmul.f32 %v2088, %v2562
        %v2711 = vmul.f32 %v2090, %v2576
        %v2712 = vmul.f32 %v2092, %v2576
        %v2713 = vmul.f32 %v2094, %v2590
        %v2714 = vmul.f32 %v2096, %v2590
        %v2715 = vmul.f32 %v2098, %v2604
        %v2716 = vmul.f32 %v2100, %v2604
        %v2717 = vmul.f32 %v2102, %v2618
        %v2718 = vmul.f32 %v2104, %v2618
        %v2719 = vmul.f32 %v2106, %v2632
        %v2720 = vmul.f32 %v2108, %v2632
        %v2721 = vmul.f32 %v2110, %v2646
        %v2722 = vmul.f32 %v2112, %v2646
        %v2723 = vmul.f32 %v2114, %v2660
        %v2724 = vmul.f32 %v2116, %v2660
        %v2725 = vpack.c.bf16 %v2663, %v2661
        %v2726 = vpack.c.bf16 %v2664, %v2662
        %v2727 = vpack.c.bf16 %v2667, %v2665
        %v2728 = vpack.c.bf16 %v2668, %v2666
        %v2729 = vpack.c.bf16 %v2671, %v2669
        %v2730 = vpack.c.bf16 %v2672, %v2670
        %v2731 = vpack.c.bf16 %v2675, %v2673
        %v2732 = vpack.c.bf16 %v2676, %v2674
        %v2733 = vpack.c.bf16 %v2679, %v2677
        %v2734 = vpack.c.bf16 %v2680, %v2678
        %v2735 = vpack.c.bf16 %v2683, %v2681
        %v2736 = vpack.c.bf16 %v2684, %v2682
        %v2737 = vpack.c.bf16 %v2687, %v2685
        %v2738 = vpack.c.bf16 %v2688, %v2686
        %v2739 = vpack.c.bf16 %v2691, %v2689
        %v2740 = vpack.c.bf16 %v2692, %v2690
        %v2741 = vpack.c.bf16 %v2695, %v2693
        %v2742 = vpack.c.bf16 %v2696, %v2694
        %v2743 = vpack.c.bf16 %v2699, %v2697
        %v2744 = vpack.c.bf16 %v2700, %v2698
        %v2745 = vpack.c.bf16 %v2703, %v2701
        %v2746 = vpack.c.bf16 %v2704, %v2702
        %v2747 = vpack.c.bf16 %v2707, %v2705
        %v2748 = vpack.c.bf16 %v2708, %v2706
        %v2749 = vpack.c.bf16 %v2711, %v2709
        %v2750 = vpack.c.bf16 %v2712, %v2710
        %v2751 = vpack.c.bf16 %v2715, %v2713
        %v2752 = vpack.c.bf16 %v2716, %v2714
        %v2753 = vpack.c.bf16 %v2719, %v2717
        %v2754 = vpack.c.bf16 %v2720, %v2718
        %v2755 = vpack.c.bf16 %v2723, %v2721
        %v2756 = vpack.c.bf16 %v2724, %v2722
        %v2789 = vunpack.c.l.b16 %v1386
        %v2790 = vunpack.c.l.b16 %v1387
        %v2791 = vunpack.c.l.b16 %v1388
        %v2792 = vunpack.c.l.b16 %v1389
        %v2793 = vunpack.c.l.b16 %v1390
        %v2794 = vunpack.c.l.b16 %v1391
        %v2795 = vunpack.c.l.b16 %v1392
        %v2796 = vunpack.c.l.b16 %v1393
        %v2797 = vunpack.c.l.b16 %v1394
        %v2798 = vunpack.c.l.b16 %v1395
        %v2799 = vunpack.c.l.b16 %v1396
        %v2800 = vunpack.c.l.b16 %v1397
        %v2801 = vunpack.c.l.b16 %v1398
        %v2802 = vunpack.c.l.b16 %v1399
        %v2803 = vunpack.c.l.b16 %v1400
        %v2804 = vunpack.c.l.b16 %v1401
        %v2805 = vunpack.c.l.b16 %v1402
        %v2806 = vunpack.c.l.b16 %v1403
        %v2807 = vunpack.c.l.b16 %v1404
        %v2808 = vunpack.c.l.b16 %v1405
        %v2809 = vunpack.c.l.b16 %v1406
        %v2810 = vunpack.c.l.b16 %v1407
        %v2811 = vunpack.c.l.b16 %v1408
        %v2812 = vunpack.c.l.b16 %v1409
        %v2813 = vunpack.c.l.b16 %v1410
        %v2814 = vunpack.c.l.b16 %v1411
        %v2815 = vunpack.c.l.b16 %v1412
        %v2816 = vunpack.c.l.b16 %v1413
        %v2817 = vunpack.c.l.b16 %v1414
        %v2818 = vunpack.c.l.b16 %v1415
        %v2819 = vunpack.c.l.b16 %v1416
        %v2820 = vunpack.c.l.b16 %v1417
        %v2821 = vpack.c.b16 %v2790, %v2789
        %v2822 = vpack.c.b16 %v2792, %v2791
        %v2823 = vpack.c.b16 %v2794, %v2793
        %v2824 = vpack.c.b16 %v2796, %v2795
        %v2825 = vpack.c.b16 %v2798, %v2797
        %v2826 = vpack.c.b16 %v2800, %v2799
        %v2827 = vpack.c.b16 %v2802, %v2801
        %v2828 = vpack.c.b16 %v2804, %v2803
        %v2829 = vpack.c.b16 %v2806, %v2805
        %v2830 = vpack.c.b16 %v2808, %v2807
        %v2831 = vpack.c.b16 %v2810, %v2809
        %v2832 = vpack.c.b16 %v2812, %v2811
        %v2833 = vpack.c.b16 %v2814, %v2813
        %v2834 = vpack.c.b16 %v2816, %v2815
        %v2835 = vpack.c.b16 %v2818, %v2817
        %v2836 = vpack.c.b16 %v2820, %v2819
        %2853 = vmatpush.bf16.msra.mxu0 %v2828
        %2854 = vmatpush.bf16.msra.mxu0 %v2827
        %2855 = vmatpush.bf16.msra.mxu0 %v2826
        %2856 = vmatpush.bf16.msra.mxu0 %v2825
        %2857 = vmatpush.bf16.msra.mxu0 %v2824
        %2858 = vmatpush.bf16.msra.mxu0 %v2823
        %2859 = vmatpush.bf16.msra.mxu0 %v2822
        %2860 = vmatpush.bf16.msra.mxu0 %v2821
        %2861 = vmatmul.bf16.gmra.mxu0 %v2725
        %v2862 = vpop.f32.mrf.mxu0
        %v2863 = vadd.f32 0.0, %v2862
        %v2864 = vpop.f32.mrf.mxu0
        %v2865 = vadd.f32 0.0, %v2864
        %2866 = vmatmul.bf16.gmra.mxu0 %v2727
        %v2867 = vpop.f32.mrf.mxu0
        %v2868 = vadd.f32 0.0, %v2867
        %v2869 = vpop.f32.mrf.mxu0
        %v2870 = vadd.f32 0.0, %v2869
        %2871 = vmatmul.bf16.gmra.mxu0 %v2729
        %v2872 = vpop.f32.mrf.mxu0
        %v2873 = vadd.f32 0.0, %v2872
        %v2874 = vpop.f32.mrf.mxu0
        %v2875 = vadd.f32 0.0, %v2874
        %2876 = vmatmul.bf16.gmra.mxu0 %v2731
        %v2877 = vpop.f32.mrf.mxu0
        %v2878 = vadd.f32 0.0, %v2877
        %v2879 = vpop.f32.mrf.mxu0
        %v2880 = vadd.f32 0.0, %v2879
        %2881 = vmatmul.bf16.gmra.mxu0 %v2733
        %v2882 = vpop.f32.mrf.mxu0
        %v2883 = vadd.f32 0.0, %v2882
        %v2884 = vpop.f32.mrf.mxu0
        %v2885 = vadd.f32 0.0, %v2884
        %2886 = vmatmul.bf16.gmra.mxu0 %v2735
        %v2887 = vpop.f32.mrf.mxu0
        %v2888 = vadd.f32 0.0, %v2887
        %v2889 = vpop.f32.mrf.mxu0
        %v2890 = vadd.f32 0.0, %v2889
        %2891 = vmatmul.bf16.gmra.mxu0 %v2737
        %v2892 = vpop.f32.mrf.mxu0
        %v2893 = vadd.f32 0.0, %v2892
        %v2894 = vpop.f32.mrf.mxu0
        %v2895 = vadd.f32 0.0, %v2894
        %2896 = vmatmul.bf16.gmra.mxu0 %v2739
        %v2897 = vpop.f32.mrf.mxu0
        %v2898 = vadd.f32 0.0, %v2897
        %v2899 = vpop.f32.mrf.mxu0
        %v2900 = vadd.f32 0.0, %v2899
        %2901 = vmatmul.bf16.gmra.mxu0 %v2741
        %v2902 = vpop.f32.mrf.mxu0
        %v2903 = vadd.f32 0.0, %v2902
        %v2904 = vpop.f32.mrf.mxu0
        %v2905 = vadd.f32 0.0, %v2904
        %2906 = vmatmul.bf16.gmra.mxu0 %v2743
        %v2907 = vpop.f32.mrf.mxu0
        %v2908 = vadd.f32 0.0, %v2907
        %v2909 = vpop.f32.mrf.mxu0
        %v2910 = vadd.f32 0.0, %v2909
        %2911 = vmatmul.bf16.gmra.mxu0 %v2745
        %v2912 = vpop.f32.mrf.mxu0
        %v2913 = vadd.f32 0.0, %v2912
        %v2914 = vpop.f32.mrf.mxu0
        %v2915 = vadd.f32 0.0, %v2914
        %2916 = vmatmul.bf16.gmra.mxu0 %v2747
        %v2917 = vpop.f32.mrf.mxu0
        %v2918 = vadd.f32 0.0, %v2917
        %v2919 = vpop.f32.mrf.mxu0
        %v2920 = vadd.f32 0.0, %v2919
        %2921 = vmatmul.bf16.gmra.mxu0 %v2749
        %v2922 = vpop.f32.mrf.mxu0
        %v2923 = vadd.f32 0.0, %v2922
        %v2924 = vpop.f32.mrf.mxu0
        %v2925 = vadd.f32 0.0, %v2924
        %2926 = vmatmul.bf16.gmra.mxu0 %v2751
        %v2927 = vpop.f32.mrf.mxu0
        %v2928 = vadd.f32 0.0, %v2927
        %v2929 = vpop.f32.mrf.mxu0
        %v2930 = vadd.f32 0.0, %v2929
        %2931 = vmatmul.bf16.gmra.mxu0 %v2753
        %v2932 = vpop.f32.mrf.mxu0
        %v2933 = vadd.f32 0.0, %v2932
        %v2934 = vpop.f32.mrf.mxu0
        %v2935 = vadd.f32 0.0, %v2934
        %2936 = vmatmul.bf16.gmra.mxu0 %v2755
        %v2937 = vpop.f32.mrf.mxu0
        %v2938 = vadd.f32 0.0, %v2937
        %v2939 = vpop.f32.mrf.mxu0
        %v2940 = vadd.f32 0.0, %v2939
        %2941 = vdwg.mxu0
        %2942 = vmatpush.bf16.msra.mxu0 %v2836
        %2943 = vmatpush.bf16.msra.mxu0 %v2835
        %2944 = vmatpush.bf16.msra.mxu0 %v2834
        %2945 = vmatpush.bf16.msra.mxu0 %v2833
        %2946 = vmatpush.bf16.msra.mxu0 %v2832
        %2947 = vmatpush.bf16.msra.mxu0 %v2831
        %2948 = vmatpush.bf16.msra.mxu0 %v2830
        %2949 = vmatpush.bf16.msra.mxu0 %v2829
        %2950 = vmatmul.bf16.gmra.mxu0 %v2726
        %v2951 = vpop.f32.mrf.mxu0
        %v2952 = vadd.f32 %v2863, %v2951
        %v2953 = vpop.f32.mrf.mxu0
        %v2954 = vadd.f32 %v2865, %v2953
        %2955 = vmatmul.bf16.gmra.mxu0 %v2728
        %v2956 = vpop.f32.mrf.mxu0
        %v2957 = vadd.f32 %v2868, %v2956
        %v2958 = vpop.f32.mrf.mxu0
        %v2959 = vadd.f32 %v2870, %v2958
        %2960 = vmatmul.bf16.gmra.mxu0 %v2730
        %v2961 = vpop.f32.mrf.mxu0
        %v2962 = vadd.f32 %v2873, %v2961
        %v2963 = vpop.f32.mrf.mxu0
        %v2964 = vadd.f32 %v2875, %v2963
        %2965 = vmatmul.bf16.gmra.mxu0 %v2732
        %v2966 = vpop.f32.mrf.mxu0
        %v2967 = vadd.f32 %v2878, %v2966
        %v2968 = vpop.f32.mrf.mxu0
        %v2969 = vadd.f32 %v2880, %v2968
        %2970 = vmatmul.bf16.gmra.mxu0 %v2734
        %v2971 = vpop.f32.mrf.mxu0
        %v2972 = vadd.f32 %v2883, %v2971
        %v2973 = vpop.f32.mrf.mxu0
        %v2974 = vadd.f32 %v2885, %v2973
        %2975 = vmatmul.bf16.gmra.mxu0 %v2736
        %v2976 = vpop.f32.mrf.mxu0
        %v2977 = vadd.f32 %v2888, %v2976
        %v2978 = vpop.f32.mrf.mxu0
        %v2979 = vadd.f32 %v2890, %v2978
        %2980 = vmatmul.bf16.gmra.mxu0 %v2738
        %v2981 = vpop.f32.mrf.mxu0
        %v2982 = vadd.f32 %v2893, %v2981
        %v2983 = vpop.f32.mrf.mxu0
        %v2984 = vadd.f32 %v2895, %v2983
        %2985 = vmatmul.bf16.gmra.mxu0 %v2740
        %v2986 = vpop.f32.mrf.mxu0
        %v2987 = vadd.f32 %v2898, %v2986
        %v2988 = vpop.f32.mrf.mxu0
        %v2989 = vadd.f32 %v2900, %v2988
        %2990 = vmatmul.bf16.gmra.mxu0 %v2742
        %v2991 = vpop.f32.mrf.mxu0
        %v2992 = vadd.f32 %v2903, %v2991
        %v2993 = vpop.f32.mrf.mxu0
        %v2994 = vadd.f32 %v2905, %v2993
        %2995 = vmatmul.bf16.gmra.mxu0 %v2744
        %v2996 = vpop.f32.mrf.mxu0
        %v2997 = vadd.f32 %v2908, %v2996
        %v2998 = vpop.f32.mrf.mxu0
        %v2999 = vadd.f32 %v2910, %v2998
        %3000 = vmatmul.bf16.gmra.mxu0 %v2746
        %v3001 = vpop.f32.mrf.mxu0
        %v3002 = vadd.f32 %v2913, %v3001
        %v3003 = vpop.f32.mrf.mxu0
        %v3004 = vadd.f32 %v2915, %v3003
        %3005 = vmatmul.bf16.gmra.mxu0 %v2748
        %v3006 = vpop.f32.mrf.mxu0
        %v3007 = vadd.f32 %v2918, %v3006
        %v3008 = vpop.f32.mrf.mxu0
        %v3009 = vadd.f32 %v2920, %v3008
        %3010 = vmatmul.bf16.gmra.mxu0 %v2750
        %v3011 = vpop.f32.mrf.mxu0
        %v3012 = vadd.f32 %v2923, %v3011
        %v3013 = vpop.f32.mrf.mxu0
        %v3014 = vadd.f32 %v2925, %v3013
        %3015 = vmatmul.bf16.gmra.mxu0 %v2752
        %v3016 = vpop.f32.mrf.mxu0
        %v3017 = vadd.f32 %v2928, %v3016
        %v3018 = vpop.f32.mrf.mxu0
        %v3019 = vadd.f32 %v2930, %v3018
        %3020 = vmatmul.bf16.gmra.mxu0 %v2754
        %v3021 = vpop.f32.mrf.mxu0
        %v3022 = vadd.f32 %v2933, %v3021
        %v3023 = vpop.f32.mrf.mxu0
        %v3024 = vadd.f32 %v2935, %v3023
        %3025 = vmatmul.bf16.gmra.mxu0 %v2756
        %v3026 = vpop.f32.mrf.mxu0
        %v3027 = vadd.f32 %v2938, %v3026
        %v3028 = vpop.f32.mrf.mxu0
        %v3029 = vadd.f32 %v2940, %v3028
        %3030 = vdwg.mxu0
        %v3031 = vpack.c.bf16 %v2952, %v2952
        %v3032 = vpack.c.bf16 %v2954, %v2954
        %v3033 = vpack.c.bf16 %v2957, %v2957
        %v3034 = vpack.c.bf16 %v2959, %v2959
        %v3035 = vpack.c.bf16 %v2962, %v2962
        %v3036 = vpack.c.bf16 %v2964, %v2964
        %v3037 = vpack.c.bf16 %v2967, %v2967
        %v3038 = vpack.c.bf16 %v2969, %v2969
        %v3039 = vpack.c.bf16 %v2972, %v2972
        %v3040 = vpack.c.bf16 %v2974, %v2974
        %v3041 = vpack.c.bf16 %v2977, %v2977
        %v3042 = vpack.c.bf16 %v2979, %v2979
        %v3043 = vpack.c.bf16 %v2982, %v2982
        %v3044 = vpack.c.bf16 %v2984, %v2984
        %v3045 = vpack.c.bf16 %v2987, %v2987
        %v3046 = vpack.c.bf16 %v2989, %v2989
        %v3047 = vpack.c.bf16 %v2992, %v2992
        %v3048 = vpack.c.bf16 %v2994, %v2994
        %v3049 = vpack.c.bf16 %v2997, %v2997
        %v3050 = vpack.c.bf16 %v2999, %v2999
        %v3051 = vpack.c.bf16 %v3002, %v3002
        %v3052 = vpack.c.bf16 %v3004, %v3004
        %v3053 = vpack.c.bf16 %v3007, %v3007
        %v3054 = vpack.c.bf16 %v3009, %v3009
        %v3055 = vpack.c.bf16 %v3012, %v3012
        %v3056 = vpack.c.bf16 %v3014, %v3014
        %v3057 = vpack.c.bf16 %v3017, %v3017
        %v3058 = vpack.c.bf16 %v3019, %v3019
        %v3059 = vpack.c.bf16 %v3022, %v3022
        %v3060 = vpack.c.bf16 %v3024, %v3024
        %v3061 = vpack.c.bf16 %v3027, %v3027
        %v3062 = vpack.c.bf16 %v3029, %v3029
        %s3063 = scalar_lea.vmem [#allocation2], 128
        %v3064 = vld [vmem:[%s3063] sm:$0xf]
        %v3065 = vld [vmem:[%s3063 + $0x4] sm:$0xf]
        %v3066 = vld [vmem:[%s3063 + $0x8] sm:$0xf]
        %v3067 = vld [vmem:[%s3063 + $0xc] sm:$0xf]
        %v3068 = vld [vmem:[%s3063 + $0x10] sm:$0xf]
        %v3069 = vld [vmem:[%s3063 + $0x14] sm:$0xf]
        %v3070 = vld [vmem:[%s3063 + $0x18] sm:$0xf]
        %v3071 = vld [vmem:[%s3063 + $0x1c] sm:$0xf]
        %v3072 = vld [vmem:[%s3063 + $0x20] sm:$0xf]
        %v3073 = vld [vmem:[%s3063 + $0x24] sm:$0xf]
        %v3074 = vld [vmem:[%s3063 + $0x28] sm:$0xf]
        %v3075 = vld [vmem:[%s3063 + $0x2c] sm:$0xf]
        %v3076 = vld [vmem:[%s3063 + $0x30] sm:$0xf]
        %v3077 = vld [vmem:[%s3063 + $0x34] sm:$0xf]
        %v3078 = vld [vmem:[%s3063 + $0x38] sm:$0xf]
        %v3079 = vld [vmem:[%s3063 + $0x3c] sm:$0xf]
        %v3080 = vld [vmem:[%s3063 + $0x40] sm:$0xf]
        %v3081 = vld [vmem:[%s3063 + $0x44] sm:$0xf]
        %v3082 = vld [vmem:[%s3063 + $0x48] sm:$0xf]
        %v3083 = vld [vmem:[%s3063 + $0x4c] sm:$0xf]
        %v3084 = vld [vmem:[%s3063 + $0x50] sm:$0xf]
        %v3085 = vld [vmem:[%s3063 + $0x54] sm:$0xf]
        %v3086 = vld [vmem:[%s3063 + $0x58] sm:$0xf]
        %v3087 = vld [vmem:[%s3063 + $0x5c] sm:$0xf]
        %v3088 = vld [vmem:[%s3063 + $0x60] sm:$0xf]
        %v3089 = vld [vmem:[%s3063 + $0x64] sm:$0xf]
        %v3090 = vld [vmem:[%s3063 + $0x68] sm:$0xf]
        %v3091 = vld [vmem:[%s3063 + $0x6c] sm:$0xf]
        %v3092 = vld [vmem:[%s3063 + $0x70] sm:$0xf]
        %v3093 = vld [vmem:[%s3063 + $0x74] sm:$0xf]
        %v3094 = vld [vmem:[%s3063 + $0x78] sm:$0xf]
        %v3095 = vld [vmem:[%s3063 + $0x7c] sm:$0xf]
        %s3096 = scalar_lea.vmem [#allocation3], 128
        %v3097 = vld [vmem:[%s3096] sm:$0xf]
        %v3098 = vld [vmem:[%s3096 + $0x4] sm:$0xf]
        %v3099 = vld [vmem:[%s3096 + $0x8] sm:$0xf]
        %v3100 = vld [vmem:[%s3096 + $0xc] sm:$0xf]
        %v3101 = vld [vmem:[%s3096 + $0x10] sm:$0xf]
        %v3102 = vld [vmem:[%s3096 + $0x14] sm:$0xf]
        %v3103 = vld [vmem:[%s3096 + $0x18] sm:$0xf]
        %v3104 = vld [vmem:[%s3096 + $0x1c] sm:$0xf]
        %v3105 = vld [vmem:[%s3096 + $0x20] sm:$0xf]
        %v3106 = vld [vmem:[%s3096 + $0x24] sm:$0xf]
        %v3107 = vld [vmem:[%s3096 + $0x28] sm:$0xf]
        %v3108 = vld [vmem:[%s3096 + $0x2c] sm:$0xf]
        %v3109 = vld [vmem:[%s3096 + $0x30] sm:$0xf]
        %v3110 = vld [vmem:[%s3096 + $0x34] sm:$0xf]
        %v3111 = vld [vmem:[%s3096 + $0x38] sm:$0xf]
        %v3112 = vld [vmem:[%s3096 + $0x3c] sm:$0xf]
        %v3113 = vld [vmem:[%s3096 + $0x40] sm:$0xf]
        %v3114 = vld [vmem:[%s3096 + $0x44] sm:$0xf]
        %v3115 = vld [vmem:[%s3096 + $0x48] sm:$0xf]
        %v3116 = vld [vmem:[%s3096 + $0x4c] sm:$0xf]
        %v3117 = vld [vmem:[%s3096 + $0x50] sm:$0xf]
        %v3118 = vld [vmem:[%s3096 + $0x54] sm:$0xf]
        %v3119 = vld [vmem:[%s3096 + $0x58] sm:$0xf]
        %v3120 = vld [vmem:[%s3096 + $0x5c] sm:$0xf]
        %v3121 = vld [vmem:[%s3096 + $0x60] sm:$0xf]
        %v3122 = vld [vmem:[%s3096 + $0x64] sm:$0xf]
        %v3123 = vld [vmem:[%s3096 + $0x68] sm:$0xf]
        %v3124 = vld [vmem:[%s3096 + $0x6c] sm:$0xf]
        %v3125 = vld [vmem:[%s3096 + $0x70] sm:$0xf]
        %v3126 = vld [vmem:[%s3096 + $0x74] sm:$0xf]
        %v3127 = vld [vmem:[%s3096 + $0x78] sm:$0xf]
        %v3128 = vld [vmem:[%s3096 + $0x7c] sm:$0xf]
        %3129 = vrot.lane.b32.xlu0 %v1450, 64
        %v3130 = vpop.permute.xlu0 %3129
        %3131 = vrot.lane.b32.xlu0 %v1451, 64
        %v3132 = vpop.permute.xlu0 %3131
        %3133 = vrot.lane.b32.xlu0 %v1452, 64
        %v3134 = vpop.permute.xlu0 %3133
        %3135 = vrot.lane.b32.xlu0 %v1453, 64
        %v3136 = vpop.permute.xlu0 %3135
        %3137 = vrot.lane.b32.xlu0 %v1454, 64
        %v3138 = vpop.permute.xlu0 %3137
        %3139 = vrot.lane.b32.xlu0 %v1455, 64
        %v3140 = vpop.permute.xlu0 %3139
        %3141 = vrot.lane.b32.xlu0 %v1456, 64
        %v3142 = vpop.permute.xlu0 %3141
        %3143 = vrot.lane.b32.xlu0 %v1457, 64
        %v3144 = vpop.permute.xlu0 %3143
        %3145 = vrot.lane.b32.xlu0 %v1459, 64
        %v3146 = vpop.permute.xlu0 %3145
        %3147 = vrot.lane.b32.xlu0 %v1461, 64
        %v3148 = vpop.permute.xlu0 %3147
        %3149 = vrot.lane.b32.xlu0 %v1463, 64
        %v3150 = vpop.permute.xlu0 %3149
        %3151 = vrot.lane.b32.xlu0 %v1465, 64
        %v3152 = vpop.permute.xlu0 %3151
        %3153 = vrot.lane.b32.xlu0 %v1467, 64
        %v3154 = vpop.permute.xlu0 %3153
        %3155 = vrot.lane.b32.xlu0 %v1469, 64
        %v3156 = vpop.permute.xlu0 %3155
        %3157 = vrot.lane.b32.xlu0 %v1471, 64
        %v3158 = vpop.permute.xlu0 %3157
        %3159 = vrot.lane.b32.xlu0 %v1473, 64
        %v3160 = vpop.permute.xlu0 %3159
        %v3193 = vunpack.c.l.b16 %v3064
        %v3194 = vunpack.c.l.b16 %v3065
        %v3195 = vunpack.c.l.b16 %v3066
        %v3196 = vunpack.c.l.b16 %v3067
        %v3197 = vunpack.c.l.b16 %v3068
        %v3198 = vunpack.c.l.b16 %v3069
        %v3199 = vunpack.c.l.b16 %v3070
        %v3200 = vunpack.c.l.b16 %v3071
        %v3201 = vunpack.c.l.b16 %v3072
        %v3202 = vunpack.c.l.b16 %v3073
        %v3203 = vunpack.c.l.b16 %v3074
        %v3204 = vunpack.c.l.b16 %v3075
        %v3205 = vunpack.c.l.b16 %v3076
        %v3206 = vunpack.c.l.b16 %v3077
        %v3207 = vunpack.c.l.b16 %v3078
        %v3208 = vunpack.c.l.b16 %v3079
        %v3209 = vunpack.c.l.b16 %v3080
        %v3210 = vunpack.c.l.b16 %v3081
        %v3211 = vunpack.c.l.b16 %v3082
        %v3212 = vunpack.c.l.b16 %v3083
        %v3213 = vunpack.c.l.b16 %v3084
        %v3214 = vunpack.c.l.b16 %v3085
        %v3215 = vunpack.c.l.b16 %v3086
        %v3216 = vunpack.c.l.b16 %v3087
        %v3217 = vunpack.c.l.b16 %v3088
        %v3218 = vunpack.c.l.b16 %v3089
        %v3219 = vunpack.c.l.b16 %v3090
        %v3220 = vunpack.c.l.b16 %v3091
        %v3221 = vunpack.c.l.b16 %v3092
        %v3222 = vunpack.c.l.b16 %v3093
        %v3223 = vunpack.c.l.b16 %v3094
        %v3224 = vunpack.c.l.b16 %v3095
        %v3225 = vpack.c.b16 %v3194, %v3193
        %v3226 = vpack.c.b16 %v3196, %v3195
        %v3227 = vpack.c.b16 %v3198, %v3197
        %v3228 = vpack.c.b16 %v3200, %v3199
        %v3229 = vpack.c.b16 %v3202, %v3201
        %v3230 = vpack.c.b16 %v3204, %v3203
        %v3231 = vpack.c.b16 %v3206, %v3205
        %v3232 = vpack.c.b16 %v3208, %v3207
        %v3233 = vpack.c.b16 %v3210, %v3209
        %v3234 = vpack.c.b16 %v3212, %v3211
        %v3235 = vpack.c.b16 %v3214, %v3213
        %v3236 = vpack.c.b16 %v3216, %v3215
        %v3237 = vpack.c.b16 %v3218, %v3217
        %v3238 = vpack.c.b16 %v3220, %v3219
        %v3239 = vpack.c.b16 %v3222, %v3221
        %v3240 = vpack.c.b16 %v3224, %v3223
        %v3242 = vsel %vm1554, %v3130, 0
        %v3245 = vsel %vm1554, %v3132, 0
        %v3248 = vsel %vm1554, %v3134, 0
        %v3251 = vsel %vm1554, %v3136, 0
        %v3254 = vsel %vm1554, %v3138, 0
        %v3257 = vsel %vm1554, %v3140, 0
        %v3260 = vsel %vm1554, %v3142, 0
        %v3263 = vsel %vm1554, %v3144, 0
        %v3266 = vsel %vm1554, %v3146, 0
        %v3269 = vsel %vm1554, %v3148, 0
        %v3272 = vsel %vm1554, %v3150, 0
        %v3275 = vsel %vm1554, %v3152, 0
        %v3278 = vsel %vm1554, %v3154, 0
        %v3281 = vsel %vm1554, %v3156, 0
        %v3284 = vsel %vm1554, %v3158, 0
        %v3287 = vsel %vm1554, %v3160, 0
        %v3290 = vsel %vm1554, %v3225, 0
        %v3293 = vsel %vm1554, %v3226, 0
        %v3296 = vsel %vm1554, %v3227, 0
        %v3299 = vsel %vm1554, %v3228, 0
        %v3302 = vsel %vm1554, %v3229, 0
        %v3305 = vsel %vm1554, %v3230, 0
        %v3308 = vsel %vm1554, %v3231, 0
        %v3311 = vsel %vm1554, %v3232, 0
        %v3314 = vsel %vm1554, %v3233, 0
        %v3317 = vsel %vm1554, %v3234, 0
        %v3320 = vsel %vm1554, %v3235, 0
        %v3323 = vsel %vm1554, %v3236, 0
        %v3326 = vsel %vm1554, %v3237, 0
        %v3329 = vsel %vm1554, %v3238, 0
        %v3332 = vsel %vm1554, %v3239, 0
        %v3335 = vsel %vm1554, %v3240, 0
        %3337 = vmatpush.bf16.xpose.msra.mxu0 %v3311
        %3338 = vmatpush.bf16.xpose.msra.mxu0 %v3308
        %3339 = vmatpush.bf16.xpose.msra.mxu0 %v3305
        %3340 = vmatpush.bf16.xpose.msra.mxu0 %v3302
        %3341 = vmatpush.bf16.xpose.msra.mxu0 %v3299
        %3342 = vmatpush.bf16.xpose.msra.mxu0 %v3296
        %3343 = vmatpush.bf16.xpose.msra.mxu0 %v3293
        %3344 = vmatpush.bf16.xpose.msra.mxu0 %v3290
        %3345 = vmatmul.bf16.gmra.mxu0 %v3242
        %v3346 = vpop.f32.mrf.mxu0
        %v3347 = vadd.f32 0.0, %v3346
        %v3348 = vpop.f32.mrf.mxu0
        %v3349 = vadd.f32 0.0, %v3348
        %3350 = vmatmul.bf16.gmra.mxu0 %v3245
        %v3351 = vpop.f32.mrf.mxu0
        %v3352 = vadd.f32 0.0, %v3351
        %v3353 = vpop.f32.mrf.mxu0
        %v3354 = vadd.f32 0.0, %v3353
        %3355 = vmatmul.bf16.gmra.mxu0 %v3248
        %v3356 = vpop.f32.mrf.mxu0
        %v3357 = vadd.f32 0.0, %v3356
        %v3358 = vpop.f32.mrf.mxu0
        %v3359 = vadd.f32 0.0, %v3358
        %3360 = vmatmul.bf16.gmra.mxu0 %v3251
        %v3361 = vpop.f32.mrf.mxu0
        %v3362 = vadd.f32 0.0, %v3361
        %v3363 = vpop.f32.mrf.mxu0
        %v3364 = vadd.f32 0.0, %v3363
        %3365 = vmatmul.bf16.gmra.mxu0 %v3254
        %v3366 = vpop.f32.mrf.mxu0
        %v3367 = vadd.f32 0.0, %v3366
        %v3368 = vpop.f32.mrf.mxu0
        %v3369 = vadd.f32 0.0, %v3368
        %3370 = vmatmul.bf16.gmra.mxu0 %v3257
        %v3371 = vpop.f32.mrf.mxu0
        %v3372 = vadd.f32 0.0, %v3371
        %v3373 = vpop.f32.mrf.mxu0
        %v3374 = vadd.f32 0.0, %v3373
        %3375 = vmatmul.bf16.gmra.mxu0 %v3260
        %v3376 = vpop.f32.mrf.mxu0
        %v3377 = vadd.f32 0.0, %v3376
        %v3378 = vpop.f32.mrf.mxu0
        %v3379 = vadd.f32 0.0, %v3378
        %3380 = vmatmul.bf16.gmra.mxu0 %v3263
        %v3381 = vpop.f32.mrf.mxu0
        %v3382 = vadd.f32 0.0, %v3381
        %v3383 = vpop.f32.mrf.mxu0
        %v3384 = vadd.f32 0.0, %v3383
        %3385 = vmatmul.bf16.gmra.mxu0 %v3266
        %v3386 = vpop.f32.mrf.mxu0
        %v3387 = vadd.f32 0.0, %v3386
        %v3388 = vpop.f32.mrf.mxu0
        %v3389 = vadd.f32 0.0, %v3388
        %3390 = vmatmul.bf16.gmra.mxu0 %v3269
        %v3391 = vpop.f32.mrf.mxu0
        %v3392 = vadd.f32 0.0, %v3391
        %v3393 = vpop.f32.mrf.mxu0
        %v3394 = vadd.f32 0.0, %v3393
        %3395 = vmatmul.bf16.gmra.mxu0 %v3272
        %v3396 = vpop.f32.mrf.mxu0
        %v3397 = vadd.f32 0.0, %v3396
        %v3398 = vpop.f32.mrf.mxu0
        %v3399 = vadd.f32 0.0, %v3398
        %3400 = vmatmul.bf16.gmra.mxu0 %v3275
        %v3401 = vpop.f32.mrf.mxu0
        %v3402 = vadd.f32 0.0, %v3401
        %v3403 = vpop.f32.mrf.mxu0
        %v3404 = vadd.f32 0.0, %v3403
        %3405 = vmatmul.bf16.gmra.mxu0 %v3278
        %v3406 = vpop.f32.mrf.mxu0
        %v3407 = vadd.f32 0.0, %v3406
        %v3408 = vpop.f32.mrf.mxu0
        %v3409 = vadd.f32 0.0, %v3408
        %3410 = vmatmul.bf16.gmra.mxu0 %v3281
        %v3411 = vpop.f32.mrf.mxu0
        %v3412 = vadd.f32 0.0, %v3411
        %v3413 = vpop.f32.mrf.mxu0
        %v3414 = vadd.f32 0.0, %v3413
        %3415 = vmatmul.bf16.gmra.mxu0 %v3284
        %v3416 = vpop.f32.mrf.mxu0
        %v3417 = vadd.f32 0.0, %v3416
        %v3418 = vpop.f32.mrf.mxu0
        %v3419 = vadd.f32 0.0, %v3418
        %3420 = vmatmul.bf16.gmra.mxu0 %v3287
        %v3421 = vpop.f32.mrf.mxu0
        %v3422 = vadd.f32 0.0, %v3421
        %v3423 = vpop.f32.mrf.mxu0
        %v3424 = vadd.f32 0.0, %v3423
        %3425 = vdwg.mxu0
        %3426 = vmatpush.bf16.xpose.msra.mxu0 %v3335
        %3427 = vmatpush.bf16.xpose.msra.mxu0 %v3332
        %3428 = vmatpush.bf16.xpose.msra.mxu0 %v3329
        %3429 = vmatpush.bf16.xpose.msra.mxu0 %v3326
        %3430 = vmatpush.bf16.xpose.msra.mxu0 %v3323
        %3431 = vmatpush.bf16.xpose.msra.mxu0 %v3320
        %3432 = vmatpush.bf16.xpose.msra.mxu0 %v3317
        %3433 = vmatpush.bf16.xpose.msra.mxu0 %v3314
        %3434 = vmatmul.bf16.gmra.mxu0 %v3242
        %v3435 = vpop.f32.mrf.mxu0
        %v3436 = vadd.f32 0.0, %v3435
        %v3437 = vpop.f32.mrf.mxu0
        %v3438 = vadd.f32 0.0, %v3437
        %3439 = vmatmul.bf16.gmra.mxu0 %v3245
        %v3440 = vpop.f32.mrf.mxu0
        %v3441 = vadd.f32 0.0, %v3440
        %v3442 = vpop.f32.mrf.mxu0
        %v3443 = vadd.f32 0.0, %v3442
        %3444 = vmatmul.bf16.gmra.mxu0 %v3248
        %v3445 = vpop.f32.mrf.mxu0
        %v3446 = vadd.f32 0.0, %v3445
        %v3447 = vpop.f32.mrf.mxu0
        %v3448 = vadd.f32 0.0, %v3447
        %3449 = vmatmul.bf16.gmra.mxu0 %v3251
        %v3450 = vpop.f32.mrf.mxu0
        %v3451 = vadd.f32 0.0, %v3450
        %v3452 = vpop.f32.mrf.mxu0
        %v3453 = vadd.f32 0.0, %v3452
        %3454 = vmatmul.bf16.gmra.mxu0 %v3254
        %v3455 = vpop.f32.mrf.mxu0
        %v3456 = vadd.f32 0.0, %v3455
        %v3457 = vpop.f32.mrf.mxu0
        %v3458 = vadd.f32 0.0, %v3457
        %3459 = vmatmul.bf16.gmra.mxu0 %v3257
        %v3460 = vpop.f32.mrf.mxu0
        %v3461 = vadd.f32 0.0, %v3460
        %v3462 = vpop.f32.mrf.mxu0
        %v3463 = vadd.f32 0.0, %v3462
        %3464 = vmatmul.bf16.gmra.mxu0 %v3260
        %v3465 = vpop.f32.mrf.mxu0
        %v3466 = vadd.f32 0.0, %v3465
        %v3467 = vpop.f32.mrf.mxu0
        %v3468 = vadd.f32 0.0, %v3467
        %3469 = vmatmul.bf16.gmra.mxu0 %v3263
        %v3470 = vpop.f32.mrf.mxu0
        %v3471 = vadd.f32 0.0, %v3470
        %v3472 = vpop.f32.mrf.mxu0
        %v3473 = vadd.f32 0.0, %v3472
        %3474 = vmatmul.bf16.gmra.mxu0 %v3266
        %v3475 = vpop.f32.mrf.mxu0
        %v3476 = vadd.f32 0.0, %v3475
        %v3477 = vpop.f32.mrf.mxu0
        %v3478 = vadd.f32 0.0, %v3477
        %3479 = vmatmul.bf16.gmra.mxu0 %v3269
        %v3480 = vpop.f32.mrf.mxu0
        %v3481 = vadd.f32 0.0, %v3480
        %v3482 = vpop.f32.mrf.mxu0
        %v3483 = vadd.f32 0.0, %v3482
        %3484 = vmatmul.bf16.gmra.mxu0 %v3272
        %v3485 = vpop.f32.mrf.mxu0
        %v3486 = vadd.f32 0.0, %v3485
        %v3487 = vpop.f32.mrf.mxu0
        %v3488 = vadd.f32 0.0, %v3487
        %3489 = vmatmul.bf16.gmra.mxu0 %v3275
        %v3490 = vpop.f32.mrf.mxu0
        %v3491 = vadd.f32 0.0, %v3490
        %v3492 = vpop.f32.mrf.mxu0
        %v3493 = vadd.f32 0.0, %v3492
        %3494 = vmatmul.bf16.gmra.mxu0 %v3278
        %v3495 = vpop.f32.mrf.mxu0
        %v3496 = vadd.f32 0.0, %v3495
        %v3497 = vpop.f32.mrf.mxu0
        %v3498 = vadd.f32 0.0, %v3497
        %3499 = vmatmul.bf16.gmra.mxu0 %v3281
        %v3500 = vpop.f32.mrf.mxu0
        %v3501 = vadd.f32 0.0, %v3500
        %v3502 = vpop.f32.mrf.mxu0
        %v3503 = vadd.f32 0.0, %v3502
        %3504 = vmatmul.bf16.gmra.mxu0 %v3284
        %v3505 = vpop.f32.mrf.mxu0
        %v3506 = vadd.f32 0.0, %v3505
        %v3507 = vpop.f32.mrf.mxu0
        %v3508 = vadd.f32 0.0, %v3507
        %3509 = vmatmul.bf16.gmra.mxu0 %v3287
        %v3510 = vpop.f32.mrf.mxu0
        %v3511 = vadd.f32 0.0, %v3510
        %v3512 = vpop.f32.mrf.mxu0
        %v3513 = vadd.f32 0.0, %v3512
        %3514 = vdwg.mxu0
        %v3515 = vmax.f32 %v3347, %v3436
        %3516 = vmax.xlane.f32.xlu0 %v3515
        %v3517 = vpop.xlane.xlu0 %3516
        %v3518 = vmax.f32 %v3349, %v3438
        %3519 = vmax.xlane.f32.xlu0 %v3518
        %v3520 = vpop.xlane.xlu0 %3519
        %v3521 = vmax.f32 %v3352, %v3441
        %3522 = vmax.xlane.f32.xlu0 %v3521
        %v3523 = vpop.xlane.xlu0 %3522
        %v3524 = vmax.f32 %v3354, %v3443
        %3525 = vmax.xlane.f32.xlu0 %v3524
        %v3526 = vpop.xlane.xlu0 %3525
        %v3527 = vmax.f32 %v3357, %v3446
        %3528 = vmax.xlane.f32.xlu0 %v3527
        %v3529 = vpop.xlane.xlu0 %3528
        %v3530 = vmax.f32 %v3359, %v3448
        %3531 = vmax.xlane.f32.xlu0 %v3530
        %v3532 = vpop.xlane.xlu0 %3531
        %v3533 = vmax.f32 %v3362, %v3451
        %3534 = vmax.xlane.f32.xlu0 %v3533
        %v3535 = vpop.xlane.xlu0 %3534
        %v3536 = vmax.f32 %v3364, %v3453
        %3537 = vmax.xlane.f32.xlu0 %v3536
        %v3538 = vpop.xlane.xlu0 %3537
        %v3539 = vmax.f32 %v3367, %v3456
        %3540 = vmax.xlane.f32.xlu0 %v3539
        %v3541 = vpop.xlane.xlu0 %3540
        %v3542 = vmax.f32 %v3369, %v3458
        %3543 = vmax.xlane.f32.xlu0 %v3542
        %v3544 = vpop.xlane.xlu0 %3543
        %v3545 = vmax.f32 %v3372, %v3461
        %3546 = vmax.xlane.f32.xlu0 %v3545
        %v3547 = vpop.xlane.xlu0 %3546
        %v3548 = vmax.f32 %v3374, %v3463
        %3549 = vmax.xlane.f32.xlu0 %v3548
        %v3550 = vpop.xlane.xlu0 %3549
        %v3551 = vmax.f32 %v3377, %v3466
        %3552 = vmax.xlane.f32.xlu0 %v3551
        %v3553 = vpop.xlane.xlu0 %3552
        %v3554 = vmax.f32 %v3379, %v3468
        %3555 = vmax.xlane.f32.xlu0 %v3554
        %v3556 = vpop.xlane.xlu0 %3555
        %v3557 = vmax.f32 %v3382, %v3471
        %3558 = vmax.xlane.f32.xlu0 %v3557
        %v3559 = vpop.xlane.xlu0 %3558
        %v3560 = vmax.f32 %v3384, %v3473
        %3561 = vmax.xlane.f32.xlu0 %v3560
        %v3562 = vpop.xlane.xlu0 %3561
        %v3563 = vmax.f32 %v3387, %v3476
        %3564 = vmax.xlane.f32.xlu0 %v3563
        %v3565 = vpop.xlane.xlu0 %3564
        %v3566 = vmax.f32 %v3389, %v3478
        %3567 = vmax.xlane.f32.xlu0 %v3566
        %v3568 = vpop.xlane.xlu0 %3567
        %v3569 = vmax.f32 %v3392, %v3481
        %3570 = vmax.xlane.f32.xlu0 %v3569
        %v3571 = vpop.xlane.xlu0 %3570
        %v3572 = vmax.f32 %v3394, %v3483
        %3573 = vmax.xlane.f32.xlu0 %v3572
        %v3574 = vpop.xlane.xlu0 %3573
        %v3575 = vmax.f32 %v3397, %v3486
        %3576 = vmax.xlane.f32.xlu0 %v3575
        %v3577 = vpop.xlane.xlu0 %3576
        %v3578 = vmax.f32 %v3399, %v3488
        %3579 = vmax.xlane.f32.xlu0 %v3578
        %v3580 = vpop.xlane.xlu0 %3579
        %v3581 = vmax.f32 %v3402, %v3491
        %3582 = vmax.xlane.f32.xlu0 %v3581
        %v3583 = vpop.xlane.xlu0 %3582
        %v3584 = vmax.f32 %v3404, %v3493
        %3585 = vmax.xlane.f32.xlu0 %v3584
        %v3586 = vpop.xlane.xlu0 %3585
        %v3587 = vmax.f32 %v3407, %v3496
        %3588 = vmax.xlane.f32.xlu0 %v3587
        %v3589 = vpop.xlane.xlu0 %3588
        %v3590 = vmax.f32 %v3409, %v3498
        %3591 = vmax.xlane.f32.xlu0 %v3590
        %v3592 = vpop.xlane.xlu0 %3591
        %v3593 = vmax.f32 %v3412, %v3501
        %3594 = vmax.xlane.f32.xlu0 %v3593
        %v3595 = vpop.xlane.xlu0 %3594
        %v3596 = vmax.f32 %v3414, %v3503
        %3597 = vmax.xlane.f32.xlu0 %v3596
        %v3598 = vpop.xlane.xlu0 %3597
        %v3599 = vmax.f32 %v3417, %v3506
        %3600 = vmax.xlane.f32.xlu0 %v3599
        %v3601 = vpop.xlane.xlu0 %3600
        %v3602 = vmax.f32 %v3419, %v3508
        %3603 = vmax.xlane.f32.xlu0 %v3602
        %v3604 = vpop.xlane.xlu0 %3603
        %v3605 = vmax.f32 %v3422, %v3511
        %3606 = vmax.xlane.f32.xlu0 %v3605
        %v3607 = vpop.xlane.xlu0 %3606
        %v3608 = vmax.f32 %v3424, %v3513
        %3609 = vmax.xlane.f32.xlu0 %v3608
        %v3610 = vpop.xlane.xlu0 %3609
        %v3611 = vsub.f32 %v3347, %v3517
        %v3612 = vsub.f32 %v3436, %v3517
        %v3613 = vsub.f32 %v3349, %v3520
        %v3614 = vsub.f32 %v3438, %v3520
        %v3615 = vsub.f32 %v3352, %v3523
        %v3616 = vsub.f32 %v3441, %v3523
        %v3617 = vsub.f32 %v3354, %v3526
        %v3618 = vsub.f32 %v3443, %v3526
        %v3619 = vsub.f32 %v3357, %v3529
        %v3620 = vsub.f32 %v3446, %v3529
        %v3621 = vsub.f32 %v3359, %v3532
        %v3622 = vsub.f32 %v3448, %v3532
        %v3623 = vsub.f32 %v3362, %v3535
        %v3624 = vsub.f32 %v3451, %v3535
        %v3625 = vsub.f32 %v3364, %v3538
        %v3626 = vsub.f32 %v3453, %v3538
        %v3627 = vsub.f32 %v3367, %v3541
        %v3628 = vsub.f32 %v3456, %v3541
        %v3629 = vsub.f32 %v3369, %v3544
        %v3630 = vsub.f32 %v3458, %v3544
        %v3631 = vsub.f32 %v3372, %v3547
        %v3632 = vsub.f32 %v3461, %v3547
        %v3633 = vsub.f32 %v3374, %v3550
        %v3634 = vsub.f32 %v3463, %v3550
        %v3635 = vsub.f32 %v3377, %v3553
        %v3636 = vsub.f32 %v3466, %v3553
        %v3637 = vsub.f32 %v3379, %v3556
        %v3638 = vsub.f32 %v3468, %v3556
        %v3639 = vsub.f32 %v3382, %v3559
        %v3640 = vsub.f32 %v3471, %v3559
        %v3641 = vsub.f32 %v3384, %v3562
        %v3642 = vsub.f32 %v3473, %v3562
        %v3643 = vsub.f32 %v3387, %v3565
        %v3644 = vsub.f32 %v3476, %v3565
        %v3645 = vsub.f32 %v3389, %v3568
        %v3646 = vsub.f32 %v3478, %v3568
        %v3647 = vsub.f32 %v3392, %v3571
        %v3648 = vsub.f32 %v3481, %v3571
        %v3649 = vsub.f32 %v3394, %v3574
        %v3650 = vsub.f32 %v3483, %v3574
        %v3651 = vsub.f32 %v3397, %v3577
        %v3652 = vsub.f32 %v3486, %v3577
        %v3653 = vsub.f32 %v3399, %v3580
        %v3654 = vsub.f32 %v3488, %v3580
        %v3655 = vsub.f32 %v3402, %v3583
        %v3656 = vsub.f32 %v3491, %v3583
        %v3657 = vsub.f32 %v3404, %v3586
        %v3658 = vsub.f32 %v3493, %v3586
        %v3659 = vsub.f32 %v3407, %v3589
        %v3660 = vsub.f32 %v3496, %v3589
        %v3661 = vsub.f32 %v3409, %v3592
        %v3662 = vsub.f32 %v3498, %v3592
        %v3663 = vsub.f32 %v3412, %v3595
        %v3664 = vsub.f32 %v3501, %v3595
        %v3665 = vsub.f32 %v3414, %v3598
        %v3666 = vsub.f32 %v3503, %v3598
        %v3667 = vsub.f32 %v3417, %v3601
        %v3668 = vsub.f32 %v3506, %v3601
        %v3669 = vsub.f32 %v3419, %v3604
        %v3670 = vsub.f32 %v3508, %v3604
        %v3671 = vsub.f32 %v3422, %v3607
        %v3672 = vsub.f32 %v3511, %v3607
        %v3673 = vsub.f32 %v3424, %v3610
        %v3674 = vsub.f32 %v3513, %v3610
        %v3675 = vmul.f32 %v3611, 1.442695
        %v3676 = vpow.pop %v3675
        %v3677 = vmul.f32 %v3612, 1.442695
        %v3678 = vpow.pop %v3677
        %v3679 = vmul.f32 %v3613, 1.442695
        %v3680 = vpow.pop %v3679
        %v3681 = vmul.f32 %v3614, 1.442695
        %v3682 = vpow.pop %v3681
        %v3683 = vmul.f32 %v3615, 1.442695
        %v3684 = vpow.pop %v3683
        %v3685 = vmul.f32 %v3616, 1.442695
        %v3686 = vpow.pop %v3685
        %v3687 = vmul.f32 %v3617, 1.442695
        %v3688 = vpow.pop %v3687
        %v3689 = vmul.f32 %v3618, 1.442695
        %v3690 = vpow.pop %v3689
        %v3691 = vmul.f32 %v3619, 1.442695
        %v3692 = vpow.pop %v3691
        %v3693 = vmul.f32 %v3620, 1.442695
        %v3694 = vpow.pop %v3693
        %v3695 = vmul.f32 %v3621, 1.442695
        %v3696 = vpow.pop %v3695
        %v3697 = vmul.f32 %v3622, 1.442695
        %v3698 = vpow.pop %v3697
        %v3699 = vmul.f32 %v3623, 1.442695
        %v3700 = vpow.pop %v3699
        %v3701 = vmul.f32 %v3624, 1.442695
        %v3702 = vpow.pop %v3701
        %v3703 = vmul.f32 %v3625, 1.442695
        %v3704 = vpow.pop %v3703
        %v3705 = vmul.f32 %v3626, 1.442695
        %v3706 = vpow.pop %v3705
        %v3707 = vmul.f32 %v3627, 1.442695
        %v3708 = vpow.pop %v3707
        %v3709 = vmul.f32 %v3628, 1.442695
        %v3710 = vpow.pop %v3709
        %v3711 = vmul.f32 %v3629, 1.442695
        %v3712 = vpow.pop %v3711
        %v3713 = vmul.f32 %v3630, 1.442695
        %v3714 = vpow.pop %v3713
        %v3715 = vmul.f32 %v3631, 1.442695
        %v3716 = vpow.pop %v3715
        %v3717 = vmul.f32 %v3632, 1.442695
        %v3718 = vpow.pop %v3717
        %v3719 = vmul.f32 %v3633, 1.442695
        %v3720 = vpow.pop %v3719
        %v3721 = vmul.f32 %v3634, 1.442695
        %v3722 = vpow.pop %v3721
        %v3723 = vmul.f32 %v3635, 1.442695
        %v3724 = vpow.pop %v3723
        %v3725 = vmul.f32 %v3636, 1.442695
        %v3726 = vpow.pop %v3725
        %v3727 = vmul.f32 %v3637, 1.442695
        %v3728 = vpow.pop %v3727
        %v3729 = vmul.f32 %v3638, 1.442695
        %v3730 = vpow.pop %v3729
        %v3731 = vmul.f32 %v3639, 1.442695
        %v3732 = vpow.pop %v3731
        %v3733 = vmul.f32 %v3640, 1.442695
        %v3734 = vpow.pop %v3733
        %v3735 = vmul.f32 %v3641, 1.442695
        %v3736 = vpow.pop %v3735
        %v3737 = vmul.f32 %v3642, 1.442695
        %v3738 = vpow.pop %v3737
        %v3739 = vmul.f32 %v3643, 1.442695
        %v3740 = vpow.pop %v3739
        %v3741 = vmul.f32 %v3644, 1.442695
        %v3742 = vpow.pop %v3741
        %v3743 = vmul.f32 %v3645, 1.442695
        %v3744 = vpow.pop %v3743
        %v3745 = vmul.f32 %v3646, 1.442695
        %v3746 = vpow.pop %v3745
        %v3747 = vmul.f32 %v3647, 1.442695
        %v3748 = vpow.pop %v3747
        %v3749 = vmul.f32 %v3648, 1.442695
        %v3750 = vpow.pop %v3749
        %v3751 = vmul.f32 %v3649, 1.442695
        %v3752 = vpow.pop %v3751
        %v3753 = vmul.f32 %v3650, 1.442695
        %v3754 = vpow.pop %v3753
        %v3755 = vmul.f32 %v3651, 1.442695
        %v3756 = vpow.pop %v3755
        %v3757 = vmul.f32 %v3652, 1.442695
        %v3758 = vpow.pop %v3757
        %v3759 = vmul.f32 %v3653, 1.442695
        %v3760 = vpow.pop %v3759
        %v3761 = vmul.f32 %v3654, 1.442695
        %v3762 = vpow.pop %v3761
        %v3763 = vmul.f32 %v3655, 1.442695
        %v3764 = vpow.pop %v3763
        %v3765 = vmul.f32 %v3656, 1.442695
        %v3766 = vpow.pop %v3765
        %v3767 = vmul.f32 %v3657, 1.442695
        %v3768 = vpow.pop %v3767
        %v3769 = vmul.f32 %v3658, 1.442695
        %v3770 = vpow.pop %v3769
        %v3771 = vmul.f32 %v3659, 1.442695
        %v3772 = vpow.pop %v3771
        %v3773 = vmul.f32 %v3660, 1.442695
        %v3774 = vpow.pop %v3773
        %v3775 = vmul.f32 %v3661, 1.442695
        %v3776 = vpow.pop %v3775
        %v3777 = vmul.f32 %v3662, 1.442695
        %v3778 = vpow.pop %v3777
        %v3779 = vmul.f32 %v3663, 1.442695
        %v3780 = vpow.pop %v3779
        %v3781 = vmul.f32 %v3664, 1.442695
        %v3782 = vpow.pop %v3781
        %v3783 = vmul.f32 %v3665, 1.442695
        %v3784 = vpow.pop %v3783
        %v3785 = vmul.f32 %v3666, 1.442695
        %v3786 = vpow.pop %v3785
        %v3787 = vmul.f32 %v3667, 1.442695
        %v3788 = vpow.pop %v3787
        %v3789 = vmul.f32 %v3668, 1.442695
        %v3790 = vpow.pop %v3789
        %v3791 = vmul.f32 %v3669, 1.442695
        %v3792 = vpow.pop %v3791
        %v3793 = vmul.f32 %v3670, 1.442695
        %v3794 = vpow.pop %v3793
        %v3795 = vmul.f32 %v3671, 1.442695
        %v3796 = vpow.pop %v3795
        %v3797 = vmul.f32 %v3672, 1.442695
        %v3798 = vpow.pop %v3797
        %v3799 = vmul.f32 %v3673, 1.442695
        %v3800 = vpow.pop %v3799
        %v3801 = vmul.f32 %v3674, 1.442695
        %v3802 = vpow.pop %v3801
        %v3803 = vadd.f32 %v3676, %v3678
        %3804 = vadd.xlane.f32.xlu0 %v3803
        %v3805 = vpop.xlane.xlu0 %3804
        %v3806 = vadd.f32 %v3680, %v3682
        %3807 = vadd.xlane.f32.xlu0 %v3806
        %v3808 = vpop.xlane.xlu0 %3807
        %v3809 = vadd.f32 %v3684, %v3686
        %3810 = vadd.xlane.f32.xlu0 %v3809
        %v3811 = vpop.xlane.xlu0 %3810
        %v3812 = vadd.f32 %v3688, %v3690
        %3813 = vadd.xlane.f32.xlu0 %v3812
        %v3814 = vpop.xlane.xlu0 %3813
        %v3815 = vadd.f32 %v3692, %v3694
        %3816 = vadd.xlane.f32.xlu0 %v3815
        %v3817 = vpop.xlane.xlu0 %3816
        %v3818 = vadd.f32 %v3696, %v3698
        %3819 = vadd.xlane.f32.xlu0 %v3818
        %v3820 = vpop.xlane.xlu0 %3819
        %v3821 = vadd.f32 %v3700, %v3702
        %3822 = vadd.xlane.f32.xlu0 %v3821
        %v3823 = vpop.xlane.xlu0 %3822
        %v3824 = vadd.f32 %v3704, %v3706
        %3825 = vadd.xlane.f32.xlu0 %v3824
        %v3826 = vpop.xlane.xlu0 %3825
        %v3827 = vadd.f32 %v3708, %v3710
        %3828 = vadd.xlane.f32.xlu0 %v3827
        %v3829 = vpop.xlane.xlu0 %3828
        %v3830 = vadd.f32 %v3712, %v3714
        %3831 = vadd.xlane.f32.xlu0 %v3830
        %v3832 = vpop.xlane.xlu0 %3831
        %v3833 = vadd.f32 %v3716, %v3718
        %3834 = vadd.xlane.f32.xlu0 %v3833
        %v3835 = vpop.xlane.xlu0 %3834
        %v3836 = vadd.f32 %v3720, %v3722
        %3837 = vadd.xlane.f32.xlu0 %v3836
        %v3838 = vpop.xlane.xlu0 %3837
        %v3839 = vadd.f32 %v3724, %v3726
        %3840 = vadd.xlane.f32.xlu0 %v3839
        %v3841 = vpop.xlane.xlu0 %3840
        %v3842 = vadd.f32 %v3728, %v3730
        %3843 = vadd.xlane.f32.xlu0 %v3842
        %v3844 = vpop.xlane.xlu0 %3843
        %v3845 = vadd.f32 %v3732, %v3734
        %3846 = vadd.xlane.f32.xlu0 %v3845
        %v3847 = vpop.xlane.xlu0 %3846
        %v3848 = vadd.f32 %v3736, %v3738
        %3849 = vadd.xlane.f32.xlu0 %v3848
        %v3850 = vpop.xlane.xlu0 %3849
        %v3851 = vadd.f32 %v3740, %v3742
        %3852 = vadd.xlane.f32.xlu0 %v3851
        %v3853 = vpop.xlane.xlu0 %3852
        %v3854 = vadd.f32 %v3744, %v3746
        %3855 = vadd.xlane.f32.xlu0 %v3854
        %v3856 = vpop.xlane.xlu0 %3855
        %v3857 = vadd.f32 %v3748, %v3750
        %3858 = vadd.xlane.f32.xlu0 %v3857
        %v3859 = vpop.xlane.xlu0 %3858
        %v3860 = vadd.f32 %v3752, %v3754
        %3861 = vadd.xlane.f32.xlu0 %v3860
        %v3862 = vpop.xlane.xlu0 %3861
        %v3863 = vadd.f32 %v3756, %v3758
        %3864 = vadd.xlane.f32.xlu0 %v3863
        %v3865 = vpop.xlane.xlu0 %3864
        %v3866 = vadd.f32 %v3760, %v3762
        %3867 = vadd.xlane.f32.xlu0 %v3866
        %v3868 = vpop.xlane.xlu0 %3867
        %v3869 = vadd.f32 %v3764, %v3766
        %3870 = vadd.xlane.f32.xlu0 %v3869
        %v3871 = vpop.xlane.xlu0 %3870
        %v3872 = vadd.f32 %v3768, %v3770
        %3873 = vadd.xlane.f32.xlu0 %v3872
        %v3874 = vpop.xlane.xlu0 %3873
        %v3875 = vadd.f32 %v3772, %v3774
        %3876 = vadd.xlane.f32.xlu0 %v3875
        %v3877 = vpop.xlane.xlu0 %3876
        %v3878 = vadd.f32 %v3776, %v3778
        %3879 = vadd.xlane.f32.xlu0 %v3878
        %v3880 = vpop.xlane.xlu0 %3879
        %v3881 = vadd.f32 %v3780, %v3782
        %3882 = vadd.xlane.f32.xlu0 %v3881
        %v3883 = vpop.xlane.xlu0 %3882
        %v3884 = vadd.f32 %v3784, %v3786
        %3885 = vadd.xlane.f32.xlu0 %v3884
        %v3886 = vpop.xlane.xlu0 %3885
        %v3887 = vadd.f32 %v3788, %v3790
        %3888 = vadd.xlane.f32.xlu0 %v3887
        %v3889 = vpop.xlane.xlu0 %3888
        %v3890 = vadd.f32 %v3792, %v3794
        %3891 = vadd.xlane.f32.xlu0 %v3890
        %v3892 = vpop.xlane.xlu0 %3891
        %v3893 = vadd.f32 %v3796, %v3798
        %3894 = vadd.xlane.f32.xlu0 %v3893
        %v3895 = vpop.xlane.xlu0 %3894
        %v3896 = vadd.f32 %v3800, %v3802
        %3897 = vadd.xlane.f32.xlu0 %v3896
        %v3898 = vpop.xlane.xlu0 %3897
        %v3899 = vrcp.pop %v3805
        %v3900 = vmul.f32 %v3805, %v3899
        %v3901 = vsub.f32 1.0, %v3900
        %v3902 = vmul.f32 %v3899, %v3901
        %v3903 = vadd.f32 %v3899, %v3902
        %vm3904 = vweird.f32 %v3805
        %vm3905 = vweird.f32 %v3899
        %vm3906 = vmor %vm3904, %vm3905
        %v3907 = vsel %vm3906, %v3899, %v3903
        %v3908 = vand.u32 2147483647, %v3805
        %vm3909 = vcmp.eq.f32.partialorder %v3908, 8.507059e+37
        %v3910 = vand.u32 %v3805, 2147483648
        %v3911 = vor.u32 1.1754944e-38, %v3910
        %v3912 = vsel %vm3909, %v3911, %v3907
        %v3913 = vrcp.pop %v3808
        %v3914 = vmul.f32 %v3808, %v3913
        %v3915 = vsub.f32 1.0, %v3914
        %v3916 = vmul.f32 %v3913, %v3915
        %v3917 = vadd.f32 %v3913, %v3916
        %vm3918 = vweird.f32 %v3808
        %vm3919 = vweird.f32 %v3913
        %vm3920 = vmor %vm3918, %vm3919
        %v3921 = vsel %vm3920, %v3913, %v3917
        %v3922 = vand.u32 2147483647, %v3808
        %vm3923 = vcmp.eq.f32.partialorder %v3922, 8.507059e+37
        %v3924 = vand.u32 %v3808, 2147483648
        %v3925 = vor.u32 1.1754944e-38, %v3924
        %v3926 = vsel %vm3923, %v3925, %v3921
        %v3927 = vrcp.pop %v3811
        %v3928 = vmul.f32 %v3811, %v3927
        %v3929 = vsub.f32 1.0, %v3928
        %v3930 = vmul.f32 %v3927, %v3929
        %v3931 = vadd.f32 %v3927, %v3930
        %vm3932 = vweird.f32 %v3811
        %vm3933 = vweird.f32 %v3927
        %vm3934 = vmor %vm3932, %vm3933
        %v3935 = vsel %vm3934, %v3927, %v3931
        %v3936 = vand.u32 2147483647, %v3811
        %vm3937 = vcmp.eq.f32.partialorder %v3936, 8.507059e+37
        %v3938 = vand.u32 %v3811, 2147483648
        %v3939 = vor.u32 1.1754944e-38, %v3938
        %v3940 = vsel %vm3937, %v3939, %v3935
        %v3941 = vrcp.pop %v3814
        %v3942 = vmul.f32 %v3814, %v3941
        %v3943 = vsub.f32 1.0, %v3942
        %v3944 = vmul.f32 %v3941, %v3943
        %v3945 = vadd.f32 %v3941, %v3944
        %vm3946 = vweird.f32 %v3814
        %vm3947 = vweird.f32 %v3941
        %vm3948 = vmor %vm3946, %vm3947
        %v3949 = vsel %vm3948, %v3941, %v3945
        %v3950 = vand.u32 2147483647, %v3814
        %vm3951 = vcmp.eq.f32.partialorder %v3950, 8.507059e+37
        %v3952 = vand.u32 %v3814, 2147483648
        %v3953 = vor.u32 1.1754944e-38, %v3952
        %v3954 = vsel %vm3951, %v3953, %v3949
        %v3955 = vrcp.pop %v3817
        %v3956 = vmul.f32 %v3817, %v3955
        %v3957 = vsub.f32 1.0, %v3956
        %v3958 = vmul.f32 %v3955, %v3957
        %v3959 = vadd.f32 %v3955, %v3958
        %vm3960 = vweird.f32 %v3817
        %vm3961 = vweird.f32 %v3955
        %vm3962 = vmor %vm3960, %vm3961
        %v3963 = vsel %vm3962, %v3955, %v3959
        %v3964 = vand.u32 2147483647, %v3817
        %vm3965 = vcmp.eq.f32.partialorder %v3964, 8.507059e+37
        %v3966 = vand.u32 %v3817, 2147483648
        %v3967 = vor.u32 1.1754944e-38, %v3966
        %v3968 = vsel %vm3965, %v3967, %v3963
        %v3969 = vrcp.pop %v3820
        %v3970 = vmul.f32 %v3820, %v3969
        %v3971 = vsub.f32 1.0, %v3970
        %v3972 = vmul.f32 %v3969, %v3971
        %v3973 = vadd.f32 %v3969, %v3972
        %vm3974 = vweird.f32 %v3820
        %vm3975 = vweird.f32 %v3969
        %vm3976 = vmor %vm3974, %vm3975
        %v3977 = vsel %vm3976, %v3969, %v3973
        %v3978 = vand.u32 2147483647, %v3820
        %vm3979 = vcmp.eq.f32.partialorder %v3978, 8.507059e+37
        %v3980 = vand.u32 %v3820, 2147483648
        %v3981 = vor.u32 1.1754944e-38, %v3980
        %v3982 = vsel %vm3979, %v3981, %v3977
        %v3983 = vrcp.pop %v3823
        %v3984 = vmul.f32 %v3823, %v3983
        %v3985 = vsub.f32 1.0, %v3984
        %v3986 = vmul.f32 %v3983, %v3985
        %v3987 = vadd.f32 %v3983, %v3986
        %vm3988 = vweird.f32 %v3823
        %vm3989 = vweird.f32 %v3983
        %vm3990 = vmor %vm3988, %vm3989
        %v3991 = vsel %vm3990, %v3983, %v3987
        %v3992 = vand.u32 2147483647, %v3823
        %vm3993 = vcmp.eq.f32.partialorder %v3992, 8.507059e+37
        %v3994 = vand.u32 %v3823, 2147483648
        %v3995 = vor.u32 1.1754944e-38, %v3994
        %v3996 = vsel %vm3993, %v3995, %v3991
        %v3997 = vrcp.pop %v3826
        %v3998 = vmul.f32 %v3826, %v3997
        %v3999 = vsub.f32 1.0, %v3998
        %v4000 = vmul.f32 %v3997, %v3999
        %v4001 = vadd.f32 %v3997, %v4000
        %vm4002 = vweird.f32 %v3826
        %vm4003 = vweird.f32 %v3997
        %vm4004 = vmor %vm4002, %vm4003
        %v4005 = vsel %vm4004, %v3997, %v4001
        %v4006 = vand.u32 2147483647, %v3826
        %vm4007 = vcmp.eq.f32.partialorder %v4006, 8.507059e+37
        %v4008 = vand.u32 %v3826, 2147483648
        %v4009 = vor.u32 1.1754944e-38, %v4008
        %v4010 = vsel %vm4007, %v4009, %v4005
        %v4011 = vrcp.pop %v3829
        %v4012 = vmul.f32 %v3829, %v4011
        %v4013 = vsub.f32 1.0, %v4012
        %v4014 = vmul.f32 %v4011, %v4013
        %v4015 = vadd.f32 %v4011, %v4014
        %vm4016 = vweird.f32 %v3829
        %vm4017 = vweird.f32 %v4011
        %vm4018 = vmor %vm4016, %vm4017
        %v4019 = vsel %vm4018, %v4011, %v4015
        %v4020 = vand.u32 2147483647, %v3829
        %vm4021 = vcmp.eq.f32.partialorder %v4020, 8.507059e+37
        %v4022 = vand.u32 %v3829, 2147483648
        %v4023 = vor.u32 1.1754944e-38, %v4022
        %v4024 = vsel %vm4021, %v4023, %v4019
        %v4025 = vrcp.pop %v3832
        %v4026 = vmul.f32 %v3832, %v4025
        %v4027 = vsub.f32 1.0, %v4026
        %v4028 = vmul.f32 %v4025, %v4027
        %v4029 = vadd.f32 %v4025, %v4028
        %vm4030 = vweird.f32 %v3832
        %vm4031 = vweird.f32 %v4025
        %vm4032 = vmor %vm4030, %vm4031
        %v4033 = vsel %vm4032, %v4025, %v4029
        %v4034 = vand.u32 2147483647, %v3832
        %vm4035 = vcmp.eq.f32.partialorder %v4034, 8.507059e+37
        %v4036 = vand.u32 %v3832, 2147483648
        %v4037 = vor.u32 1.1754944e-38, %v4036
        %v4038 = vsel %vm4035, %v4037, %v4033
        %v4039 = vrcp.pop %v3835
        %v4040 = vmul.f32 %v3835, %v4039
        %v4041 = vsub.f32 1.0, %v4040
        %v4042 = vmul.f32 %v4039, %v4041
        %v4043 = vadd.f32 %v4039, %v4042
        %vm4044 = vweird.f32 %v3835
        %vm4045 = vweird.f32 %v4039
        %vm4046 = vmor %vm4044, %vm4045
        %v4047 = vsel %vm4046, %v4039, %v4043
        %v4048 = vand.u32 2147483647, %v3835
        %vm4049 = vcmp.eq.f32.partialorder %v4048, 8.507059e+37
        %v4050 = vand.u32 %v3835, 2147483648
        %v4051 = vor.u32 1.1754944e-38, %v4050
        %v4052 = vsel %vm4049, %v4051, %v4047
        %v4053 = vrcp.pop %v3838
        %v4054 = vmul.f32 %v3838, %v4053
        %v4055 = vsub.f32 1.0, %v4054
        %v4056 = vmul.f32 %v4053, %v4055
        %v4057 = vadd.f32 %v4053, %v4056
        %vm4058 = vweird.f32 %v3838
        %vm4059 = vweird.f32 %v4053
        %vm4060 = vmor %vm4058, %vm4059
        %v4061 = vsel %vm4060, %v4053, %v4057
        %v4062 = vand.u32 2147483647, %v3838
        %vm4063 = vcmp.eq.f32.partialorder %v4062, 8.507059e+37
        %v4064 = vand.u32 %v3838, 2147483648
        %v4065 = vor.u32 1.1754944e-38, %v4064
        %v4066 = vsel %vm4063, %v4065, %v4061
        %v4067 = vrcp.pop %v3841
        %v4068 = vmul.f32 %v3841, %v4067
        %v4069 = vsub.f32 1.0, %v4068
        %v4070 = vmul.f32 %v4067, %v4069
        %v4071 = vadd.f32 %v4067, %v4070
        %vm4072 = vweird.f32 %v3841
        %vm4073 = vweird.f32 %v4067
        %vm4074 = vmor %vm4072, %vm4073
        %v4075 = vsel %vm4074, %v4067, %v4071
        %v4076 = vand.u32 2147483647, %v3841
        %vm4077 = vcmp.eq.f32.partialorder %v4076, 8.507059e+37
        %v4078 = vand.u32 %v3841, 2147483648
        %v4079 = vor.u32 1.1754944e-38, %v4078
        %v4080 = vsel %vm4077, %v4079, %v4075
        %v4081 = vrcp.pop %v3844
        %v4082 = vmul.f32 %v3844, %v4081
        %v4083 = vsub.f32 1.0, %v4082
        %v4084 = vmul.f32 %v4081, %v4083
        %v4085 = vadd.f32 %v4081, %v4084
        %vm4086 = vweird.f32 %v3844
        %vm4087 = vweird.f32 %v4081
        %vm4088 = vmor %vm4086, %vm4087
        %v4089 = vsel %vm4088, %v4081, %v4085
        %v4090 = vand.u32 2147483647, %v3844
        %vm4091 = vcmp.eq.f32.partialorder %v4090, 8.507059e+37
        %v4092 = vand.u32 %v3844, 2147483648
        %v4093 = vor.u32 1.1754944e-38, %v4092
        %v4094 = vsel %vm4091, %v4093, %v4089
        %v4095 = vrcp.pop %v3847
        %v4096 = vmul.f32 %v3847, %v4095
        %v4097 = vsub.f32 1.0, %v4096
        %v4098 = vmul.f32 %v4095, %v4097
        %v4099 = vadd.f32 %v4095, %v4098
        %vm4100 = vweird.f32 %v3847
        %vm4101 = vweird.f32 %v4095
        %vm4102 = vmor %vm4100, %vm4101
        %v4103 = vsel %vm4102, %v4095, %v4099
        %v4104 = vand.u32 2147483647, %v3847
        %vm4105 = vcmp.eq.f32.partialorder %v4104, 8.507059e+37
        %v4106 = vand.u32 %v3847, 2147483648
        %v4107 = vor.u32 1.1754944e-38, %v4106
        %v4108 = vsel %vm4105, %v4107, %v4103
        %v4109 = vrcp.pop %v3850
        %v4110 = vmul.f32 %v3850, %v4109
        %v4111 = vsub.f32 1.0, %v4110
        %v4112 = vmul.f32 %v4109, %v4111
        %v4113 = vadd.f32 %v4109, %v4112
        %vm4114 = vweird.f32 %v3850
        %vm4115 = vweird.f32 %v4109
        %vm4116 = vmor %vm4114, %vm4115
        %v4117 = vsel %vm4116, %v4109, %v4113
        %v4118 = vand.u32 2147483647, %v3850
        %vm4119 = vcmp.eq.f32.partialorder %v4118, 8.507059e+37
        %v4120 = vand.u32 %v3850, 2147483648
        %v4121 = vor.u32 1.1754944e-38, %v4120
        %v4122 = vsel %vm4119, %v4121, %v4117
        %v4123 = vrcp.pop %v3853
        %v4124 = vmul.f32 %v3853, %v4123
        %v4125 = vsub.f32 1.0, %v4124
        %v4126 = vmul.f32 %v4123, %v4125
        %v4127 = vadd.f32 %v4123, %v4126
        %vm4128 = vweird.f32 %v3853
        %vm4129 = vweird.f32 %v4123
        %vm4130 = vmor %vm4128, %vm4129
        %v4131 = vsel %vm4130, %v4123, %v4127
        %v4132 = vand.u32 2147483647, %v3853
        %vm4133 = vcmp.eq.f32.partialorder %v4132, 8.507059e+37
        %v4134 = vand.u32 %v3853, 2147483648
        %v4135 = vor.u32 1.1754944e-38, %v4134
        %v4136 = vsel %vm4133, %v4135, %v4131
        %v4137 = vrcp.pop %v3856
        %v4138 = vmul.f32 %v3856, %v4137
        %v4139 = vsub.f32 1.0, %v4138
        %v4140 = vmul.f32 %v4137, %v4139
        %v4141 = vadd.f32 %v4137, %v4140
        %vm4142 = vweird.f32 %v3856
        %vm4143 = vweird.f32 %v4137
        %vm4144 = vmor %vm4142, %vm4143
        %v4145 = vsel %vm4144, %v4137, %v4141
        %v4146 = vand.u32 2147483647, %v3856
        %vm4147 = vcmp.eq.f32.partialorder %v4146, 8.507059e+37
        %v4148 = vand.u32 %v3856, 2147483648
        %v4149 = vor.u32 1.1754944e-38, %v4148
        %v4150 = vsel %vm4147, %v4149, %v4145
        %v4151 = vrcp.pop %v3859
        %v4152 = vmul.f32 %v3859, %v4151
        %v4153 = vsub.f32 1.0, %v4152
        %v4154 = vmul.f32 %v4151, %v4153
        %v4155 = vadd.f32 %v4151, %v4154
        %vm4156 = vweird.f32 %v3859
        %vm4157 = vweird.f32 %v4151
        %vm4158 = vmor %vm4156, %vm4157
        %v4159 = vsel %vm4158, %v4151, %v4155
        %v4160 = vand.u32 2147483647, %v3859
        %vm4161 = vcmp.eq.f32.partialorder %v4160, 8.507059e+37
        %v4162 = vand.u32 %v3859, 2147483648
        %v4163 = vor.u32 1.1754944e-38, %v4162
        %v4164 = vsel %vm4161, %v4163, %v4159
        %v4165 = vrcp.pop %v3862
        %v4166 = vmul.f32 %v3862, %v4165
        %v4167 = vsub.f32 1.0, %v4166
        %v4168 = vmul.f32 %v4165, %v4167
        %v4169 = vadd.f32 %v4165, %v4168
        %vm4170 = vweird.f32 %v3862
        %vm4171 = vweird.f32 %v4165
        %vm4172 = vmor %vm4170, %vm4171
        %v4173 = vsel %vm4172, %v4165, %v4169
        %v4174 = vand.u32 2147483647, %v3862
        %vm4175 = vcmp.eq.f32.partialorder %v4174, 8.507059e+37
        %v4176 = vand.u32 %v3862, 2147483648
        %v4177 = vor.u32 1.1754944e-38, %v4176
        %v4178 = vsel %vm4175, %v4177, %v4173
        %v4179 = vrcp.pop %v3865
        %v4180 = vmul.f32 %v3865, %v4179
        %v4181 = vsub.f32 1.0, %v4180
        %v4182 = vmul.f32 %v4179, %v4181
        %v4183 = vadd.f32 %v4179, %v4182
        %vm4184 = vweird.f32 %v3865
        %vm4185 = vweird.f32 %v4179
        %vm4186 = vmor %vm4184, %vm4185
        %v4187 = vsel %vm4186, %v4179, %v4183
        %v4188 = vand.u32 2147483647, %v3865
        %vm4189 = vcmp.eq.f32.partialorder %v4188, 8.507059e+37
        %v4190 = vand.u32 %v3865, 2147483648
        %v4191 = vor.u32 1.1754944e-38, %v4190
        %v4192 = vsel %vm4189, %v4191, %v4187
        %v4193 = vrcp.pop %v3868
        %v4194 = vmul.f32 %v3868, %v4193
        %v4195 = vsub.f32 1.0, %v4194
        %v4196 = vmul.f32 %v4193, %v4195
        %v4197 = vadd.f32 %v4193, %v4196
        %vm4198 = vweird.f32 %v3868
        %vm4199 = vweird.f32 %v4193
        %vm4200 = vmor %vm4198, %vm4199
        %v4201 = vsel %vm4200, %v4193, %v4197
        %v4202 = vand.u32 2147483647, %v3868
        %vm4203 = vcmp.eq.f32.partialorder %v4202, 8.507059e+37
        %v4204 = vand.u32 %v3868, 2147483648
        %v4205 = vor.u32 1.1754944e-38, %v4204
        %v4206 = vsel %vm4203, %v4205, %v4201
        %v4207 = vrcp.pop %v3871
        %v4208 = vmul.f32 %v3871, %v4207
        %v4209 = vsub.f32 1.0, %v4208
        %v4210 = vmul.f32 %v4207, %v4209
        %v4211 = vadd.f32 %v4207, %v4210
        %vm4212 = vweird.f32 %v3871
        %vm4213 = vweird.f32 %v4207
        %vm4214 = vmor %vm4212, %vm4213
        %v4215 = vsel %vm4214, %v4207, %v4211
        %v4216 = vand.u32 2147483647, %v3871
        %vm4217 = vcmp.eq.f32.partialorder %v4216, 8.507059e+37
        %v4218 = vand.u32 %v3871, 2147483648
        %v4219 = vor.u32 1.1754944e-38, %v4218
        %v4220 = vsel %vm4217, %v4219, %v4215
        %v4221 = vrcp.pop %v3874
        %v4222 = vmul.f32 %v3874, %v4221
        %v4223 = vsub.f32 1.0, %v4222
        %v4224 = vmul.f32 %v4221, %v4223
        %v4225 = vadd.f32 %v4221, %v4224
        %vm4226 = vweird.f32 %v3874
        %vm4227 = vweird.f32 %v4221
        %vm4228 = vmor %vm4226, %vm4227
        %v4229 = vsel %vm4228, %v4221, %v4225
        %v4230 = vand.u32 2147483647, %v3874
        %vm4231 = vcmp.eq.f32.partialorder %v4230, 8.507059e+37
        %v4232 = vand.u32 %v3874, 2147483648
        %v4233 = vor.u32 1.1754944e-38, %v4232
        %v4234 = vsel %vm4231, %v4233, %v4229
        %v4235 = vrcp.pop %v3877
        %v4236 = vmul.f32 %v3877, %v4235
        %v4237 = vsub.f32 1.0, %v4236
        %v4238 = vmul.f32 %v4235, %v4237
        %v4239 = vadd.f32 %v4235, %v4238
        %vm4240 = vweird.f32 %v3877
        %vm4241 = vweird.f32 %v4235
        %vm4242 = vmor %vm4240, %vm4241
        %v4243 = vsel %vm4242, %v4235, %v4239
        %v4244 = vand.u32 2147483647, %v3877
        %vm4245 = vcmp.eq.f32.partialorder %v4244, 8.507059e+37
        %v4246 = vand.u32 %v3877, 2147483648
        %v4247 = vor.u32 1.1754944e-38, %v4246
        %v4248 = vsel %vm4245, %v4247, %v4243
        %v4249 = vrcp.pop %v3880
        %v4250 = vmul.f32 %v3880, %v4249
        %v4251 = vsub.f32 1.0, %v4250
        %v4252 = vmul.f32 %v4249, %v4251
        %v4253 = vadd.f32 %v4249, %v4252
        %vm4254 = vweird.f32 %v3880
        %vm4255 = vweird.f32 %v4249
        %vm4256 = vmor %vm4254, %vm4255
        %v4257 = vsel %vm4256, %v4249, %v4253
        %v4258 = vand.u32 2147483647, %v3880
        %vm4259 = vcmp.eq.f32.partialorder %v4258, 8.507059e+37
        %v4260 = vand.u32 %v3880, 2147483648
        %v4261 = vor.u32 1.1754944e-38, %v4260
        %v4262 = vsel %vm4259, %v4261, %v4257
        %v4263 = vrcp.pop %v3883
        %v4264 = vmul.f32 %v3883, %v4263
        %v4265 = vsub.f32 1.0, %v4264
        %v4266 = vmul.f32 %v4263, %v4265
        %v4267 = vadd.f32 %v4263, %v4266
        %vm4268 = vweird.f32 %v3883
        %vm4269 = vweird.f32 %v4263
        %vm4270 = vmor %vm4268, %vm4269
        %v4271 = vsel %vm4270, %v4263, %v4267
        %v4272 = vand.u32 2147483647, %v3883
        %vm4273 = vcmp.eq.f32.partialorder %v4272, 8.507059e+37
        %v4274 = vand.u32 %v3883, 2147483648
        %v4275 = vor.u32 1.1754944e-38, %v4274
        %v4276 = vsel %vm4273, %v4275, %v4271
        %v4277 = vrcp.pop %v3886
        %v4278 = vmul.f32 %v3886, %v4277
        %v4279 = vsub.f32 1.0, %v4278
        %v4280 = vmul.f32 %v4277, %v4279
        %v4281 = vadd.f32 %v4277, %v4280
        %vm4282 = vweird.f32 %v3886
        %vm4283 = vweird.f32 %v4277
        %vm4284 = vmor %vm4282, %vm4283
        %v4285 = vsel %vm4284, %v4277, %v4281
        %v4286 = vand.u32 2147483647, %v3886
        %vm4287 = vcmp.eq.f32.partialorder %v4286, 8.507059e+37
        %v4288 = vand.u32 %v3886, 2147483648
        %v4289 = vor.u32 1.1754944e-38, %v4288
        %v4290 = vsel %vm4287, %v4289, %v4285
        %v4291 = vrcp.pop %v3889
        %v4292 = vmul.f32 %v3889, %v4291
        %v4293 = vsub.f32 1.0, %v4292
        %v4294 = vmul.f32 %v4291, %v4293
        %v4295 = vadd.f32 %v4291, %v4294
        %vm4296 = vweird.f32 %v3889
        %vm4297 = vweird.f32 %v4291
        %vm4298 = vmor %vm4296, %vm4297
        %v4299 = vsel %vm4298, %v4291, %v4295
        %v4300 = vand.u32 2147483647, %v3889
        %vm4301 = vcmp.eq.f32.partialorder %v4300, 8.507059e+37
        %v4302 = vand.u32 %v3889, 2147483648
        %v4303 = vor.u32 1.1754944e-38, %v4302
        %v4304 = vsel %vm4301, %v4303, %v4299
        %v4305 = vrcp.pop %v3892
        %v4306 = vmul.f32 %v3892, %v4305
        %v4307 = vsub.f32 1.0, %v4306
        %v4308 = vmul.f32 %v4305, %v4307
        %v4309 = vadd.f32 %v4305, %v4308
        %vm4310 = vweird.f32 %v3892
        %vm4311 = vweird.f32 %v4305
        %vm4312 = vmor %vm4310, %vm4311
        %v4313 = vsel %vm4312, %v4305, %v4309
        %v4314 = vand.u32 2147483647, %v3892
        %vm4315 = vcmp.eq.f32.partialorder %v4314, 8.507059e+37
        %v4316 = vand.u32 %v3892, 2147483648
        %v4317 = vor.u32 1.1754944e-38, %v4316
        %v4318 = vsel %vm4315, %v4317, %v4313
        %v4319 = vrcp.pop %v3895
        %v4320 = vmul.f32 %v3895, %v4319
        %v4321 = vsub.f32 1.0, %v4320
        %v4322 = vmul.f32 %v4319, %v4321
        %v4323 = vadd.f32 %v4319, %v4322
        %vm4324 = vweird.f32 %v3895
        %vm4325 = vweird.f32 %v4319
        %vm4326 = vmor %vm4324, %vm4325
        %v4327 = vsel %vm4326, %v4319, %v4323
        %v4328 = vand.u32 2147483647, %v3895
        %vm4329 = vcmp.eq.f32.partialorder %v4328, 8.507059e+37
        %v4330 = vand.u32 %v3895, 2147483648
        %v4331 = vor.u32 1.1754944e-38, %v4330
        %v4332 = vsel %vm4329, %v4331, %v4327
        %v4333 = vrcp.pop %v3898
        %v4334 = vmul.f32 %v3898, %v4333
        %v4335 = vsub.f32 1.0, %v4334
        %v4336 = vmul.f32 %v4333, %v4335
        %v4337 = vadd.f32 %v4333, %v4336
        %vm4338 = vweird.f32 %v3898
        %vm4339 = vweird.f32 %v4333
        %vm4340 = vmor %vm4338, %vm4339
        %v4341 = vsel %vm4340, %v4333, %v4337
        %v4342 = vand.u32 2147483647, %v3898
        %vm4343 = vcmp.eq.f32.partialorder %v4342, 8.507059e+37
        %v4344 = vand.u32 %v3898, 2147483648
        %v4345 = vor.u32 1.1754944e-38, %v4344
        %v4346 = vsel %vm4343, %v4345, %v4341
        %v4347 = vmul.f32 %v3676, %v3912
        %v4348 = vmul.f32 %v3678, %v3912
        %v4349 = vmul.f32 %v3680, %v3926
        %v4350 = vmul.f32 %v3682, %v3926
        %v4351 = vmul.f32 %v3684, %v3940
        %v4352 = vmul.f32 %v3686, %v3940
        %v4353 = vmul.f32 %v3688, %v3954
        %v4354 = vmul.f32 %v3690, %v3954
        %v4355 = vmul.f32 %v3692, %v3968
        %v4356 = vmul.f32 %v3694, %v3968
        %v4357 = vmul.f32 %v3696, %v3982
        %v4358 = vmul.f32 %v3698, %v3982
        %v4359 = vmul.f32 %v3700, %v3996
        %v4360 = vmul.f32 %v3702, %v3996
        %v4361 = vmul.f32 %v3704, %v4010
        %v4362 = vmul.f32 %v3706, %v4010
        %v4363 = vmul.f32 %v3708, %v4024
        %v4364 = vmul.f32 %v3710, %v4024
        %v4365 = vmul.f32 %v3712, %v4038
        %v4366 = vmul.f32 %v3714, %v4038
        %v4367 = vmul.f32 %v3716, %v4052
        %v4368 = vmul.f32 %v3718, %v4052
        %v4369 = vmul.f32 %v3720, %v4066
        %v4370 = vmul.f32 %v3722, %v4066
        %v4371 = vmul.f32 %v3724, %v4080
        %v4372 = vmul.f32 %v3726, %v4080
        %v4373 = vmul.f32 %v3728, %v4094
        %v4374 = vmul.f32 %v3730, %v4094
        %v4375 = vmul.f32 %v3732, %v4108
        %v4376 = vmul.f32 %v3734, %v4108
        %v4377 = vmul.f32 %v3736, %v4122
        %v4378 = vmul.f32 %v3738, %v4122
        %v4379 = vmul.f32 %v3740, %v4136
        %v4380 = vmul.f32 %v3742, %v4136
        %v4381 = vmul.f32 %v3744, %v4150
        %v4382 = vmul.f32 %v3746, %v4150
        %v4383 = vmul.f32 %v3748, %v4164
        %v4384 = vmul.f32 %v3750, %v4164
        %v4385 = vmul.f32 %v3752, %v4178
        %v4386 = vmul.f32 %v3754, %v4178
        %v4387 = vmul.f32 %v3756, %v4192
        %v4388 = vmul.f32 %v3758, %v4192
        %v4389 = vmul.f32 %v3760, %v4206
        %v4390 = vmul.f32 %v3762, %v4206
        %v4391 = vmul.f32 %v3764, %v4220
        %v4392 = vmul.f32 %v3766, %v4220
        %v4393 = vmul.f32 %v3768, %v4234
        %v4394 = vmul.f32 %v3770, %v4234
        %v4395 = vmul.f32 %v3772, %v4248
        %v4396 = vmul.f32 %v3774, %v4248
        %v4397 = vmul.f32 %v3776, %v4262
        %v4398 = vmul.f32 %v3778, %v4262
        %v4399 = vmul.f32 %v3780, %v4276
        %v4400 = vmul.f32 %v3782, %v4276
        %v4401 = vmul.f32 %v3784, %v4290
        %v4402 = vmul.f32 %v3786, %v4290
        %v4403 = vmul.f32 %v3788, %v4304
        %v4404 = vmul.f32 %v3790, %v4304
        %v4405 = vmul.f32 %v3792, %v4318
        %v4406 = vmul.f32 %v3794, %v4318
        %v4407 = vmul.f32 %v3796, %v4332
        %v4408 = vmul.f32 %v3798, %v4332
        %v4409 = vmul.f32 %v3800, %v4346
        %v4410 = vmul.f32 %v3802, %v4346
        %v4411 = vpack.c.bf16 %v4349, %v4347
        %v4412 = vpack.c.bf16 %v4350, %v4348
        %v4413 = vpack.c.bf16 %v4353, %v4351
        %v4414 = vpack.c.bf16 %v4354, %v4352
        %v4415 = vpack.c.bf16 %v4357, %v4355
        %v4416 = vpack.c.bf16 %v4358, %v4356
        %v4417 = vpack.c.bf16 %v4361, %v4359
        %v4418 = vpack.c.bf16 %v4362, %v4360
        %v4419 = vpack.c.bf16 %v4365, %v4363
        %v4420 = vpack.c.bf16 %v4366, %v4364
        %v4421 = vpack.c.bf16 %v4369, %v4367
        %v4422 = vpack.c.bf16 %v4370, %v4368
        %v4423 = vpack.c.bf16 %v4373, %v4371
        %v4424 = vpack.c.bf16 %v4374, %v4372
        %v4425 = vpack.c.bf16 %v4377, %v4375
        %v4426 = vpack.c.bf16 %v4378, %v4376
        %v4427 = vpack.c.bf16 %v4381, %v4379
        %v4428 = vpack.c.bf16 %v4382, %v4380
        %v4429 = vpack.c.bf16 %v4385, %v4383
        %v4430 = vpack.c.bf16 %v4386, %v4384
        %v4431 = vpack.c.bf16 %v4389, %v4387
        %v4432 = vpack.c.bf16 %v4390, %v4388
        %v4433 = vpack.c.bf16 %v4393, %v4391
        %v4434 = vpack.c.bf16 %v4394, %v4392
        %v4435 = vpack.c.bf16 %v4397, %v4395
        %v4436 = vpack.c.bf16 %v4398, %v4396
        %v4437 = vpack.c.bf16 %v4401, %v4399
        %v4438 = vpack.c.bf16 %v4402, %v4400
        %v4439 = vpack.c.bf16 %v4405, %v4403
        %v4440 = vpack.c.bf16 %v4406, %v4404
        %v4441 = vpack.c.bf16 %v4409, %v4407
        %v4442 = vpack.c.bf16 %v4410, %v4408
        %v4475 = vunpack.c.l.b16 %v3097
        %v4476 = vunpack.c.l.b16 %v3098
        %v4477 = vunpack.c.l.b16 %v3099
        %v4478 = vunpack.c.l.b16 %v3100
        %v4479 = vunpack.c.l.b16 %v3101
        %v4480 = vunpack.c.l.b16 %v3102
        %v4481 = vunpack.c.l.b16 %v3103
        %v4482 = vunpack.c.l.b16 %v3104
        %v4483 = vunpack.c.l.b16 %v3105
        %v4484 = vunpack.c.l.b16 %v3106
        %v4485 = vunpack.c.l.b16 %v3107
        %v4486 = vunpack.c.l.b16 %v3108
        %v4487 = vunpack.c.l.b16 %v3109
        %v4488 = vunpack.c.l.b16 %v3110
        %v4489 = vunpack.c.l.b16 %v3111
        %v4490 = vunpack.c.l.b16 %v3112
        %v4491 = vunpack.c.l.b16 %v3113
        %v4492 = vunpack.c.l.b16 %v3114
        %v4493 = vunpack.c.l.b16 %v3115
        %v4494 = vunpack.c.l.b16 %v3116
        %v4495 = vunpack.c.l.b16 %v3117
        %v4496 = vunpack.c.l.b16 %v3118
        %v4497 = vunpack.c.l.b16 %v3119
        %v4498 = vunpack.c.l.b16 %v3120
        %v4499 = vunpack.c.l.b16 %v3121
        %v4500 = vunpack.c.l.b16 %v3122
        %v4501 = vunpack.c.l.b16 %v3123
        %v4502 = vunpack.c.l.b16 %v3124
        %v4503 = vunpack.c.l.b16 %v3125
        %v4504 = vunpack.c.l.b16 %v3126
        %v4505 = vunpack.c.l.b16 %v3127
        %v4506 = vunpack.c.l.b16 %v3128
        %v4507 = vpack.c.b16 %v4476, %v4475
        %v4508 = vpack.c.b16 %v4478, %v4477
        %v4509 = vpack.c.b16 %v4480, %v4479
        %v4510 = vpack.c.b16 %v4482, %v4481
        %v4511 = vpack.c.b16 %v4484, %v4483
        %v4512 = vpack.c.b16 %v4486, %v4485
        %v4513 = vpack.c.b16 %v4488, %v4487
        %v4514 = vpack.c.b16 %v4490, %v4489
        %v4515 = vpack.c.b16 %v4492, %v4491
        %v4516 = vpack.c.b16 %v4494, %v4493
        %v4517 = vpack.c.b16 %v4496, %v4495
        %v4518 = vpack.c.b16 %v4498, %v4497
        %v4519 = vpack.c.b16 %v4500, %v4499
        %v4520 = vpack.c.b16 %v4502, %v4501
        %v4521 = vpack.c.b16 %v4504, %v4503
        %v4522 = vpack.c.b16 %v4506, %v4505
        %4539 = vmatpush.bf16.msra.mxu0 %v4514
        %4540 = vmatpush.bf16.msra.mxu0 %v4513
        %4541 = vmatpush.bf16.msra.mxu0 %v4512
        %4542 = vmatpush.bf16.msra.mxu0 %v4511
        %4543 = vmatpush.bf16.msra.mxu0 %v4510
        %4544 = vmatpush.bf16.msra.mxu0 %v4509
        %4545 = vmatpush.bf16.msra.mxu0 %v4508
        %4546 = vmatpush.bf16.msra.mxu0 %v4507
        %4547 = vmatmul.bf16.gmra.mxu0 %v4411
        %v4548 = vpop.f32.mrf.mxu0
        %v4549 = vadd.f32 0.0, %v4548
        %v4550 = vpop.f32.mrf.mxu0
        %v4551 = vadd.f32 0.0, %v4550
        %4552 = vmatmul.bf16.gmra.mxu0 %v4413
        %v4553 = vpop.f32.mrf.mxu0
        %v4554 = vadd.f32 0.0, %v4553
        %v4555 = vpop.f32.mrf.mxu0
        %v4556 = vadd.f32 0.0, %v4555
        %4557 = vmatmul.bf16.gmra.mxu0 %v4415
        %v4558 = vpop.f32.mrf.mxu0
        %v4559 = vadd.f32 0.0, %v4558
        %v4560 = vpop.f32.mrf.mxu0
        %v4561 = vadd.f32 0.0, %v4560
        %4562 = vmatmul.bf16.gmra.mxu0 %v4417
        %v4563 = vpop.f32.mrf.mxu0
        %v4564 = vadd.f32 0.0, %v4563
        %v4565 = vpop.f32.mrf.mxu0
        %v4566 = vadd.f32 0.0, %v4565
        %4567 = vmatmul.bf16.gmra.mxu0 %v4419
        %v4568 = vpop.f32.mrf.mxu0
        %v4569 = vadd.f32 0.0, %v4568
        %v4570 = vpop.f32.mrf.mxu0
        %v4571 = vadd.f32 0.0, %v4570
        %4572 = vmatmul.bf16.gmra.mxu0 %v4421
        %v4573 = vpop.f32.mrf.mxu0
        %v4574 = vadd.f32 0.0, %v4573
        %v4575 = vpop.f32.mrf.mxu0
        %v4576 = vadd.f32 0.0, %v4575
        %4577 = vmatmul.bf16.gmra.mxu0 %v4423
        %v4578 = vpop.f32.mrf.mxu0
        %v4579 = vadd.f32 0.0, %v4578
        %v4580 = vpop.f32.mrf.mxu0
        %v4581 = vadd.f32 0.0, %v4580
        %4582 = vmatmul.bf16.gmra.mxu0 %v4425
        %v4583 = vpop.f32.mrf.mxu0
        %v4584 = vadd.f32 0.0, %v4583
        %v4585 = vpop.f32.mrf.mxu0
        %v4586 = vadd.f32 0.0, %v4585
        %4587 = vmatmul.bf16.gmra.mxu0 %v4427
        %v4588 = vpop.f32.mrf.mxu0
        %v4589 = vadd.f32 0.0, %v4588
        %v4590 = vpop.f32.mrf.mxu0
        %v4591 = vadd.f32 0.0, %v4590
        %4592 = vmatmul.bf16.gmra.mxu0 %v4429
        %v4593 = vpop.f32.mrf.mxu0
        %v4594 = vadd.f32 0.0, %v4593
        %v4595 = vpop.f32.mrf.mxu0
        %v4596 = vadd.f32 0.0, %v4595
        %4597 = vmatmul.bf16.gmra.mxu0 %v4431
        %v4598 = vpop.f32.mrf.mxu0
        %v4599 = vadd.f32 0.0, %v4598
        %v4600 = vpop.f32.mrf.mxu0
        %v4601 = vadd.f32 0.0, %v4600
        %4602 = vmatmul.bf16.gmra.mxu0 %v4433
        %v4603 = vpop.f32.mrf.mxu0
        %v4604 = vadd.f32 0.0, %v4603
        %v4605 = vpop.f32.mrf.mxu0
        %v4606 = vadd.f32 0.0, %v4605
        %4607 = vmatmul.bf16.gmra.mxu0 %v4435
        %v4608 = vpop.f32.mrf.mxu0
        %v4609 = vadd.f32 0.0, %v4608
        %v4610 = vpop.f32.mrf.mxu0
        %v4611 = vadd.f32 0.0, %v4610
        %4612 = vmatmul.bf16.gmra.mxu0 %v4437
        %v4613 = vpop.f32.mrf.mxu0
        %v4614 = vadd.f32 0.0, %v4613
        %v4615 = vpop.f32.mrf.mxu0
        %v4616 = vadd.f32 0.0, %v4615
        %4617 = vmatmul.bf16.gmra.mxu0 %v4439
        %v4618 = vpop.f32.mrf.mxu0
        %v4619 = vadd.f32 0.0, %v4618
        %v4620 = vpop.f32.mrf.mxu0
        %v4621 = vadd.f32 0.0, %v4620
        %4622 = vmatmul.bf16.gmra.mxu0 %v4441
        %v4623 = vpop.f32.mrf.mxu0
        %v4624 = vadd.f32 0.0, %v4623
        %v4625 = vpop.f32.mrf.mxu0
        %v4626 = vadd.f32 0.0, %v4625
        %4627 = vdwg.mxu0
        %4628 = vmatpush.bf16.msra.mxu0 %v4522
        %4629 = vmatpush.bf16.msra.mxu0 %v4521
        %4630 = vmatpush.bf16.msra.mxu0 %v4520
        %4631 = vmatpush.bf16.msra.mxu0 %v4519
        %4632 = vmatpush.bf16.msra.mxu0 %v4518
        %4633 = vmatpush.bf16.msra.mxu0 %v4517
        %4634 = vmatpush.bf16.msra.mxu0 %v4516
        %4635 = vmatpush.bf16.msra.mxu0 %v4515
        %4636 = vmatmul.bf16.gmra.mxu0 %v4412
        %v4637 = vpop.f32.mrf.mxu0
        %v4638 = vadd.f32 %v4549, %v4637
        %v4639 = vpop.f32.mrf.mxu0
        %v4640 = vadd.f32 %v4551, %v4639
        %4641 = vmatmul.bf16.gmra.mxu0 %v4414
        %v4642 = vpop.f32.mrf.mxu0
        %v4643 = vadd.f32 %v4554, %v4642
        %v4644 = vpop.f32.mrf.mxu0
        %v4645 = vadd.f32 %v4556, %v4644
        %4646 = vmatmul.bf16.gmra.mxu0 %v4416
        %v4647 = vpop.f32.mrf.mxu0
        %v4648 = vadd.f32 %v4559, %v4647
        %v4649 = vpop.f32.mrf.mxu0
        %v4650 = vadd.f32 %v4561, %v4649
        %4651 = vmatmul.bf16.gmra.mxu0 %v4418
        %v4652 = vpop.f32.mrf.mxu0
        %v4653 = vadd.f32 %v4564, %v4652
        %v4654 = vpop.f32.mrf.mxu0
        %v4655 = vadd.f32 %v4566, %v4654
        %4656 = vmatmul.bf16.gmra.mxu0 %v4420
        %v4657 = vpop.f32.mrf.mxu0
        %v4658 = vadd.f32 %v4569, %v4657
        %v4659 = vpop.f32.mrf.mxu0
        %v4660 = vadd.f32 %v4571, %v4659
        %4661 = vmatmul.bf16.gmra.mxu0 %v4422
        %v4662 = vpop.f32.mrf.mxu0
        %v4663 = vadd.f32 %v4574, %v4662
        %v4664 = vpop.f32.mrf.mxu0
        %v4665 = vadd.f32 %v4576, %v4664
        %4666 = vmatmul.bf16.gmra.mxu0 %v4424
        %v4667 = vpop.f32.mrf.mxu0
        %v4668 = vadd.f32 %v4579, %v4667
        %v4669 = vpop.f32.mrf.mxu0
        %v4670 = vadd.f32 %v4581, %v4669
        %4671 = vmatmul.bf16.gmra.mxu0 %v4426
        %v4672 = vpop.f32.mrf.mxu0
        %v4673 = vadd.f32 %v4584, %v4672
        %v4674 = vpop.f32.mrf.mxu0
        %v4675 = vadd.f32 %v4586, %v4674
        %4676 = vmatmul.bf16.gmra.mxu0 %v4428
        %v4677 = vpop.f32.mrf.mxu0
        %v4678 = vadd.f32 %v4589, %v4677
        %v4679 = vpop.f32.mrf.mxu0
        %v4680 = vadd.f32 %v4591, %v4679
        %4681 = vmatmul.bf16.gmra.mxu0 %v4430
        %v4682 = vpop.f32.mrf.mxu0
        %v4683 = vadd.f32 %v4594, %v4682
        %v4684 = vpop.f32.mrf.mxu0
        %v4685 = vadd.f32 %v4596, %v4684
        %4686 = vmatmul.bf16.gmra.mxu0 %v4432
        %v4687 = vpop.f32.mrf.mxu0
        %v4688 = vadd.f32 %v4599, %v4687
        %v4689 = vpop.f32.mrf.mxu0
        %v4690 = vadd.f32 %v4601, %v4689
        %4691 = vmatmul.bf16.gmra.mxu0 %v4434
        %v4692 = vpop.f32.mrf.mxu0
        %v4693 = vadd.f32 %v4604, %v4692
        %v4694 = vpop.f32.mrf.mxu0
        %v4695 = vadd.f32 %v4606, %v4694
        %4696 = vmatmul.bf16.gmra.mxu0 %v4436
        %v4697 = vpop.f32.mrf.mxu0
        %v4698 = vadd.f32 %v4609, %v4697
        %v4699 = vpop.f32.mrf.mxu0
        %v4700 = vadd.f32 %v4611, %v4699
        %4701 = vmatmul.bf16.gmra.mxu0 %v4438
        %v4702 = vpop.f32.mrf.mxu0
        %v4703 = vadd.f32 %v4614, %v4702
        %v4704 = vpop.f32.mrf.mxu0
        %v4705 = vadd.f32 %v4616, %v4704
        %4706 = vmatmul.bf16.gmra.mxu0 %v4440
        %v4707 = vpop.f32.mrf.mxu0
        %v4708 = vadd.f32 %v4619, %v4707
        %v4709 = vpop.f32.mrf.mxu0
        %v4710 = vadd.f32 %v4621, %v4709
        %4711 = vmatmul.bf16.gmra.mxu0 %v4442
        %v4712 = vpop.f32.mrf.mxu0
        %v4713 = vadd.f32 %v4624, %v4712
        %v4714 = vpop.f32.mrf.mxu0
        %v4715 = vadd.f32 %v4626, %v4714
        %4716 = vdwg.mxu0
        %v4717 = vpack.c.bf16 %v4638, %v4638
        %v4718 = vpack.c.bf16 %v4640, %v4640
        %v4719 = vpack.c.bf16 %v4643, %v4643
        %v4720 = vpack.c.bf16 %v4645, %v4645
        %v4721 = vpack.c.bf16 %v4648, %v4648
        %v4722 = vpack.c.bf16 %v4650, %v4650
        %v4723 = vpack.c.bf16 %v4653, %v4653
        %v4724 = vpack.c.bf16 %v4655, %v4655
        %v4725 = vpack.c.bf16 %v4658, %v4658
        %v4726 = vpack.c.bf16 %v4660, %v4660
        %v4727 = vpack.c.bf16 %v4663, %v4663
        %v4728 = vpack.c.bf16 %v4665, %v4665
        %v4729 = vpack.c.bf16 %v4668, %v4668
        %v4730 = vpack.c.bf16 %v4670, %v4670
        %v4731 = vpack.c.bf16 %v4673, %v4673
        %v4732 = vpack.c.bf16 %v4675, %v4675
        %v4733 = vpack.c.bf16 %v4678, %v4678
        %v4734 = vpack.c.bf16 %v4680, %v4680
        %v4735 = vpack.c.bf16 %v4683, %v4683
        %v4736 = vpack.c.bf16 %v4685, %v4685
        %v4737 = vpack.c.bf16 %v4688, %v4688
        %v4738 = vpack.c.bf16 %v4690, %v4690
        %v4739 = vpack.c.bf16 %v4693, %v4693
        %v4740 = vpack.c.bf16 %v4695, %v4695
        %v4741 = vpack.c.bf16 %v4698, %v4698
        %v4742 = vpack.c.bf16 %v4700, %v4700
        %v4743 = vpack.c.bf16 %v4703, %v4703
        %v4744 = vpack.c.bf16 %v4705, %v4705
        %v4745 = vpack.c.bf16 %v4708, %v4708
        %v4746 = vpack.c.bf16 %v4710, %v4710
        %v4747 = vpack.c.bf16 %v4713, %v4713
        %v4748 = vpack.c.bf16 %v4715, %v4715
        %v4765 = vunpack.c.l.b16 %v3031
        %v4766 = vunpack.c.l.b16 %v3032
        %v4767 = vunpack.c.l.b16 %v3033
        %v4768 = vunpack.c.l.b16 %v3034
        %v4769 = vunpack.c.l.b16 %v3035
        %v4770 = vunpack.c.l.b16 %v3036
        %v4771 = vunpack.c.l.b16 %v3037
        %v4772 = vunpack.c.l.b16 %v3038
        %v4773 = vunpack.c.l.b16 %v3039
        %v4774 = vunpack.c.l.b16 %v3040
        %v4775 = vunpack.c.l.b16 %v3041
        %v4776 = vunpack.c.l.b16 %v3042
        %v4777 = vunpack.c.l.b16 %v3043
        %v4778 = vunpack.c.l.b16 %v3044
        %v4779 = vunpack.c.l.b16 %v3045
        %v4780 = vunpack.c.l.b16 %v3046
        %v4781 = vpack.c.b16 %v4766, %v4765
        %v4782 = vpack.c.b16 %v4768, %v4767
        %v4783 = vpack.c.b16 %v4770, %v4769
        %v4784 = vpack.c.b16 %v4772, %v4771
        %v4785 = vpack.c.b16 %v4774, %v4773
        %v4786 = vpack.c.b16 %v4776, %v4775
        %v4787 = vpack.c.b16 %v4778, %v4777
        %v4788 = vpack.c.b16 %v4780, %v4779
        %v4805 = vunpack.c.l.b16 %v3047
        %v4806 = vunpack.c.l.b16 %v3048
        %v4807 = vunpack.c.l.b16 %v3049
        %v4808 = vunpack.c.l.b16 %v3050
        %v4809 = vunpack.c.l.b16 %v3051
        %v4810 = vunpack.c.l.b16 %v3052
        %v4811 = vunpack.c.l.b16 %v3053
        %v4812 = vunpack.c.l.b16 %v3054
        %v4813 = vunpack.c.l.b16 %v3055
        %v4814 = vunpack.c.l.b16 %v3056
        %v4815 = vunpack.c.l.b16 %v3057
        %v4816 = vunpack.c.l.b16 %v3058
        %v4817 = vunpack.c.l.b16 %v3059
        %v4818 = vunpack.c.l.b16 %v3060
        %v4819 = vunpack.c.l.b16 %v3061
        %v4820 = vunpack.c.l.b16 %v3062
        %v4821 = vpack.c.b16 %v4806, %v4805
        %v4822 = vpack.c.b16 %v4808, %v4807
        %v4823 = vpack.c.b16 %v4810, %v4809
        %v4824 = vpack.c.b16 %v4812, %v4811
        %v4825 = vpack.c.b16 %v4814, %v4813
        %v4826 = vpack.c.b16 %v4816, %v4815
        %v4827 = vpack.c.b16 %v4818, %v4817
        %v4828 = vpack.c.b16 %v4820, %v4819
        %4829 = vrot.lane.b32.xlu0 %v4821, 32
        %v4830 = vpop.permute.xlu0 %4829
        %4831 = vrot.lane.b32.xlu0 %v4822, 32
        %v4832 = vpop.permute.xlu0 %4831
        %4833 = vrot.lane.b32.xlu0 %v4823, 32
        %v4834 = vpop.permute.xlu0 %4833
        %4835 = vrot.lane.b32.xlu0 %v4824, 32
        %v4836 = vpop.permute.xlu0 %4835
        %4837 = vrot.lane.b32.xlu0 %v4825, 32
        %v4838 = vpop.permute.xlu0 %4837
        %4839 = vrot.lane.b32.xlu0 %v4826, 32
        %v4840 = vpop.permute.xlu0 %4839
        %4841 = vrot.lane.b32.xlu0 %v4827, 32
        %v4842 = vpop.permute.xlu0 %4841
        %4843 = vrot.lane.b32.xlu0 %v4828, 32
        %v4844 = vpop.permute.xlu0 %4843
        %v4861 = vunpack.c.l.b16 %v4717
        %v4862 = vunpack.c.l.b16 %v4718
        %v4863 = vunpack.c.l.b16 %v4719
        %v4864 = vunpack.c.l.b16 %v4720
        %v4865 = vunpack.c.l.b16 %v4721
        %v4866 = vunpack.c.l.b16 %v4722
        %v4867 = vunpack.c.l.b16 %v4723
        %v4868 = vunpack.c.l.b16 %v4724
        %v4869 = vunpack.c.l.b16 %v4725
        %v4870 = vunpack.c.l.b16 %v4726
        %v4871 = vunpack.c.l.b16 %v4727
        %v4872 = vunpack.c.l.b16 %v4728
        %v4873 = vunpack.c.l.b16 %v4729
        %v4874 = vunpack.c.l.b16 %v4730
        %v4875 = vunpack.c.l.b16 %v4731
        %v4876 = vunpack.c.l.b16 %v4732
        %v4877 = vpack.c.b16 %v4862, %v4861
        %v4878 = vpack.c.b16 %v4864, %v4863
        %v4879 = vpack.c.b16 %v4866, %v4865
        %v4880 = vpack.c.b16 %v4868, %v4867
        %v4881 = vpack.c.b16 %v4870, %v4869
        %v4882 = vpack.c.b16 %v4872, %v4871
        %v4883 = vpack.c.b16 %v4874, %v4873
        %v4884 = vpack.c.b16 %v4876, %v4875
        %4885 = vrot.lane.b32.xlu0 %v4877, 64
        %v4886 = vpop.permute.xlu0 %4885
        %4887 = vrot.lane.b32.xlu0 %v4878, 64
        %v4888 = vpop.permute.xlu0 %4887
        %4889 = vrot.lane.b32.xlu0 %v4879, 64
        %v4890 = vpop.permute.xlu0 %4889
        %4891 = vrot.lane.b32.xlu0 %v4880, 64
        %v4892 = vpop.permute.xlu0 %4891
        %4893 = vrot.lane.b32.xlu0 %v4881, 64
        %v4894 = vpop.permute.xlu0 %4893
        %4895 = vrot.lane.b32.xlu0 %v4882, 64
        %v4896 = vpop.permute.xlu0 %4895
        %4897 = vrot.lane.b32.xlu0 %v4883, 64
        %v4898 = vpop.permute.xlu0 %4897
        %4899 = vrot.lane.b32.xlu0 %v4884, 64
        %v4900 = vpop.permute.xlu0 %4899
        %v4917 = vunpack.c.l.b16 %v4733
        %v4918 = vunpack.c.l.b16 %v4734
        %v4919 = vunpack.c.l.b16 %v4735
        %v4920 = vunpack.c.l.b16 %v4736
        %v4921 = vunpack.c.l.b16 %v4737
        %v4922 = vunpack.c.l.b16 %v4738
        %v4923 = vunpack.c.l.b16 %v4739
        %v4924 = vunpack.c.l.b16 %v4740
        %v4925 = vunpack.c.l.b16 %v4741
        %v4926 = vunpack.c.l.b16 %v4742
        %v4927 = vunpack.c.l.b16 %v4743
        %v4928 = vunpack.c.l.b16 %v4744
        %v4929 = vunpack.c.l.b16 %v4745
        %v4930 = vunpack.c.l.b16 %v4746
        %v4931 = vunpack.c.l.b16 %v4747
        %v4932 = vunpack.c.l.b16 %v4748
        %v4933 = vpack.c.b16 %v4918, %v4917
        %v4934 = vpack.c.b16 %v4920, %v4919
        %v4935 = vpack.c.b16 %v4922, %v4921
        %v4936 = vpack.c.b16 %v4924, %v4923
        %v4937 = vpack.c.b16 %v4926, %v4925
        %v4938 = vpack.c.b16 %v4928, %v4927
        %v4939 = vpack.c.b16 %v4930, %v4929
        %v4940 = vpack.c.b16 %v4932, %v4931
        %4941 = vrot.lane.b32.xlu0 %v4933, 96
        %v4942 = vpop.permute.xlu0 %4941
        %4943 = vrot.lane.b32.xlu0 %v4934, 96
        %v4944 = vpop.permute.xlu0 %4943
        %4945 = vrot.lane.b32.xlu0 %v4935, 96
        %v4946 = vpop.permute.xlu0 %4945
        %4947 = vrot.lane.b32.xlu0 %v4936, 96
        %v4948 = vpop.permute.xlu0 %4947
        %4949 = vrot.lane.b32.xlu0 %v4937, 96
        %v4950 = vpop.permute.xlu0 %4949
        %4951 = vrot.lane.b32.xlu0 %v4938, 96
        %v4952 = vpop.permute.xlu0 %4951
        %4953 = vrot.lane.b32.xlu0 %v4939, 96
        %v4954 = vpop.permute.xlu0 %4953
        %4955 = vrot.lane.b32.xlu0 %v4940, 96
        %v4956 = vpop.permute.xlu0 %4955
        %v4959 = vsel %vm1554, %v4781, %v4830
        %v4962 = vsel %vm1554, %v4782, %v4832
        %v4965 = vsel %vm1554, %v4783, %v4834
        %v4968 = vsel %vm1554, %v4784, %v4836
        %v4971 = vsel %vm1554, %v4785, %v4838
        %v4974 = vsel %vm1554, %v4786, %v4840
        %v4977 = vsel %vm1554, %v4787, %v4842
        %v4980 = vsel %vm1554, %v4788, %v4844
        %vm4981 = vcmask 523264
        %v4983 = vsel %vm4981, %v4959, %v4886
        %v4985 = vsel %vm4981, %v4962, %v4888
        %v4987 = vsel %vm4981, %v4965, %v4890
        %v4989 = vsel %vm4981, %v4968, %v4892
        %v4991 = vsel %vm4981, %v4971, %v4894
        %v4993 = vsel %vm4981, %v4974, %v4896
        %v4995 = vsel %vm4981, %v4977, %v4898
        %v4997 = vsel %vm4981, %v4980, %v4900
        %vm4998 = vcmask 785408
        %v5000 = vsel %vm4998, %v4983, %v4942
        %v5003 = vsel %vm4998, %v4985, %v4944
        %v5006 = vsel %vm4998, %v4987, %v4946
        %v5009 = vsel %vm4998, %v4989, %v4948
        %v5012 = vsel %vm4998, %v4991, %v4950
        %v5015 = vsel %vm4998, %v4993, %v4952
        %v5018 = vsel %vm4998, %v4995, %v4954
        %v5021 = vsel %vm4998, %v4997, %v4956
        %v5023 = vld [vmem:[#allocation10] sm:$0xf]
        %v5024 = vld [vmem:[#allocation10 + $0x4] sm:$0xf]
        %v5025 = vld [vmem:[#allocation10 + $0x8] sm:$0xf]
        %v5026 = vld [vmem:[#allocation10 + $0xc] sm:$0xf]
        %v5027 = vld [vmem:[#allocation10 + $0x10] sm:$0xf]
        %v5028 = vld [vmem:[#allocation10 + $0x14] sm:$0xf]
        %v5029 = vld [vmem:[#allocation10 + $0x18] sm:$0xf]
        %v5030 = vld [vmem:[#allocation10 + $0x1c] sm:$0xf]
        %v5031 = vld [vmem:[#allocation10 + $0x20] sm:$0xf]
        %v5032 = vld [vmem:[#allocation10 + $0x24] sm:$0xf]
        %v5033 = vld [vmem:[#allocation10 + $0x28] sm:$0xf]
        %v5034 = vld [vmem:[#allocation10 + $0x2c] sm:$0xf]
        %v5035 = vld [vmem:[#allocation10 + $0x30] sm:$0xf]
        %v5036 = vld [vmem:[#allocation10 + $0x34] sm:$0xf]
        %v5037 = vld [vmem:[#allocation10 + $0x38] sm:$0xf]
        %v5038 = vld [vmem:[#allocation10 + $0x3c] sm:$0xf]
        %v5039 = vld [vmem:[%s6] sm:$0x1]
        %v5041 = vperm.slane %v5039, 0
        %v5059 = vunpack.c.l.b16 %v5023
        %v5060 = vunpack.c.l.b16 %v5024
        %v5061 = vunpack.c.l.b16 %v5025
        %v5062 = vunpack.c.l.b16 %v5026
        %v5063 = vunpack.c.l.b16 %v5027
        %v5064 = vunpack.c.l.b16 %v5028
        %v5065 = vunpack.c.l.b16 %v5029
        %v5066 = vunpack.c.l.b16 %v5030
        %v5067 = vunpack.c.l.b16 %v5031
        %v5068 = vunpack.c.l.b16 %v5032
        %v5069 = vunpack.c.l.b16 %v5033
        %v5070 = vunpack.c.l.b16 %v5034
        %v5071 = vunpack.c.l.b16 %v5035
        %v5072 = vunpack.c.l.b16 %v5036
        %v5073 = vunpack.c.l.b16 %v5037
        %v5074 = vunpack.c.l.b16 %v5038
        %v5075 = vpack.c.b16 %v5060, %v5059
        %v5076 = vpack.c.b16 %v5062, %v5061
        %v5077 = vpack.c.b16 %v5064, %v5063
        %v5078 = vpack.c.b16 %v5066, %v5065
        %v5079 = vpack.c.b16 %v5068, %v5067
        %v5080 = vpack.c.b16 %v5070, %v5069
        %v5081 = vpack.c.b16 %v5072, %v5071
        %v5082 = vpack.c.b16 %v5074, %v5073
        %5091 = vmatpush.bf16.msra.mxu0 %v5082
        %5092 = vmatpush.bf16.msra.mxu0 %v5081
        %5093 = vmatpush.bf16.msra.mxu0 %v5080
        %5094 = vmatpush.bf16.msra.mxu0 %v5079
        %5095 = vmatpush.bf16.msra.mxu0 %v5078
        %5096 = vmatpush.bf16.msra.mxu0 %v5077
        %5097 = vmatpush.bf16.msra.mxu0 %v5076
        %5098 = vmatpush.bf16.msra.mxu0 %v5075
        %5099 = vmatmul.bf16.gmra.mxu0 %v5000
        %v5100 = vpop.f32.mrf.mxu0
        %v5101 = vadd.f32 %v5041, %v5100
        %v5102 = vpop.f32.mrf.mxu0
        %v5103 = vadd.f32 %v5041, %v5102
        %5104 = vmatmul.bf16.gmra.mxu0 %v5003
        %v5105 = vpop.f32.mrf.mxu0
        %v5106 = vadd.f32 %v5041, %v5105
        %v5107 = vpop.f32.mrf.mxu0
        %v5108 = vadd.f32 %v5041, %v5107
        %5109 = vmatmul.bf16.gmra.mxu0 %v5006
        %v5110 = vpop.f32.mrf.mxu0
        %v5111 = vadd.f32 %v5041, %v5110
        %v5112 = vpop.f32.mrf.mxu0
        %v5113 = vadd.f32 %v5041, %v5112
        %5114 = vmatmul.bf16.gmra.mxu0 %v5009
        %v5115 = vpop.f32.mrf.mxu0
        %v5116 = vadd.f32 %v5041, %v5115
        %v5117 = vpop.f32.mrf.mxu0
        %v5118 = vadd.f32 %v5041, %v5117
        %5119 = vmatmul.bf16.gmra.mxu0 %v5012
        %v5120 = vpop.f32.mrf.mxu0
        %v5121 = vadd.f32 %v5041, %v5120
        %v5122 = vpop.f32.mrf.mxu0
        %v5123 = vadd.f32 %v5041, %v5122
        %5124 = vmatmul.bf16.gmra.mxu0 %v5015
        %v5125 = vpop.f32.mrf.mxu0
        %v5126 = vadd.f32 %v5041, %v5125
        %v5127 = vpop.f32.mrf.mxu0
        %v5128 = vadd.f32 %v5041, %v5127
        %5129 = vmatmul.bf16.gmra.mxu0 %v5018
        %v5130 = vpop.f32.mrf.mxu0
        %v5131 = vadd.f32 %v5041, %v5130
        %v5132 = vpop.f32.mrf.mxu0
        %v5133 = vadd.f32 %v5041, %v5132
        %5134 = vmatmul.bf16.gmra.mxu0 %v5021
        %v5135 = vpop.f32.mrf.mxu0
        %v5136 = vadd.f32 %v5041, %v5135
        %v5137 = vpop.f32.mrf.mxu0
        %v5138 = vadd.f32 %v5041, %v5137
        %5139 = vdwg.mxu0
        %5140 = vst [vmem:[%s362] sm:$0xff] %v5101
        %5141 = vst [vmem:[%s362 + $0x8] sm:$0xff] %v5103
        %5142 = vst [vmem:[%s362 + $0x10] sm:$0xff] %v5106
        %5143 = vst [vmem:[%s362 + $0x18] sm:$0xff] %v5108
        %5144 = vst [vmem:[%s362 + $0x20] sm:$0xff] %v5111
        %5145 = vst [vmem:[%s362 + $0x28] sm:$0xff] %v5113
        %5146 = vst [vmem:[%s362 + $0x30] sm:$0xff] %v5116
        %5147 = vst [vmem:[%s362 + $0x38] sm:$0xff] %v5118
        %5148 = vst [vmem:[%s362 + $0x40] sm:$0xff] %v5121
        %5149 = vst [vmem:[%s362 + $0x48] sm:$0xff] %v5123
        %5150 = vst [vmem:[%s362 + $0x50] sm:$0xff] %v5126
        %5151 = vst [vmem:[%s362 + $0x58] sm:$0xff] %v5128
        %5152 = vst [vmem:[%s362 + $0x60] sm:$0xff] %v5131
        %5153 = vst [vmem:[%s362 + $0x68] sm:$0xff] %v5133
        %5154 = vst [vmem:[%s362 + $0x70] sm:$0xff] %v5136
        %5155 = vst [vmem:[%s362 + $0x78] sm:$0xff] %v5138
        %s5156 = sand.u32 %s200, 1
        %s5157 = scalar_lea.sflag [#allocation6], %s5156
        %s5158 = sand.u32 %s200, 1
        %s5159 = smul.addr %s5158, 128
        %s5160 = scalar_lea.vmem [#allocation12], %s5159
        // Predicated region
        $region69: #{tpu_custom_call.1} parent=47 // pred_check
          %p5161 = pneg %p210
        $region70: #{tpu_custom_call.1} parent=47 // pred_check_branch
          %5163 = sbr.rel (%p5161) target = $region72
        $region71: #{tpu_custom_call.1} parent=47 // pred_region
          %s5164 = smul.u32 16, %s31
          %5166 = vsyncadd %s5157, 0
          %s5167 = smul.addr %s30, 32
          %s5168 = sadd.s32 %s5164, %s5167
          %s5169 = smul.addr %s5168, 8
          %s5170 = scalar_lea.hbm %s7, %s5169
          %s5171 = sshll.u32 %s5160, 4
          %s5172 = int_to_ptr.vmem [resolvable:$true] %s5171
          %s5173 = sshll.u32 %s5170, 4
          %s5174 = int_to_ptr.hbm [resolvable:$true] %s5173
          %5179 = dma.vmem_to_hbm [thread:$0]  %s5172, 2048, %s5174, %s5157, 128, 128, 8
        $region72: #{tpu_custom_call.1} parent=47 // pred_fallthru
          _
      $region48: #{tpu_custom_call.1} parent=5 // pred_fallthru
        _
      %p5180 = scmp.le.s32.totalorder 2, %s21
      // Predicated region
      $region73: #{tpu_custom_call.1} parent=5 // pred_check
        %p5181 = pneg %p5180
      $region74: #{tpu_custom_call.1} parent=5 // pred_check_branch
        %5183 = sbr.rel (%p5181) target = $region76
      $region75: #{tpu_custom_call.1} parent=5 // pred_region
        %s5184 = ssub.s32 %s21, 2
        // Predicated region
        $region77: #{tpu_custom_call.1} parent=75 // pred_check
          %p5185 = pneg %p216
        $region78: #{tpu_custom_call.1} parent=75 // pred_check_branch
          %5187 = sbr.rel (%p5185) target = $region80
        $region79: #{tpu_custom_call.1} parent=75 // pred_region
          %s5188 = sand.u32 %s201, 1
          %s5189 = scalar_lea.sflag [#allocation6], %s5188
          %s5190 = sand.u32 %s201, 1
          %s5191 = smul.addr %s5190, 128
          %s5192 = scalar_lea.vmem [#allocation12], %s5191
          %5194 = dma.done %s5189, 2048
        $region80: #{tpu_custom_call.1} parent=75 // pred_fallthru
          _
      $region76: #{tpu_custom_call.1} parent=5 // pred_fallthru
        _
    $region6: #{tpu_custom_call.1} parent=1 // loop_footer
      %s25 = sadd.s32 1, %s21
    $region7: #{tpu_custom_call.1} parent=1 // loop_footer_branch
      %20 = sbr.rel target = $region3
    $region8: #{tpu_custom_call.1} parent=1 // loop_exit
      _
    %5195 = vsyncpa [#allocation5], 1
    %s5196 = scalar_lea.sflag [#allocation5], 1
    %5197 = vsyncpa %s5196, 1
    %5198 = vsyncpa [#allocation8], 1
    %5199 = vsyncpa [#allocation11], 1
    %5200 = vsyncpa [#allocation6], 1
    %s5201 = scalar_lea.sflag [#allocation6], 1
    %5202 = vsyncpa %s5201, 1

</llo_original>
